<compile_context>
chip_gen: v7x
topology: tpu7x:2x2x1
jax: 0.10.0
libtpu: 0.0.40
codegen_flags: <defaults>
</compile_context>

<pallas_src>
import functools

import jax
import jax.numpy as jnp
import numpy as np
from jax.experimental import pallas as pl
from jax.experimental.pallas import tpu as pltpu


def _round_up(x, m):
    return ((x + m - 1) // m) * m


def _cdiv(a, b):
    return (a + b - 1) // b


# ---------------------------------------------------------------------------
# Kernel
# ---------------------------------------------------------------------------
def _fused_kernel(*refs, n_agents, goal_dim, resource_dim, approx_recip):
    f32 = jnp.float32
    n = n_agents
    cur = refs[0:n]
    mnd = refs[n:2 * n]
    hst = refs[2 * n:3 * n]
    (w_se, b_se, w_att_m, w_att_h, b_att,
     w_ctx, b_ctx,
     w_fc_ctx, w_fc_sm, b_fc,
     w_heads, b_heads, w_crit, b_crit) = refs[3 * n:3 * n + 14]
    pol_ref, crit_ref = refs[3 * n + 14:]

    # --- StateEncoder + FusionAtt (per agent; separate dots, no zero-padded
    #     block-diagonal weight, no lane-misaligned activation split). ---
    sms = []
    for a in range(n):
        se = jnp.maximum(
            jnp.dot(cur[a][...], w_se[...], preferred_element_type=f32) + b_se[...],
            0.0)
        att_pre = (jnp.dot(mnd[a][...], w_att_m[...], preferred_element_type=f32)
                   + jnp.dot(hst[a][...], w_att_h[...], preferred_element_type=f32)
                   + b_att[...])
        sms.append(se * jax.nn.sigmoid(att_pre))            # (tb, L)

    # --- Context (pooling='sum'): per-agent ReLU(Linear) summed over agents ---
    ctx = None
    for a in range(n):
        h = jnp.maximum(
            jnp.dot(sms[a], w_ctx[...], preferred_element_type=f32) + b_ctx[...],
            0.0)
        ctx = h if ctx is None else ctx + h                  # (tb, L)

    # --- CriticVGVC: V_G | V_C fused into one lane-dense (128-wide) matmul ---
    crit_ref[...] = (jnp.dot(ctx, w_crit[...], preferred_element_type=f32)
                     + b_crit[...]).astype(crit_ref.dtype)

    # --- PolicyNet2: ctx projection hoisted out of the per-agent loop ---
    ctx_proj = jnp.dot(ctx, w_fc_ctx[...], preferred_element_type=f32)   # (tb, L)

    # Grouped-softmax lane masks (hoisted; identical for every agent).
    hw = pol_ref.shape[-1]
    tb = ctx_proj.shape[0]
    lane = jax.lax.broadcasted_iota(jnp.int32, (tb, hw), 1)
    is_goal = lane < goal_dim
    is_res = jnp.logical_and(lane >= goal_dim, lane < goal_dim + resource_dim)
    neg_inf = jnp.float32(-jnp.inf)

    for a in range(n):
        xh = jnp.maximum(
            jnp.dot(sms[a], w_fc_sm[...], preferred_element_type=f32)
            + ctx_proj + b_fc[...], 0.0)                     # (tb, L)
        logits = (jnp.dot(xh, w_heads[...], preferred_element_type=f32)
                  + b_heads[...])                            # (tb, 128) lane-dense
        m_g = jnp.max(jnp.where(is_goal, logits, neg_inf), axis=-1, keepdims=True)
        m_r = jnp.max(jnp.where(is_res, logits, neg_inf), axis=-1, keepdims=True)
        e = jnp.exp(logits - jnp.where(is_goal, m_g, m_r))
        s_g = jnp.sum(jnp.where(is_goal, e, 0.0), axis=-1, keepdims=True)
        s_r = jnp.sum(jnp.where(is_res, e, 0.0), axis=-1, keepdims=True)
        denom = jnp.where(is_goal, s_g, s_r)
        probs = e * pl.reciprocal(denom, approx=approx_recip)
        pol_ref[a] = probs.astype(pol_ref.dtype)             # full-vreg unmasked store


# ---------------------------------------------------------------------------
# Wrapper
# ---------------------------------------------------------------------------
def _choose_row_tile(batch, bytes_per_row, *, act_vmem_budget=16 << 20,
                     tb_max=2048, min_steps=4):
    """Largest row tile that (a) fits the double-buffered activation budget,
    (b) yields >= min_steps grid steps when the batch allows (so v7x can shard
    batch tiles across its two TensorCores), (c) divides the batch with minimal
    remainder waste."""
    b8 = _round_up(max(int(batch), 1), 8)
    cap = act_vmem_budget // max(2 * bytes_per_row, 1)
    cap = max(8, min(tb_max, (cap // 8) * 8))
    k = max(_cdiv(b8, cap),                  # fit the VMEM budget
            min(min_steps, _cdiv(b8, 8)),    # enough steps for megacore / pipeline
            1)
    return _round_up(_cdiv(b8, k), 8)


def actor_critic_forward(cur_states, minds, hist_minds, prepared, *,
                         tile_b=None, approx_recip=False):
    """cur_states/minds/hist_minds: lists (len = n_agents) of (B, dim) arrays.
    `prepared` comes from prepare_params() (built once, outside the hot path)."""
    n_agents = len(cur_states)
    batch, state_dim = cur_states[0].shape
    mind_dim = minds[0].shape[1]
    hist_dim = hist_minds[0].shape[1]
    goal_dim = prepared["goal_dim"]
    resource_dim = prepared["resource_dim"]
    hw = prepared["w_heads"].shape[1]                 # head lanes (padded to 128)
    compute_dtype = prepared["w_se"].dtype

    # No input repacking: each per-agent tensor is its own kernel operand.
    cur = [jnp.asarray(x, compute_dtype) for x in cur_states]
    mnd = [jnp.asarray(x, compute_dtype) for x in minds]
    hst = [jnp.asarray(x, compute_dtype) for x in hist_minds]

    weight_names = ["w_se", "b_se", "w_att_m", "w_att_h", "b_att",
                    "w_ctx", "b_ctx", "w_fc_ctx", "w_fc_sm", "b_fc",
                    "w_heads", "b_heads", "w_crit", "b_crit"]
    weights = [prepared[k] for k in weight_names]

    bytes_per_row = 4 * (n_agents * (state_dim + mind_dim + hist_dim)
                         + (n_agents + 1) * hw)
    tb = tile_b if tile_b is not None else _choose_row_tile(batch, bytes_per_row)
    tb = min(_round_up(tb, 8), _round_up(batch, 8))
    # Last block may be partial: OOB rows are garbage on read (row-local ops only)
    # and masked on write, so no wrapper-side batch padding is needed.
    grid = (_cdiv(batch, tb),)

    weight_bytes = sum(int(np.prod(w.shape)) * w.dtype.itemsize for w in weights)
    act_bytes = 2 * tb * bytes_per_row                 # double-buffered activations
    vmem_limit = int(min(64 << 20,                     # safe on v7x (64 MiB VMEM)
                         max(32 << 20, act_bytes + 2 * weight_bytes + (8 << 20))))

    def data_spec(d):
        return pl.BlockSpec((tb, d), lambda i: (i, 0))

    def full_spec(a):
        return pl.BlockSpec(a.shape, lambda i: (0, 0))

    in_specs = ([data_spec(state_dim)] * n_agents
                + [data_spec(mind_dim)] * n_agents
                + [data_spec(hist_dim)] * n_agents
                + [full_spec(w) for w in weights])
    out_specs = (pl.BlockSpec((n_agents, tb, hw), lambda i: (0, i, 0)),
                 pl.BlockSpec((tb, hw), lambda i: (i, 0)))
    out_shapes = (jax.ShapeDtypeStruct((n_agents, batch, hw), jnp.float32),
                  jax.ShapeDtypeStruct((batch, hw), jnp.float32))

    kernel = functools.partial(_fused_kernel, n_agents=n_agents,
                               goal_dim=goal_dim, resource_dim=resource_dim,
                               approx_recip=approx_recip)

    pol_slab, crit_slab = pl.pallas_call(
        kernel,
        out_shape=out_shapes,
        grid=grid,
        in_specs=in_specs,
        out_specs=out_specs,
        compiler_params=pltpu.CompilerParams(
            dimension_semantics=("parallel",),
            vmem_limit_bytes=vmem_limit),
    )(*cur, *mnd, *hst, *weights)

    gr = goal_dim + resource_dim
    policies_goal = pol_slab[:, :, :goal_dim].reshape(n_agents * batch, goal_dim)
    policies_resource = pol_slab[:, :, goal_dim:gr].reshape(n_agents * batch,
                                                            resource_dim)
    values = crit_slab[:, :goal_dim]
    values_pay = crit_slab[:, goal_dim:gr]
    return policies_goal, policies_resource, values, values_pay


# ---------------------------------------------------------------------------
# Parameters
# ---------------------------------------------------------------------------
def init_params(key, state_dim, mind_dim, hist_dim, latent_dim, goal_dim,
                resource_dim):
    """Raw (torch-layout) parameters."""
    ks = jax.random.split(key, 8)

    def lin(k, fan_in, fan_out):
        kw, kb = jax.random.split(k)
        w = jax.random.normal(kw, (fan_in, fan_out), jnp.float32) / jnp.sqrt(fan_in)
        b = jax.random.normal(kb, (1, fan_out), jnp.float32) * 0.01
        return w, b

    w_se, b_se = lin(ks[0], state_dim, latent_dim)
    w_att, b_att = lin(ks[1], mind_dim + hist_dim, latent_dim)
    w_ctx, b_ctx = lin(ks[2], latent_dim, latent_dim)
    w_fc, b_fc = lin(ks[3], 2 * latent_dim, latent_dim)
    w_g, b_g = lin(ks[4], latent_dim, goal_dim)
    w_r, b_r = lin(ks[5], latent_dim, resource_dim)
    w_v, b_v = lin(ks[6], latent_dim, goal_dim)
    w_vp, b_vp = lin(ks[7], latent_dim, resource_dim)
    return dict(w_se=w_se, b_se=b_se, w_att=w_att, b_att=b_att,
                w_ctx=w_ctx, b_ctx=b_ctx, w_fc=w_fc, b_fc=b_fc,
                w_g=w_g, b_g=b_g, w_r=w_r, b_r=b_r,
                w_v=w_v, b_v=b_v, w_vp=w_vp, b_vp=b_vp)


def prepare_params(raw, *, mind_dim, goal_dim, resource_dim, dtype=jnp.float32):
    """One-time kernel-layout packing (hoisted out of the per-call path).
    Use dtype=jnp.bfloat16 on v6e/v7x for the DMA/MXU win (loosen test tolerance)."""
    L = raw["w_se"].shape[1]
    gr = goal_dim + resource_dim
    hw = _round_up(gr, 128)                      # lane-dense head width

    def pad_heads(w_a, w_b, b_a, b_b):
        w = jnp.zeros((L, hw), dtype)
        w = w.at[:, :goal_dim].set(w_a.astype(dtype))
        w = w.at[:, goal_dim:gr].set(w_b.astype(dtype))
        b = jnp.zeros((1, hw), dtype)
        b = b.at[:, :goal_dim].set(b_a.astype(dtype))
        b = b.at[:, goal_dim:gr].set(b_b.astype(dtype))
        return w, b

    w_heads, b_heads = pad_heads(raw["w_g"], raw["w_r"], raw["b_g"], raw["b_r"])
    w_crit, b_crit = pad_heads(raw["w_v"], raw["w_vp"], raw["b_v"], raw["b_vp"])

    return dict(
        w_se=raw["w_se"].astype(dtype), b_se=raw["b_se"].astype(dtype),
        w_att_m=raw["w_att"][:mind_dim].astype(dtype),
        w_att_h=raw["w_att"][mind_dim:].astype(dtype),
        b_att=raw["b_att"].astype(dtype),
        w_ctx=raw["w_ctx"].astype(dtype), b_ctx=raw["b_ctx"].astype(dtype),
        w_fc_ctx=raw["w_fc"][:L].astype(dtype),
        w_fc_sm=raw["w_fc"][L:].astype(dtype),
        b_fc=raw["b_fc"].astype(dtype),
        w_heads=w_heads, b_heads=b_heads, w_crit=w_crit, b_crit=b_crit,
        goal_dim=goal_dim, resource_dim=resource_dim,
    )


# ---------------------------------------------------------------------------
# Pure-JAX reference (mirror of the PyTorch forward) for correctness checking
# ---------------------------------------------------------------------------
def reference_forward(cur_states, minds, hist_minds, p):
    def lin(x, w, b):
        return x @ w + b[0]

    state_minds = []
    for s, m, h in zip(cur_states, minds, hist_minds):
        se = jax.nn.relu(lin(s, p["w_se"], p["b_se"]))
        att = jax.nn.sigmoid(lin(jnp.concatenate([m, h], -1), p["w_att"], p["b_att"]))
        state_minds.append(se * att)
    ctx = sum(jax.nn.relu(lin(sm, p["w_ctx"], p["b_ctx"])) for sm in state_minds)
    csm = jnp.concatenate(
        [jnp.concatenate([ctx, sm], -1) for sm in state_minds], axis=0)
    x = jax.nn.relu(csm @ p["w_fc"] + p["b_fc"][0])
    pg = jax.nn.softmax(x @ p["w_g"] + p["b_g"][0], axis=-1)
    pr = jax.nn.softmax(x @ p["w_r"] + p["b_r"][0], axis=-1)
    v = ctx @ p["w_v"] + p["b_v"][0]
    vp = ctx @ p["w_vp"] + p["b_vp"][0]
    return pg, pr, v, vp


if __name__ == "__main__":
    # Small deterministic configuration. batch is deliberately NOT a multiple of
    # the row tile so the multi-step grid + boundary masking path is exercised.
    n_agents = 3
    batch = 20
    state_dim = 16
    mind_dim = 8
    hist_dim = 8
    latent_dim = 32
    goal_dim = 8
    resource_dim = 4

    key = jax.random.PRNGKey(0)
    kp, kd = jax.random.split(key)
    raw = init_params(kp, state_dim, mind_dim, hist_dim,
                      latent_dim, goal_dim, resource_dim)
    prepared = prepare_params(raw, mind_dim=mind_dim, goal_dim=goal_dim,
                              resource_dim=resource_dim)      # once, off hot path

    dkeys = jax.random.split(kd, 3 * n_agents)
    cur_states = [jax.random.normal(dkeys[3 * a + 0], (batch, state_dim), jnp.float32)
                  for a in range(n_agents)]
    minds = [jax.random.normal(dkeys[3 * a + 1], (batch, mind_dim), jnp.float32)
             for a in range(n_agents)]
    hist_minds = [jax.random.normal(dkeys[3 * a + 2], (batch, hist_dim), jnp.float32)
                  for a in range(n_agents)]

    pg, pr, v, vp = actor_critic_forward(cur_states, minds, hist_minds, prepared)
    jax.block_until_ready((pg, pr, v, vp))

    pg_r, pr_r, v_r, vp_r = reference_forward(cur_states, minds, hist_minds, raw)
    np.testing.assert_allclose(np.asarray(pg), np.asarray(pg_r), rtol=1e-5, atol=1e-5)
    np.testing.assert_allclose(np.asarray(pr), np.asarray(pr_r), rtol=1e-5, atol=1e-5)
    np.testing.assert_allclose(np.asarray(v), np.asarray(v_r), rtol=1e-5, atol=1e-5)
    np.testing.assert_allclose(np.asarray(vp), np.asarray(vp_r), rtol=1e-5, atol=1e-5)

    assert pg.shape == (n_agents * batch, goal_dim)
    assert pr.shape == (n_agents * batch, resource_dim)
    assert v.shape == (batch, goal_dim)
    assert vp.shape == (batch, resource_dim)

    print("KERNEL_OK")
</pallas_src>

<mosaic_0001>
module attributes {stable_mosaic.version = 11 : i64} {
  func.func @_fused_kernel(%arg0: i32, %arg1: memref<8x16xf32, #tpu.memory_space<vmem>>, %arg2: memref<8x16xf32, #tpu.memory_space<vmem>>, %arg3: memref<8x16xf32, #tpu.memory_space<vmem>>, %arg4: memref<8x8xf32, #tpu.memory_space<vmem>>, %arg5: memref<8x8xf32, #tpu.memory_space<vmem>>, %arg6: memref<8x8xf32, #tpu.memory_space<vmem>>, %arg7: memref<8x8xf32, #tpu.memory_space<vmem>>, %arg8: memref<8x8xf32, #tpu.memory_space<vmem>>, %arg9: memref<8x8xf32, #tpu.memory_space<vmem>>, %arg10: memref<16x32xf32, #tpu.memory_space<vmem>>, %arg11: memref<1x32xf32, #tpu.memory_space<vmem>>, %arg12: memref<8x32xf32, #tpu.memory_space<vmem>>, %arg13: memref<8x32xf32, #tpu.memory_space<vmem>>, %arg14: memref<1x32xf32, #tpu.memory_space<vmem>>, %arg15: memref<32x32xf32, #tpu.memory_space<vmem>>, %arg16: memref<1x32xf32, #tpu.memory_space<vmem>>, %arg17: memref<32x32xf32, #tpu.memory_space<vmem>>, %arg18: memref<32x32xf32, #tpu.memory_space<vmem>>, %arg19: memref<1x32xf32, #tpu.memory_space<vmem>>, %arg20: memref<32x128xf32, #tpu.memory_space<vmem>>, %arg21: memref<1x128xf32, #tpu.memory_space<vmem>>, %arg22: memref<32x128xf32, #tpu.memory_space<vmem>>, %arg23: memref<1x128xf32, #tpu.memory_space<vmem>>, %arg24: memref<3x8x128xf32, #tpu.memory_space<vmem>>, %arg25: memref<8x128xf32, #tpu.memory_space<vmem>>) attributes {dimension_semantics = [#tpu.dimension_semantics<parallel>], iteration_bounds = array<i64: 3>, scalar_prefetch = 0 : i64, scratch_operands = 0 : i64, tpu.core_type = #tpu.core_type<tc>, window_params = [{transform_indices = @transform_0, window_bounds = array<i64: 8, 16>}, {transform_indices = @transform_1, window_bounds = array<i64: 8, 16>}, {transform_indices = @transform_2, window_bounds = array<i64: 8, 16>}, {transform_indices = @transform_3, window_bounds = array<i64: 8, 8>}, {transform_indices = @transform_4, window_bounds = array<i64: 8, 8>}, {transform_indices = @transform_5, window_bounds = array<i64: 8, 8>}, {transform_indices = @transform_6, window_bounds = array<i64: 8, 8>}, {transform_indices = @transform_7, window_bounds = array<i64: 8, 8>}, {transform_indices = @transform_8, window_bounds = array<i64: 8, 8>}, {pipeline_mode = #tpu.pipeline_mode<synchronous>, transform_indices = @transform_9, window_bounds = array<i64: 16, 32>}, {pipeline_mode = #tpu.pipeline_mode<synchronous>, transform_indices = @transform_10, window_bounds = array<i64: 1, 32>}, {pipeline_mode = #tpu.pipeline_mode<synchronous>, transform_indices = @transform_11, window_bounds = array<i64: 8, 32>}, {pipeline_mode = #tpu.pipeline_mode<synchronous>, transform_indices = @transform_12, window_bounds = array<i64: 8, 32>}, {pipeline_mode = #tpu.pipeline_mode<synchronous>, transform_indices = @transform_13, window_bounds = array<i64: 1, 32>}, {pipeline_mode = #tpu.pipeline_mode<synchronous>, transform_indices = @transform_14, window_bounds = array<i64: 32, 32>}, {pipeline_mode = #tpu.pipeline_mode<synchronous>, transform_indices = @transform_15, window_bounds = array<i64: 1, 32>}, {pipeline_mode = #tpu.pipeline_mode<synchronous>, transform_indices = @transform_16, window_bounds = array<i64: 32, 32>}, {pipeline_mode = #tpu.pipeline_mode<synchronous>, transform_indices = @transform_17, window_bounds = array<i64: 32, 32>}, {pipeline_mode = #tpu.pipeline_mode<synchronous>, transform_indices = @transform_18, window_bounds = array<i64: 1, 32>}, {pipeline_mode = #tpu.pipeline_mode<synchronous>, transform_indices = @transform_19, window_bounds = array<i64: 32, 128>}, {pipeline_mode = #tpu.pipeline_mode<synchronous>, transform_indices = @transform_20, window_bounds = array<i64: 1, 128>}, {pipeline_mode = #tpu.pipeline_mode<synchronous>, transform_indices = @transform_21, window_bounds = array<i64: 32, 128>}, {pipeline_mode = #tpu.pipeline_mode<synchronous>, transform_indices = @transform_22, window_bounds = array<i64: 1, 128>}, {transform_indices = @transform_23, window_bounds = array<i64: 3, 8, 128>}, {transform_indices = @transform_24, window_bounds = array<i64: 8, 128>}]} {
    %c0 = arith.constant 0 : index
    %c0_0 = arith.constant 0 : index
    %0 = vector.load %arg1[%c0, %c0_0] : memref<8x16xf32, #tpu.memory_space<vmem>>, vector<8x16xf32>
    %c0_1 = arith.constant 0 : index
    %c0_2 = arith.constant 0 : index
    %1 = vector.load %arg10[%c0_1, %c0_2] : memref<16x32xf32, #tpu.memory_space<vmem>>, vector<16x32xf32>
    %cst = arith.constant dense<0.000000e+00> : vector<8x32xf32>
    %2 = tpu.matmul %0, %1, %cst {dimension_numbers = #tpu.dot_dimension_numbers<[1], [0], [0], [1], [0, 0, 1, 1], [], []>} : vector<8x16xf32>, vector<16x32xf32>, vector<8x32xf32> -> vector<8x32xf32>
    %c0_3 = arith.constant 0 : index
    %c0_4 = arith.constant 0 : index
    %3 = vector.load %arg11[%c0_3, %c0_4] : memref<1x32xf32, #tpu.memory_space<vmem>>, vector<1x32xf32>
    %4 = vector.broadcast %3 : vector<1x32xf32> to vector<8x32xf32>
    %5 = arith.addf %2, %4 : vector<8x32xf32>
    %cst_5 = arith.constant 0.000000e+00 : f32
    %6 = vector.broadcast %cst_5 : f32 to vector<8x32xf32>
    %7 = arith.maximumf %5, %6 : vector<8x32xf32>
    %c0_6 = arith.constant 0 : index
    %c0_7 = arith.constant 0 : index
    %8 = vector.load %arg4[%c0_6, %c0_7] : memref<8x8xf32, #tpu.memory_space<vmem>>, vector<8x8xf32>
    %c0_8 = arith.constant 0 : index
    %c0_9 = arith.constant 0 : index
    %9 = vector.load %arg12[%c0_8, %c0_9] : memref<8x32xf32, #tpu.memory_space<vmem>>, vector<8x32xf32>
    %cst_10 = arith.constant dense<0.000000e+00> : vector<8x32xf32>
    %10 = tpu.matmul %8, %9, %cst_10 {dimension_numbers = #tpu.dot_dimension_numbers<[1], [0], [0], [1], [0, 0, 1, 1], [], []>} : vector<8x8xf32>, vector<8x32xf32>, vector<8x32xf32> -> vector<8x32xf32>
    %c0_11 = arith.constant 0 : index
    %c0_12 = arith.constant 0 : index
    %11 = vector.load %arg7[%c0_11, %c0_12] : memref<8x8xf32, #tpu.memory_space<vmem>>, vector<8x8xf32>
    %c0_13 = arith.constant 0 : index
    %c0_14 = arith.constant 0 : index
    %12 = vector.load %arg13[%c0_13, %c0_14] : memref<8x32xf32, #tpu.memory_space<vmem>>, vector<8x32xf32>
    %cst_15 = arith.constant dense<0.000000e+00> : vector<8x32xf32>
    %13 = tpu.matmul %11, %12, %cst_15 {dimension_numbers = #tpu.dot_dimension_numbers<[1], [0], [0], [1], [0, 0, 1, 1], [], []>} : vector<8x8xf32>, vector<8x32xf32>, vector<8x32xf32> -> vector<8x32xf32>
    %14 = arith.addf %10, %13 : vector<8x32xf32>
    %c0_16 = arith.constant 0 : index
    %c0_17 = arith.constant 0 : index
    %15 = vector.load %arg14[%c0_16, %c0_17] : memref<1x32xf32, #tpu.memory_space<vmem>>, vector<1x32xf32>
    %16 = vector.broadcast %15 : vector<1x32xf32> to vector<8x32xf32>
    %17 = arith.addf %14, %16 : vector<8x32xf32>
    %18 = arith.negf %17 : vector<8x32xf32>
    %19 = math.exp %18 : vector<8x32xf32>
    %cst_18 = arith.constant 1.000000e+00 : f32
    %20 = vector.broadcast %cst_18 : f32 to vector<8x32xf32>
    %21 = arith.addf %20, %19 : vector<8x32xf32>
    %22 = arith.divf %20, %21 : vector<8x32xf32>
    %23 = arith.mulf %7, %22 : vector<8x32xf32>
    %c0_19 = arith.constant 0 : index
    %c0_20 = arith.constant 0 : index
    %24 = vector.load %arg2[%c0_19, %c0_20] : memref<8x16xf32, #tpu.memory_space<vmem>>, vector<8x16xf32>
    %c0_21 = arith.constant 0 : index
    %c0_22 = arith.constant 0 : index
    %25 = vector.load %arg10[%c0_21, %c0_22] : memref<16x32xf32, #tpu.memory_space<vmem>>, vector<16x32xf32>
    %cst_23 = arith.constant dense<0.000000e+00> : vector<8x32xf32>
    %26 = tpu.matmul %24, %25, %cst_23 {dimension_numbers = #tpu.dot_dimension_numbers<[1], [0], [0], [1], [0, 0, 1, 1], [], []>} : vector<8x16xf32>, vector<16x32xf32>, vector<8x32xf32> -> vector<8x32xf32>
    %c0_24 = arith.constant 0 : index
    %c0_25 = arith.constant 0 : index
    %27 = vector.load %arg11[%c0_24, %c0_25] : memref<1x32xf32, #tpu.memory_space<vmem>>, vector<1x32xf32>
    %28 = vector.broadcast %27 : vector<1x32xf32> to vector<8x32xf32>
    %29 = arith.addf %26, %28 : vector<8x32xf32>
    %cst_26 = arith.constant 0.000000e+00 : f32
    %30 = vector.broadcast %cst_26 : f32 to vector<8x32xf32>
    %31 = arith.maximumf %29, %30 : vector<8x32xf32>
    %c0_27 = arith.constant 0 : index
    %c0_28 = arith.constant 0 : index
    %32 = vector.load %arg5[%c0_27, %c0_28] : memref<8x8xf32, #tpu.memory_space<vmem>>, vector<8x8xf32>
    %c0_29 = arith.constant 0 : index
    %c0_30 = arith.constant 0 : index
    %33 = vector.load %arg12[%c0_29, %c0_30] : memref<8x32xf32, #tpu.memory_space<vmem>>, vector<8x32xf32>
    %cst_31 = arith.constant dense<0.000000e+00> : vector<8x32xf32>
    %34 = tpu.matmul %32, %33, %cst_31 {dimension_numbers = #tpu.dot_dimension_numbers<[1], [0], [0], [1], [0, 0, 1, 1], [], []>} : vector<8x8xf32>, vector<8x32xf32>, vector<8x32xf32> -> vector<8x32xf32>
    %c0_32 = arith.constant 0 : index
    %c0_33 = arith.constant 0 : index
    %35 = vector.load %arg8[%c0_32, %c0_33] : memref<8x8xf32, #tpu.memory_space<vmem>>, vector<8x8xf32>
    %c0_34 = arith.constant 0 : index
    %c0_35 = arith.constant 0 : index
    %36 = vector.load %arg13[%c0_34, %c0_35] : memref<8x32xf32, #tpu.memory_space<vmem>>, vector<8x32xf32>
    %cst_36 = arith.constant dense<0.000000e+00> : vector<8x32xf32>
    %37 = tpu.matmul %35, %36, %cst_36 {dimension_numbers = #tpu.dot_dimension_numbers<[1], [0], [0], [1], [0, 0, 1, 1], [], []>} : vector<8x8xf32>, vector<8x32xf32>, vector<8x32xf32> -> vector<8x32xf32>
    %38 = arith.addf %34, %37 : vector<8x32xf32>
    %c0_37 = arith.constant 0 : index
    %c0_38 = arith.constant 0 : index
    %39 = vector.load %arg14[%c0_37, %c0_38] : memref<1x32xf32, #tpu.memory_space<vmem>>, vector<1x32xf32>
    %40 = vector.broadcast %39 : vector<1x32xf32> to vector<8x32xf32>
    %41 = arith.addf %38, %40 : vector<8x32xf32>
    %42 = arith.negf %41 : vector<8x32xf32>
    %43 = math.exp %42 : vector<8x32xf32>
    %cst_39 = arith.constant 1.000000e+00 : f32
    %44 = vector.broadcast %cst_39 : f32 to vector<8x32xf32>
    %45 = arith.addf %44, %43 : vector<8x32xf32>
    %46 = arith.divf %44, %45 : vector<8x32xf32>
    %47 = arith.mulf %31, %46 : vector<8x32xf32>
    %c0_40 = arith.constant 0 : index
    %c0_41 = arith.constant 0 : index
    %48 = vector.load %arg3[%c0_40, %c0_41] : memref<8x16xf32, #tpu.memory_space<vmem>>, vector<8x16xf32>
    %c0_42 = arith.constant 0 : index
    %c0_43 = arith.constant 0 : index
    %49 = vector.load %arg10[%c0_42, %c0_43] : memref<16x32xf32, #tpu.memory_space<vmem>>, vector<16x32xf32>
    %cst_44 = arith.constant dense<0.000000e+00> : vector<8x32xf32>
    %50 = tpu.matmul %48, %49, %cst_44 {dimension_numbers = #tpu.dot_dimension_numbers<[1], [0], [0], [1], [0, 0, 1, 1], [], []>} : vector<8x16xf32>, vector<16x32xf32>, vector<8x32xf32> -> vector<8x32xf32>
    %c0_45 = arith.constant 0 : index
    %c0_46 = arith.constant 0 : index
    %51 = vector.load %arg11[%c0_45, %c0_46] : memref<1x32xf32, #tpu.memory_space<vmem>>, vector<1x32xf32>
    %52 = vector.broadcast %51 : vector<1x32xf32> to vector<8x32xf32>
    %53 = arith.addf %50, %52 : vector<8x32xf32>
    %cst_47 = arith.constant 0.000000e+00 : f32
    %54 = vector.broadcast %cst_47 : f32 to vector<8x32xf32>
    %55 = arith.maximumf %53, %54 : vector<8x32xf32>
    %c0_48 = arith.constant 0 : index
    %c0_49 = arith.constant 0 : index
    %56 = vector.load %arg6[%c0_48, %c0_49] : memref<8x8xf32, #tpu.memory_space<vmem>>, vector<8x8xf32>
    %c0_50 = arith.constant 0 : index
    %c0_51 = arith.constant 0 : index
    %57 = vector.load %arg12[%c0_50, %c0_51] : memref<8x32xf32, #tpu.memory_space<vmem>>, vector<8x32xf32>
    %cst_52 = arith.constant dense<0.000000e+00> : vector<8x32xf32>
    %58 = tpu.matmul %56, %57, %cst_52 {dimension_numbers = #tpu.dot_dimension_numbers<[1], [0], [0], [1], [0, 0, 1, 1], [], []>} : vector<8x8xf32>, vector<8x32xf32>, vector<8x32xf32> -> vector<8x32xf32>
    %c0_53 = arith.constant 0 : index
    %c0_54 = arith.constant 0 : index
    %59 = vector.load %arg9[%c0_53, %c0_54] : memref<8x8xf32, #tpu.memory_space<vmem>>, vector<8x8xf32>
    %c0_55 = arith.constant 0 : index
    %c0_56 = arith.constant 0 : index
    %60 = vector.load %arg13[%c0_55, %c0_56] : memref<8x32xf32, #tpu.memory_space<vmem>>, vector<8x32xf32>
    %cst_57 = arith.constant dense<0.000000e+00> : vector<8x32xf32>
    %61 = tpu.matmul %59, %60, %cst_57 {dimension_numbers = #tpu.dot_dimension_numbers<[1], [0], [0], [1], [0, 0, 1, 1], [], []>} : vector<8x8xf32>, vector<8x32xf32>, vector<8x32xf32> -> vector<8x32xf32>
    %62 = arith.addf %58, %61 : vector<8x32xf32>
    %c0_58 = arith.constant 0 : index
    %c0_59 = arith.constant 0 : index
    %63 = vector.load %arg14[%c0_58, %c0_59] : memref<1x32xf32, #tpu.memory_space<vmem>>, vector<1x32xf32>
    %64 = vector.broadcast %63 : vector<1x32xf32> to vector<8x32xf32>
    %65 = arith.addf %62, %64 : vector<8x32xf32>
    %66 = arith.negf %65 : vector<8x32xf32>
    %67 = math.exp %66 : vector<8x32xf32>
    %cst_60 = arith.constant 1.000000e+00 : f32
    %68 = vector.broadcast %cst_60 : f32 to vector<8x32xf32>
    %69 = arith.addf %68, %67 : vector<8x32xf32>
    %70 = arith.divf %68, %69 : vector<8x32xf32>
    %71 = arith.mulf %55, %70 : vector<8x32xf32>
    %c0_61 = arith.constant 0 : index
    %c0_62 = arith.constant 0 : index
    %72 = vector.load %arg15[%c0_61, %c0_62] : memref<32x32xf32, #tpu.memory_space<vmem>>, vector<32x32xf32>
    %cst_63 = arith.constant dense<0.000000e+00> : vector<8x32xf32>
    %73 = tpu.matmul %23, %72, %cst_63 {dimension_numbers = #tpu.dot_dimension_numbers<[1], [0], [0], [1], [0, 0, 1, 1], [], []>} : vector<8x32xf32>, vector<32x32xf32>, vector<8x32xf32> -> vector<8x32xf32>
    %c0_64 = arith.constant 0 : index
    %c0_65 = arith.constant 0 : index
    %74 = vector.load %arg16[%c0_64, %c0_65] : memref<1x32xf32, #tpu.memory_space<vmem>>, vector<1x32xf32>
    %75 = vector.broadcast %74 : vector<1x32xf32> to vector<8x32xf32>
    %76 = arith.addf %73, %75 : vector<8x32xf32>
    %cst_66 = arith.constant 0.000000e+00 : f32
    %77 = vector.broadcast %cst_66 : f32 to vector<8x32xf32>
    %78 = arith.maximumf %76, %77 : vector<8x32xf32>
    %c0_67 = arith.constant 0 : index
    %c0_68 = arith.constant 0 : index
    %79 = vector.load %arg15[%c0_67, %c0_68] : memref<32x32xf32, #tpu.memory_space<vmem>>, vector<32x32xf32>
    %cst_69 = arith.constant dense<0.000000e+00> : vector<8x32xf32>
    %80 = tpu.matmul %47, %79, %cst_69 {dimension_numbers = #tpu.dot_dimension_numbers<[1], [0], [0], [1], [0, 0, 1, 1], [], []>} : vector<8x32xf32>, vector<32x32xf32>, vector<8x32xf32> -> vector<8x32xf32>
    %c0_70 = arith.constant 0 : index
    %c0_71 = arith.constant 0 : index
    %81 = vector.load %arg16[%c0_70, %c0_71] : memref<1x32xf32, #tpu.memory_space<vmem>>, vector<1x32xf32>
    %82 = vector.broadcast %81 : vector<1x32xf32> to vector<8x32xf32>
    %83 = arith.addf %80, %82 : vector<8x32xf32>
    %cst_72 = arith.constant 0.000000e+00 : f32
    %84 = vector.broadcast %cst_72 : f32 to vector<8x32xf32>
    %85 = arith.maximumf %83, %84 : vector<8x32xf32>
    %86 = arith.addf %78, %85 : vector<8x32xf32>
    %c0_73 = arith.constant 0 : index
    %c0_74 = arith.constant 0 : index
    %87 = vector.load %arg15[%c0_73, %c0_74] : memref<32x32xf32, #tpu.memory_space<vmem>>, vector<32x32xf32>
    %cst_75 = arith.constant dense<0.000000e+00> : vector<8x32xf32>
    %88 = tpu.matmul %71, %87, %cst_75 {dimension_numbers = #tpu.dot_dimension_numbers<[1], [0], [0], [1], [0, 0, 1, 1], [], []>} : vector<8x32xf32>, vector<32x32xf32>, vector<8x32xf32> -> vector<8x32xf32>
    %c0_76 = arith.constant 0 : index
    %c0_77 = arith.constant 0 : index
    %89 = vector.load %arg16[%c0_76, %c0_77] : memref<1x32xf32, #tpu.memory_space<vmem>>, vector<1x32xf32>
    %90 = vector.broadcast %89 : vector<1x32xf32> to vector<8x32xf32>
    %91 = arith.addf %88, %90 : vector<8x32xf32>
    %cst_78 = arith.constant 0.000000e+00 : f32
    %92 = vector.broadcast %cst_78 : f32 to vector<8x32xf32>
    %93 = arith.maximumf %91, %92 : vector<8x32xf32>
    %94 = arith.addf %86, %93 : vector<8x32xf32>
    %c0_79 = arith.constant 0 : index
    %c0_80 = arith.constant 0 : index
    %95 = vector.load %arg22[%c0_79, %c0_80] : memref<32x128xf32, #tpu.memory_space<vmem>>, vector<32x128xf32>
    %cst_81 = arith.constant dense<0.000000e+00> : vector<8x128xf32>
    %96 = tpu.matmul %94, %95, %cst_81 {dimension_numbers = #tpu.dot_dimension_numbers<[1], [0], [0], [1], [0, 0, 1, 1], [], []>} : vector<8x32xf32>, vector<32x128xf32>, vector<8x128xf32> -> vector<8x128xf32>
    %c0_82 = arith.constant 0 : index
    %c0_83 = arith.constant 0 : index
    %97 = vector.load %arg23[%c0_82, %c0_83] : memref<1x128xf32, #tpu.memory_space<vmem>>, vector<1x128xf32>
    %98 = vector.broadcast %97 : vector<1x128xf32> to vector<8x128xf32>
    %99 = arith.addf %96, %98 : vector<8x128xf32>
    %c0_84 = arith.constant 0 : index
    %c0_85 = arith.constant 0 : index
    %100 = vector.load %arg25[%c0_84, %c0_85] : memref<8x128xf32, #tpu.memory_space<vmem>>, vector<8x128xf32>
    tpu.vector_store %arg25[%c0_84, %c0_85], %99 {strides = array<i32>} : memref<8x128xf32, #tpu.memory_space<vmem>>, vector<8x128xf32>,
    %c0_86 = arith.constant 0 : index
    %c0_87 = arith.constant 0 : index
    %101 = vector.load %arg17[%c0_86, %c0_87] : memref<32x32xf32, #tpu.memory_space<vmem>>, vector<32x32xf32>
    %cst_88 = arith.constant dense<0.000000e+00> : vector<8x32xf32>
    %102 = tpu.matmul %94, %101, %cst_88 {dimension_numbers = #tpu.dot_dimension_numbers<[1], [0], [0], [1], [0, 0, 1, 1], [], []>} : vector<8x32xf32>, vector<32x32xf32>, vector<8x32xf32> -> vector<8x32xf32>
    %103 = tpu.iota {dimensions = array<i32: 1>} : vector<8x128xi32>
    %c8_i32 = arith.constant 8 : i32
    %104 = vector.broadcast %c8_i32 : i32 to vector<8x128xi32>
    %105 = arith.cmpi slt, %103, %104 : vector<8x128xi32>
    %c8_i32_89 = arith.constant 8 : i32
    %106 = vector.broadcast %c8_i32_89 : i32 to vector<8x128xi32>
    %107 = arith.cmpi sge, %103, %106 : vector<8x128xi32>
    %c12_i32 = arith.constant 12 : i32
    %108 = vector.broadcast %c12_i32 : i32 to vector<8x128xi32>
    %109 = arith.cmpi slt, %103, %108 : vector<8x128xi32>
    %110 = arith.andi %107, %109 : vector<8x128xi1>
    %c0_90 = arith.constant 0 : index
    %c0_91 = arith.constant 0 : index
    %111 = vector.load %arg18[%c0_90, %c0_91] : memref<32x32xf32, #tpu.memory_space<vmem>>, vector<32x32xf32>
    %cst_92 = arith.constant dense<0.000000e+00> : vector<8x32xf32>
    %112 = tpu.matmul %23, %111, %cst_92 {dimension_numbers = #tpu.dot_dimension_numbers<[1], [0], [0], [1], [0, 0, 1, 1], [], []>} : vector<8x32xf32>, vector<32x32xf32>, vector<8x32xf32> -> vector<8x32xf32>
    %113 = arith.addf %112, %102 : vector<8x32xf32>
    %c0_93 = arith.constant 0 : index
    %c0_94 = arith.constant 0 : index
    %114 = vector.load %arg19[%c0_93, %c0_94] : memref<1x32xf32, #tpu.memory_space<vmem>>, vector<1x32xf32>
    %115 = vector.broadcast %114 : vector<1x32xf32> to vector<8x32xf32>
    %116 = arith.addf %113, %115 : vector<8x32xf32>
    %cst_95 = arith.constant 0.000000e+00 : f32
    %117 = vector.broadcast %cst_95 : f32 to vector<8x32xf32>
    %118 = arith.maximumf %116, %117 : vector<8x32xf32>
    %c0_96 = arith.constant 0 : index
    %c0_97 = arith.constant 0 : index
    %119 = vector.load %arg20[%c0_96, %c0_97] : memref<32x128xf32, #tpu.memory_space<vmem>>, vector<32x128xf32>
    %cst_98 = arith.constant dense<0.000000e+00> : vector<8x128xf32>
    %120 = tpu.matmul %118, %119, %cst_98 {dimension_numbers = #tpu.dot_dimension_numbers<[1], [0], [0], [1], [0, 0, 1, 1], [], []>} : vector<8x32xf32>, vector<32x128xf32>, vector<8x128xf32> -> vector<8x128xf32>
    %c0_99 = arith.constant 0 : index
    %c0_100 = arith.constant 0 : index
    %121 = vector.load %arg21[%c0_99, %c0_100] : memref<1x128xf32, #tpu.memory_space<vmem>>, vector<1x128xf32>
    %122 = vector.broadcast %121 : vector<1x128xf32> to vector<8x128xf32>
    %123 = arith.addf %120, %122 : vector<8x128xf32>
    %cst_101 = arith.constant 0xFF800000 : f32
    %124 = vector.broadcast %cst_101 : f32 to vector<8x128xf32>
    %125 = arith.select %105, %123, %124 : vector<8x128xi1>, vector<8x128xf32>
    %cst_102 = arith.constant dense<0xFF800000> : vector<8xf32>
    %126 = vector.multi_reduction <maximumf>, %125, %cst_102 [1] : vector<8x128xf32> to vector<8xf32>
    %127 = vector.shape_cast %126 : vector<8xf32> to vector<8x1xf32>
    %cst_103 = arith.constant 0xFF800000 : f32
    %128 = vector.broadcast %cst_103 : f32 to vector<8x128xf32>
    %129 = arith.select %110, %123, %128 : vector<8x128xi1>, vector<8x128xf32>
    %cst_104 = arith.constant dense<0xFF800000> : vector<8xf32>
    %130 = vector.multi_reduction <maximumf>, %129, %cst_104 [1] : vector<8x128xf32> to vector<8xf32>
    %131 = vector.shape_cast %130 : vector<8xf32> to vector<8x1xf32>
    %132 = vector.shape_cast %127 : vector<8x1xf32> to vector<8x1xf32>
    %133 = vector.broadcast %132 : vector<8x1xf32> to vector<8x128xf32>
    %134 = vector.shape_cast %131 : vector<8x1xf32> to vector<8x1xf32>
    %135 = vector.broadcast %134 : vector<8x1xf32> to vector<8x128xf32>
    %136 = arith.select %105, %133, %135 : vector<8x128xi1>, vector<8x128xf32>
    %137 = arith.subf %123, %136 : vector<8x128xf32>
    %138 = math.exp %137 : vector<8x128xf32>
    %cst_105 = arith.constant 0.000000e+00 : f32
    %139 = vector.broadcast %cst_105 : f32 to vector<8x128xf32>
    %140 = arith.select %105, %138, %139 : vector<8x128xi1>, vector<8x128xf32>
    %cst_106 = arith.constant dense<0.000000e+00> : vector<8xf32>
    %141 = vector.multi_reduction <add>, %140, %cst_106 [1] : vector<8x128xf32> to vector<8xf32>
    %142 = vector.shape_cast %141 : vector<8xf32> to vector<8x1xf32>
    %cst_107 = arith.constant 0.000000e+00 : f32
    %143 = vector.broadcast %cst_107 : f32 to vector<8x128xf32>
    %144 = arith.select %110, %138, %143 : vector<8x128xi1>, vector<8x128xf32>
    %cst_108 = arith.constant dense<0.000000e+00> : vector<8xf32>
    %145 = vector.multi_reduction <add>, %144, %cst_108 [1] : vector<8x128xf32> to vector<8xf32>
    %146 = vector.shape_cast %145 : vector<8xf32> to vector<8x1xf32>
    %147 = vector.shape_cast %142 : vector<8x1xf32> to vector<8x1xf32>
    %148 = vector.broadcast %147 : vector<8x1xf32> to vector<8x128xf32>
    %149 = vector.shape_cast %146 : vector<8x1xf32> to vector<8x1xf32>
    %150 = vector.broadcast %149 : vector<8x1xf32> to vector<8x128xf32>
    %151 = arith.select %105, %148, %150 : vector<8x128xi1>, vector<8x128xf32>
    %152 = tpu.reciprocal %151 : vector<8x128xf32> -> vector<8x128xf32>
    %153 = arith.mulf %138, %152 : vector<8x128xf32>
    %c0_109 = arith.constant 0 : index
    %c0_110 = arith.constant 0 : index
    %c0_111 = arith.constant 0 : index
    %154 = vector.load %arg24[%c0_109, %c0_110, %c0_111] : memref<3x8x128xf32, #tpu.memory_space<vmem>>, vector<1x8x128xf32>
    %155 = vector.shape_cast %154 : vector<1x8x128xf32> to vector<8x128xf32>
    %156 = vector.shape_cast %153 : vector<8x128xf32> to vector<1x8x128xf32>
    tpu.vector_store %arg24[%c0_109, %c0_110, %c0_111], %156 {strides = array<i32>} : memref<3x8x128xf32, #tpu.memory_space<vmem>>, vector<1x8x128xf32>,
    %c0_112 = arith.constant 0 : index
    %c0_113 = arith.constant 0 : index
    %157 = vector.load %arg18[%c0_112, %c0_113] : memref<32x32xf32, #tpu.memory_space<vmem>>, vector<32x32xf32>
    %cst_114 = arith.constant dense<0.000000e+00> : vector<8x32xf32>
    %158 = tpu.matmul %47, %157, %cst_114 {dimension_numbers = #tpu.dot_dimension_numbers<[1], [0], [0], [1], [0, 0, 1, 1], [], []>} : vector<8x32xf32>, vector<32x32xf32>, vector<8x32xf32> -> vector<8x32xf32>
    %159 = arith.addf %158, %102 : vector<8x32xf32>
    %c0_115 = arith.constant 0 : index
    %c0_116 = arith.constant 0 : index
    %160 = vector.load %arg19[%c0_115, %c0_116] : memref<1x32xf32, #tpu.memory_space<vmem>>, vector<1x32xf32>
    %161 = vector.broadcast %160 : vector<1x32xf32> to vector<8x32xf32>
    %162 = arith.addf %159, %161 : vector<8x32xf32>
    %cst_117 = arith.constant 0.000000e+00 : f32
    %163 = vector.broadcast %cst_117 : f32 to vector<8x32xf32>
    %164 = arith.maximumf %162, %163 : vector<8x32xf32>
    %c0_118 = arith.constant 0 : index
    %c0_119 = arith.constant 0 : index
    %165 = vector.load %arg20[%c0_118, %c0_119] : memref<32x128xf32, #tpu.memory_space<vmem>>, vector<32x128xf32>
    %cst_120 = arith.constant dense<0.000000e+00> : vector<8x128xf32>
    %166 = tpu.matmul %164, %165, %cst_120 {dimension_numbers = #tpu.dot_dimension_numbers<[1], [0], [0], [1], [0, 0, 1, 1], [], []>} : vector<8x32xf32>, vector<32x128xf32>, vector<8x128xf32> -> vector<8x128xf32>
    %c0_121 = arith.constant 0 : index
    %c0_122 = arith.constant 0 : index
    %167 = vector.load %arg21[%c0_121, %c0_122] : memref<1x128xf32, #tpu.memory_space<vmem>>, vector<1x128xf32>
    %168 = vector.broadcast %167 : vector<1x128xf32> to vector<8x128xf32>
    %169 = arith.addf %166, %168 : vector<8x128xf32>
    %cst_123 = arith.constant 0xFF800000 : f32
    %170 = vector.broadcast %cst_123 : f32 to vector<8x128xf32>
    %171 = arith.select %105, %169, %170 : vector<8x128xi1>, vector<8x128xf32>
    %cst_124 = arith.constant dense<0xFF800000> : vector<8xf32>
    %172 = vector.multi_reduction <maximumf>, %171, %cst_124 [1] : vector<8x128xf32> to vector<8xf32>
    %173 = vector.shape_cast %172 : vector<8xf32> to vector<8x1xf32>
    %cst_125 = arith.constant 0xFF800000 : f32
    %174 = vector.broadcast %cst_125 : f32 to vector<8x128xf32>
    %175 = arith.select %110, %169, %174 : vector<8x128xi1>, vector<8x128xf32>
    %cst_126 = arith.constant dense<0xFF800000> : vector<8xf32>
    %176 = vector.multi_reduction <maximumf>, %175, %cst_126 [1] : vector<8x128xf32> to vector<8xf32>
    %177 = vector.shape_cast %176 : vector<8xf32> to vector<8x1xf32>
    %178 = vector.shape_cast %173 : vector<8x1xf32> to vector<8x1xf32>
    %179 = vector.broadcast %178 : vector<8x1xf32> to vector<8x128xf32>
    %180 = vector.shape_cast %177 : vector<8x1xf32> to vector<8x1xf32>
    %181 = vector.broadcast %180 : vector<8x1xf32> to vector<8x128xf32>
    %182 = arith.select %105, %179, %181 : vector<8x128xi1>, vector<8x128xf32>
    %183 = arith.subf %169, %182 : vector<8x128xf32>
    %184 = math.exp %183 : vector<8x128xf32>
    %cst_127 = arith.constant 0.000000e+00 : f32
    %185 = vector.broadcast %cst_127 : f32 to vector<8x128xf32>
    %186 = arith.select %105, %184, %185 : vector<8x128xi1>, vector<8x128xf32>
    %cst_128 = arith.constant dense<0.000000e+00> : vector<8xf32>
    %187 = vector.multi_reduction <add>, %186, %cst_128 [1] : vector<8x128xf32> to vector<8xf32>
    %188 = vector.shape_cast %187 : vector<8xf32> to vector<8x1xf32>
    %cst_129 = arith.constant 0.000000e+00 : f32
    %189 = vector.broadcast %cst_129 : f32 to vector<8x128xf32>
    %190 = arith.select %110, %184, %189 : vector<8x128xi1>, vector<8x128xf32>
    %cst_130 = arith.constant dense<0.000000e+00> : vector<8xf32>
    %191 = vector.multi_reduction <add>, %190, %cst_130 [1] : vector<8x128xf32> to vector<8xf32>
    %192 = vector.shape_cast %191 : vector<8xf32> to vector<8x1xf32>
    %193 = vector.shape_cast %188 : vector<8x1xf32> to vector<8x1xf32>
    %194 = vector.broadcast %193 : vector<8x1xf32> to vector<8x128xf32>
    %195 = vector.shape_cast %192 : vector<8x1xf32> to vector<8x1xf32>
    %196 = vector.broadcast %195 : vector<8x1xf32> to vector<8x128xf32>
    %197 = arith.select %105, %194, %196 : vector<8x128xi1>, vector<8x128xf32>
    %198 = tpu.reciprocal %197 : vector<8x128xf32> -> vector<8x128xf32>
    %199 = arith.mulf %184, %198 : vector<8x128xf32>
    %c1 = arith.constant 1 : index
    %c0_131 = arith.constant 0 : index
    %c0_132 = arith.constant 0 : index
    %200 = vector.load %arg24[%c1, %c0_131, %c0_132] : memref<3x8x128xf32, #tpu.memory_space<vmem>>, vector<1x8x128xf32>
    %201 = vector.shape_cast %200 : vector<1x8x128xf32> to vector<8x128xf32>
    %202 = vector.shape_cast %199 : vector<8x128xf32> to vector<1x8x128xf32>
    tpu.vector_store %arg24[%c1, %c0_131, %c0_132], %202 {strides = array<i32>} : memref<3x8x128xf32, #tpu.memory_space<vmem>>, vector<1x8x128xf32>,
    %c0_133 = arith.constant 0 : index
    %c0_134 = arith.constant 0 : index
    %203 = vector.load %arg18[%c0_133, %c0_134] : memref<32x32xf32, #tpu.memory_space<vmem>>, vector<32x32xf32>
    %cst_135 = arith.constant dense<0.000000e+00> : vector<8x32xf32>
    %204 = tpu.matmul %71, %203, %cst_135 {dimension_numbers = #tpu.dot_dimension_numbers<[1], [0], [0], [1], [0, 0, 1, 1], [], []>} : vector<8x32xf32>, vector<32x32xf32>, vector<8x32xf32> -> vector<8x32xf32>
    %205 = arith.addf %204, %102 : vector<8x32xf32>
    %c0_136 = arith.constant 0 : index
    %c0_137 = arith.constant 0 : index
    %206 = vector.load %arg19[%c0_136, %c0_137] : memref<1x32xf32, #tpu.memory_space<vmem>>, vector<1x32xf32>
    %207 = vector.broadcast %206 : vector<1x32xf32> to vector<8x32xf32>
    %208 = arith.addf %205, %207 : vector<8x32xf32>
    %cst_138 = arith.constant 0.000000e+00 : f32
    %209 = vector.broadcast %cst_138 : f32 to vector<8x32xf32>
    %210 = arith.maximumf %208, %209 : vector<8x32xf32>
    %c0_139 = arith.constant 0 : index
    %c0_140 = arith.constant 0 : index
    %211 = vector.load %arg20[%c0_139, %c0_140] : memref<32x128xf32, #tpu.memory_space<vmem>>, vector<32x128xf32>
    %cst_141 = arith.constant dense<0.000000e+00> : vector<8x128xf32>
    %212 = tpu.matmul %210, %211, %cst_141 {dimension_numbers = #tpu.dot_dimension_numbers<[1], [0], [0], [1], [0, 0, 1, 1], [], []>} : vector<8x32xf32>, vector<32x128xf32>, vector<8x128xf32> -> vector<8x128xf32>
    %c0_142 = arith.constant 0 : index
    %c0_143 = arith.constant 0 : index
    %213 = vector.load %arg21[%c0_142, %c0_143] : memref<1x128xf32, #tpu.memory_space<vmem>>, vector<1x128xf32>
    %214 = vector.broadcast %213 : vector<1x128xf32> to vector<8x128xf32>
    %215 = arith.addf %212, %214 : vector<8x128xf32>
    %cst_144 = arith.constant 0xFF800000 : f32
    %216 = vector.broadcast %cst_144 : f32 to vector<8x128xf32>
    %217 = arith.select %105, %215, %216 : vector<8x128xi1>, vector<8x128xf32>
    %cst_145 = arith.constant dense<0xFF800000> : vector<8xf32>
    %218 = vector.multi_reduction <maximumf>, %217, %cst_145 [1] : vector<8x128xf32> to vector<8xf32>
    %219 = vector.shape_cast %218 : vector<8xf32> to vector<8x1xf32>
    %cst_146 = arith.constant 0xFF800000 : f32
    %220 = vector.broadcast %cst_146 : f32 to vector<8x128xf32>
    %221 = arith.select %110, %215, %220 : vector<8x128xi1>, vector<8x128xf32>
    %cst_147 = arith.constant dense<0xFF800000> : vector<8xf32>
    %222 = vector.multi_reduction <maximumf>, %221, %cst_147 [1] : vector<8x128xf32> to vector<8xf32>
    %223 = vector.shape_cast %222 : vector<8xf32> to vector<8x1xf32>
    %224 = vector.shape_cast %219 : vector<8x1xf32> to vector<8x1xf32>
    %225 = vector.broadcast %224 : vector<8x1xf32> to vector<8x128xf32>
    %226 = vector.shape_cast %223 : vector<8x1xf32> to vector<8x1xf32>
    %227 = vector.broadcast %226 : vector<8x1xf32> to vector<8x128xf32>
    %228 = arith.select %105, %225, %227 : vector<8x128xi1>, vector<8x128xf32>
    %229 = arith.subf %215, %228 : vector<8x128xf32>
    %230 = math.exp %229 : vector<8x128xf32>
    %cst_148 = arith.constant 0.000000e+00 : f32
    %231 = vector.broadcast %cst_148 : f32 to vector<8x128xf32>
    %232 = arith.select %105, %230, %231 : vector<8x128xi1>, vector<8x128xf32>
    %cst_149 = arith.constant dense<0.000000e+00> : vector<8xf32>
    %233 = vector.multi_reduction <add>, %232, %cst_149 [1] : vector<8x128xf32> to vector<8xf32>
    %234 = vector.shape_cast %233 : vector<8xf32> to vector<8x1xf32>
    %cst_150 = arith.constant 0.000000e+00 : f32
    %235 = vector.broadcast %cst_150 : f32 to vector<8x128xf32>
    %236 = arith.select %110, %230, %235 : vector<8x128xi1>, vector<8x128xf32>
    %cst_151 = arith.constant dense<0.000000e+00> : vector<8xf32>
    %237 = vector.multi_reduction <add>, %236, %cst_151 [1] : vector<8x128xf32> to vector<8xf32>
    %238 = vector.shape_cast %237 : vector<8xf32> to vector<8x1xf32>
    %239 = vector.shape_cast %234 : vector<8x1xf32> to vector<8x1xf32>
    %240 = vector.broadcast %239 : vector<8x1xf32> to vector<8x128xf32>
    %241 = vector.shape_cast %238 : vector<8x1xf32> to vector<8x1xf32>
    %242 = vector.broadcast %241 : vector<8x1xf32> to vector<8x128xf32>
    %243 = arith.select %105, %240, %242 : vector<8x128xi1>, vector<8x128xf32>
    %244 = tpu.reciprocal %243 : vector<8x128xf32> -> vector<8x128xf32>
    %245 = arith.mulf %230, %244 : vector<8x128xf32>
    %c2 = arith.constant 2 : index
    %c0_152 = arith.constant 0 : index
    %c0_153 = arith.constant 0 : index
    %246 = vector.load %arg24[%c2, %c0_152, %c0_153] : memref<3x8x128xf32, #tpu.memory_space<vmem>>, vector<1x8x128xf32>
    %247 = vector.shape_cast %246 : vector<1x8x128xf32> to vector<8x128xf32>
    %248 = vector.shape_cast %245 : vector<8x128xf32> to vector<1x8x128xf32>
    tpu.vector_store %arg24[%c2, %c0_152, %c0_153], %248 {strides = array<i32>} : memref<3x8x128xf32, #tpu.memory_space<vmem>>, vector<1x8x128xf32>,
    return
  }
  func.func @transform_0(%arg0: i32) -> (i32, i32) {
    %c0_i32 = arith.constant 0 : i32
    %c0_i32_0 = arith.constant 0 : i32
    return %arg0, %c0_i32 : i32, i32
  }
  func.func @transform_1(%arg0: i32) -> (i32, i32) {
    %c0_i32 = arith.constant 0 : i32
    %c0_i32_0 = arith.constant 0 : i32
    return %arg0, %c0_i32 : i32, i32
  }
  func.func @transform_2(%arg0: i32) -> (i32, i32) {
    %c0_i32 = arith.constant 0 : i32
    %c0_i32_0 = arith.constant 0 : i32
    return %arg0, %c0_i32 : i32, i32
  }
  func.func @transform_3(%arg0: i32) -> (i32, i32) {
    %c0_i32 = arith.constant 0 : i32
    %c0_i32_0 = arith.constant 0 : i32
    return %arg0, %c0_i32 : i32, i32
  }
  func.func @transform_4(%arg0: i32) -> (i32, i32) {
    %c0_i32 = arith.constant 0 : i32
    %c0_i32_0 = arith.constant 0 : i32
    return %arg0, %c0_i32 : i32, i32
  }
  func.func @transform_5(%arg0: i32) -> (i32, i32) {
    %c0_i32 = arith.constant 0 : i32
    %c0_i32_0 = arith.constant 0 : i32
    return %arg0, %c0_i32 : i32, i32
  }
  func.func @transform_6(%arg0: i32) -> (i32, i32) {
    %c0_i32 = arith.constant 0 : i32
    %c0_i32_0 = arith.constant 0 : i32
    return %arg0, %c0_i32 : i32, i32
  }
  func.func @transform_7(%arg0: i32) -> (i32, i32) {
    %c0_i32 = arith.constant 0 : i32
    %c0_i32_0 = arith.constant 0 : i32
    return %arg0, %c0_i32 : i32, i32
  }
  func.func @transform_8(%arg0: i32) -> (i32, i32) {
    %c0_i32 = arith.constant 0 : i32
    %c0_i32_0 = arith.constant 0 : i32
    return %arg0, %c0_i32 : i32, i32
  }
  func.func @transform_9(%arg0: i32) -> (i32, i32) {
    %c0_i32 = arith.constant 0 : i32
    %c0_i32_0 = arith.constant 0 : i32
    %c0_i32_1 = arith.constant 0 : i32
    return %c0_i32, %c0_i32_0 : i32, i32
  }
  func.func @transform_10(%arg0: i32) -> (i32, i32) {
    %c0_i32 = arith.constant 0 : i32
    %c0_i32_0 = arith.constant 0 : i32
    %c0_i32_1 = arith.constant 0 : i32
    return %c0_i32, %c0_i32_0 : i32, i32
  }
  func.func @transform_11(%arg0: i32) -> (i32, i32) {
    %c0_i32 = arith.constant 0 : i32
    %c0_i32_0 = arith.constant 0 : i32
    %c0_i32_1 = arith.constant 0 : i32
    return %c0_i32, %c0_i32_0 : i32, i32
  }
  func.func @transform_12(%arg0: i32) -> (i32, i32) {
    %c0_i32 = arith.constant 0 : i32
    %c0_i32_0 = arith.constant 0 : i32
    %c0_i32_1 = arith.constant 0 : i32
    return %c0_i32, %c0_i32_0 : i32, i32
  }
  func.func @transform_13(%arg0: i32) -> (i32, i32) {
    %c0_i32 = arith.constant 0 : i32
    %c0_i32_0 = arith.constant 0 : i32
    %c0_i32_1 = arith.constant 0 : i32
    return %c0_i32, %c0_i32_0 : i32, i32
  }
  func.func @transform_14(%arg0: i32) -> (i32, i32) {
    %c0_i32 = arith.constant 0 : i32
    %c0_i32_0 = arith.constant 0 : i32
    %c0_i32_1 = arith.constant 0 : i32
    return %c0_i32, %c0_i32_0 : i32, i32
  }
  func.func @transform_15(%arg0: i32) -> (i32, i32) {
    %c0_i32 = arith.constant 0 : i32
    %c0_i32_0 = arith.constant 0 : i32
    %c0_i32_1 = arith.constant 0 : i32
    return %c0_i32, %c0_i32_0 : i32, i32
  }
  func.func @transform_16(%arg0: i32) -> (i32, i32) {
    %c0_i32 = arith.constant 0 : i32
    %c0_i32_0 = arith.constant 0 : i32
    %c0_i32_1 = arith.constant 0 : i32
    return %c0_i32, %c0_i32_0 : i32, i32
  }
  func.func @transform_17(%arg0: i32) -> (i32, i32) {
    %c0_i32 = arith.constant 0 : i32
    %c0_i32_0 = arith.constant 0 : i32
    %c0_i32_1 = arith.constant 0 : i32
    return %c0_i32, %c0_i32_0 : i32, i32
  }
  func.func @transform_18(%arg0: i32) -> (i32, i32) {
    %c0_i32 = arith.constant 0 : i32
    %c0_i32_0 = arith.constant 0 : i32
    %c0_i32_1 = arith.constant 0 : i32
    return %c0_i32, %c0_i32_0 : i32, i32
  }
  func.func @transform_19(%arg0: i32) -> (i32, i32) {
    %c0_i32 = arith.constant 0 : i32
    %c0_i32_0 = arith.constant 0 : i32
    %c0_i32_1 = arith.constant 0 : i32
    return %c0_i32, %c0_i32_0 : i32, i32
  }
  func.func @transform_20(%arg0: i32) -> (i32, i32) {
    %c0_i32 = arith.constant 0 : i32
    %c0_i32_0 = arith.constant 0 : i32
    %c0_i32_1 = arith.constant 0 : i32
    return %c0_i32, %c0_i32_0 : i32, i32
  }
  func.func @transform_21(%arg0: i32) -> (i32, i32) {
    %c0_i32 = arith.constant 0 : i32
    %c0_i32_0 = arith.constant 0 : i32
    %c0_i32_1 = arith.constant 0 : i32
    return %c0_i32, %c0_i32_0 : i32, i32
  }
  func.func @transform_22(%arg0: i32) -> (i32, i32) {
    %c0_i32 = arith.constant 0 : i32
    %c0_i32_0 = arith.constant 0 : i32
    %c0_i32_1 = arith.constant 0 : i32
    return %c0_i32, %c0_i32_0 : i32, i32
  }
  func.func @transform_23(%arg0: i32) -> (i32, i32, i32) {
    %c0_i32 = arith.constant 0 : i32
    %c0_i32_0 = arith.constant 0 : i32
    %c0_i32_1 = arith.constant 0 : i32
    return %c0_i32, %arg0, %c0_i32_0 : i32, i32, i32
  }
  func.func @transform_24(%arg0: i32) -> (i32, i32) {
    %c0_i32 = arith.constant 0 : i32
    %c0_i32_0 = arith.constant 0 : i32
    return %arg0, %c0_i32 : i32, i32
  }
}

</mosaic_0001>

<llo_original>
// kernel: tpu_custom_call.1
$region0: #{tpu_custom_call.1}
  #allocation0 [shape = 'u32[]', space=smem, size = 0x4, offset = 0x4, fixed_abs, tag = 'smem constant byte address 0x4 - core index']
  #allocation1 [shape = 'u32[144,128]{1,0:T(1,128)}', space=vmem, size = 0x12000, scoped, tag = 'internal scratch']
  %s0 = inlined_call_operand.vmem [shape: f32[20,16], index: 0, kind: input, shape index: {}]
  %s1 = inlined_call_operand.vmem [shape: f32[20,16], index: 1, kind: input, shape index: {}]
  %s2 = inlined_call_operand.vmem [shape: f32[20,16], index: 2, kind: input, shape index: {}]
  %s3 = inlined_call_operand.vmem [shape: f32[20,8], index: 3, kind: input, shape index: {}]
  %s4 = inlined_call_operand.vmem [shape: f32[20,8], index: 4, kind: input, shape index: {}]
  %s5 = inlined_call_operand.vmem [shape: f32[20,8], index: 5, kind: input, shape index: {}]
  %s6 = inlined_call_operand.vmem [shape: f32[20,8], index: 6, kind: input, shape index: {}]
  %s7 = inlined_call_operand.vmem [shape: f32[20,8], index: 7, kind: input, shape index: {}]
  %s8 = inlined_call_operand.vmem [shape: f32[20,8], index: 8, kind: input, shape index: {}]
  %s9 = inlined_call_operand.vmem [shape: f32[16,32], index: 9, kind: input, shape index: {}]
  %s10 = inlined_call_operand.vmem [shape: f32[1,32], index: 10, kind: input, shape index: {}]
  %s11 = inlined_call_operand.vmem [shape: f32[8,32], index: 11, kind: input, shape index: {}]
  %s12 = inlined_call_operand.vmem [shape: f32[8,32], index: 12, kind: input, shape index: {}]
  %s13 = inlined_call_operand.vmem [shape: f32[1,32], index: 13, kind: input, shape index: {}]
  %s14 = inlined_call_operand.vmem [shape: f32[32,32], index: 14, kind: input, shape index: {}]
  %s15 = inlined_call_operand.vmem [shape: f32[1,32], index: 15, kind: input, shape index: {}]
  %s16 = inlined_call_operand.vmem [shape: f32[32,32], index: 16, kind: input, shape index: {}]
  %s17 = inlined_call_operand.vmem [shape: f32[32,32], index: 17, kind: input, shape index: {}]
  %s18 = inlined_call_operand.vmem [shape: f32[1,32], index: 18, kind: input, shape index: {}]
  %s19 = inlined_call_operand.vmem [shape: f32[32,128], index: 19, kind: input, shape index: {}]
  %s20 = inlined_call_operand.vmem [shape: f32[1,128], index: 20, kind: input, shape index: {}]
  %s21 = inlined_call_operand.vmem [shape: f32[32,128], index: 21, kind: input, shape index: {}]
  %s22 = inlined_call_operand.vmem [shape: f32[1,128], index: 22, kind: input, shape index: {}]
  %s23 = inlined_call_operand.hbm [shape: f32[3,20,128], index: 23, kind: output, shape index: {0}]
  %s24 = inlined_call_operand.hbm [shape: f32[20,128], index: 24, kind: output, shape index: {1}]
  %25 = xla_tuple %s23, %s24
  %s26 = sld [smem:[#allocation0]]
  $region133: #{tpu_custom_call.1} parent=0
    _
  %s28 = ssub.s32 1, %s26
  %s29 = scalar_select 0, %s28, %s26
  $region1: #{tpu_custom_call.1} parent=0
    #allocation2 [shape = 'u8[24576]{0}', space=vmem, size = 0x6000, scoped, tag = 'output window, operand 0']
    #allocation3 [shape = 's32[2]{0}', space=sflag, size = 0x8, scoped, tag = 'scoped memory for tpu_custom_call.1']
    #allocation4 [shape = 'u8[8192]{0}', space=vmem, size = 0x2000, scoped, tag = 'output window, operand 1']
    #allocation5 [shape = 's32[2]{0}', space=sflag, size = 0x8, scoped, tag = 'scoped memory for tpu_custom_call.1']
    %30 = vsyncpa [#allocation3], 0
    %s31 = scalar_lea.sflag [#allocation3], 1
    %32 = vsyncpa %s31, 0
    %33 = vsyncpa [#allocation5], 0
    %s34 = scalar_lea.sflag [#allocation5], 1
    %35 = vsyncpa %s34, 0
    loop: start=0, step=1, limit=5
    $region2: #{tpu_custom_call.1} parent=1 // loop_pre_header
      _
    $region3: #{tpu_custom_call.1} parent=1 // loop_header
      %s37 = sphi 0, %s41
      %p38 = scmp.ge.s32.totalorder %s37, 5
      %s47 = sphi 0, %s49
      %s50 = sphi 0, %s47
      %s51 = sphi 0, %s50
      %s67 = sphi 0, %s51
      %s73 = sphi 0, %s75
      %s76 = sphi 0, %s73
      %s77 = sphi 0, %s76
      %s93 = sphi 0, %s77
      %s99 = sphi 0, %s101
      %s102 = sphi 0, %s99
      %s103 = sphi 0, %s102
      %s119 = sphi 0, %s103
      %s125 = sphi 0, %s127
      %s128 = sphi 0, %s125
      %s129 = sphi 0, %s128
      %s145 = sphi 0, %s129
      %s151 = sphi 0, %s153
      %s154 = sphi 0, %s151
      %s155 = sphi 0, %s154
      %s171 = sphi 0, %s155
      %s177 = sphi 0, %s179
      %s180 = sphi 0, %s177
      %s181 = sphi 0, %s180
      %s197 = sphi 0, %s181
      %s203 = sphi 0, %s205
      %s206 = sphi 0, %s203
      %s207 = sphi 0, %s206
      %s223 = sphi 0, %s207
      %s229 = sphi 0, %s231
      %s232 = sphi 0, %s229
      %s233 = sphi 0, %s232
      %s249 = sphi 0, %s233
      %s255 = sphi 0, %s257
      %s258 = sphi 0, %s255
      %s259 = sphi 0, %s258
      %s275 = sphi 0, %s259
      %s279 = sphi 0, %s279
      %s281 = sphi 0, %s279
      %s282 = sphi 0, %s281
      %s296 = sphi 0, %s282
      %s300 = sphi 0, %s300
      %s302 = sphi 0, %s300
      %s303 = sphi 0, %s302
      %s317 = sphi 0, %s303
      %s321 = sphi 0, %s321
      %s323 = sphi 0, %s321
      %s324 = sphi 0, %s323
      %s338 = sphi 0, %s324
      %s342 = sphi 0, %s342
      %s344 = sphi 0, %s342
      %s345 = sphi 0, %s344
      %s359 = sphi 0, %s345
      %s363 = sphi 0, %s363
      %s365 = sphi 0, %s363
      %s366 = sphi 0, %s365
      %s380 = sphi 0, %s366
      %s384 = sphi 0, %s384
      %s386 = sphi 0, %s384
      %s387 = sphi 0, %s386
      %s401 = sphi 0, %s387
      %s405 = sphi 0, %s405
      %s407 = sphi 0, %s405
      %s408 = sphi 0, %s407
      %s422 = sphi 0, %s408
      %s426 = sphi 0, %s426
      %s428 = sphi 0, %s426
      %s429 = sphi 0, %s428
      %s443 = sphi 0, %s429
      %s447 = sphi 0, %s447
      %s449 = sphi 0, %s447
      %s450 = sphi 0, %s449
      %s464 = sphi 0, %s450
      %s468 = sphi 0, %s468
      %s470 = sphi 0, %s468
      %s471 = sphi 0, %s470
      %s485 = sphi 0, %s471
      %s489 = sphi 0, %s489
      %s491 = sphi 0, %s489
      %s492 = sphi 0, %s491
      %s506 = sphi 0, %s492
      %s510 = sphi 0, %s510
      %s512 = sphi 0, %s510
      %s513 = sphi 0, %s512
      %s527 = sphi 0, %s513
      %s531 = sphi 0, %s531
      %s533 = sphi 0, %s531
      %s534 = sphi 0, %s533
      %s548 = sphi 0, %s534
      %s552 = sphi 0, %s552
      %s554 = sphi 0, %s552
      %s555 = sphi 0, %s554
      %s569 = sphi 0, %s555
      %s575 = sphi 0, %s577
      %s578 = sphi 0, %s575
      %s579 = sphi 0, %s578
      %s595 = sphi 0, %s579
      %s601 = sphi 0, %s603
      %s604 = sphi 0, %s601
      %s605 = sphi 0, %s604
      %s621 = sphi 0, %s605
    $region4: #{tpu_custom_call.1} parent=1 // loop_header_branch
      %40 = sbr.rel (%p38) target = $region8
    $region5: #{tpu_custom_call.1} parent=1 // loop_body
      %s42 = ssub.s32 %s37, 1
      %s43 = ssub.s32 %s37, 2
      %s44 = sadd.s32 %s37, 1
      %s45 = ssub.s32 %s37, %s44
      %p46 = scmp.eq.s32.totalorder %s45, 0
      %s48 = sadd.s32 %s47, 1
      %s49 = scalar_select %p46, %s47, %s48
      %p52 = pneg %p46
      %p53 = scmp.eq.s32.totalorder %s37, 2
      %p54 = por %p52, %p53
      %p55 = scmp.ne.s32.totalorder %s47, %s50
      %p56 = scmp.eq.s32.totalorder %s37, 0
      %p57 = por %p55, %p56
      %p58 = scmp.ne.s32.totalorder %s47, %s50
      %p59 = scmp.eq.s32.totalorder %s42, 2
      %p60 = por %p58, %p59
      %p61 = scmp.ne.s32.totalorder %s50, %s51
      %p62 = scmp.eq.s32.totalorder %s42, 0
      %p63 = por %p61, %p62
      %p64 = scmp.ne.s32.totalorder %s50, %s51
      %p65 = scmp.eq.s32.totalorder %s43, 2
      %p66 = por %p64, %p65
      %p68 = scmp.ne.s32.totalorder %s51, %s67
      %p69 = scmp.eq.s32.totalorder %s43, 0
      %p70 = por %p68, %p69
      %s71 = ssub.s32 %s37, %s44
      %p72 = scmp.eq.s32.totalorder %s71, 0
      %s74 = sadd.s32 %s73, 1
      %s75 = scalar_select %p72, %s73, %s74
      %p78 = pneg %p72
      %p79 = scmp.eq.s32.totalorder %s37, 2
      %p80 = por %p78, %p79
      %p81 = scmp.ne.s32.totalorder %s73, %s76
      %p82 = scmp.eq.s32.totalorder %s37, 0
      %p83 = por %p81, %p82
      %p84 = scmp.ne.s32.totalorder %s73, %s76
      %p85 = scmp.eq.s32.totalorder %s42, 2
      %p86 = por %p84, %p85
      %p87 = scmp.ne.s32.totalorder %s76, %s77
      %p88 = scmp.eq.s32.totalorder %s42, 0
      %p89 = por %p87, %p88
      %p90 = scmp.ne.s32.totalorder %s76, %s77
      %p91 = scmp.eq.s32.totalorder %s43, 2
      %p92 = por %p90, %p91
      %p94 = scmp.ne.s32.totalorder %s77, %s93
      %p95 = scmp.eq.s32.totalorder %s43, 0
      %p96 = por %p94, %p95
      %s97 = ssub.s32 %s37, %s44
      %p98 = scmp.eq.s32.totalorder %s97, 0
      %s100 = sadd.s32 %s99, 1
      %s101 = scalar_select %p98, %s99, %s100
      %p104 = pneg %p98
      %p105 = scmp.eq.s32.totalorder %s37, 2
      %p106 = por %p104, %p105
      %p107 = scmp.ne.s32.totalorder %s99, %s102
      %p108 = scmp.eq.s32.totalorder %s37, 0
      %p109 = por %p107, %p108
      %p110 = scmp.ne.s32.totalorder %s99, %s102
      %p111 = scmp.eq.s32.totalorder %s42, 2
      %p112 = por %p110, %p111
      %p113 = scmp.ne.s32.totalorder %s102, %s103
      %p114 = scmp.eq.s32.totalorder %s42, 0
      %p115 = por %p113, %p114
      %p116 = scmp.ne.s32.totalorder %s102, %s103
      %p117 = scmp.eq.s32.totalorder %s43, 2
      %p118 = por %p116, %p117
      %p120 = scmp.ne.s32.totalorder %s103, %s119
      %p121 = scmp.eq.s32.totalorder %s43, 0
      %p122 = por %p120, %p121
      %s123 = ssub.s32 %s37, %s44
      %p124 = scmp.eq.s32.totalorder %s123, 0
      %s126 = sadd.s32 %s125, 1
      %s127 = scalar_select %p124, %s125, %s126
      %p130 = pneg %p124
      %p131 = scmp.eq.s32.totalorder %s37, 2
      %p132 = por %p130, %p131
      %p133 = scmp.ne.s32.totalorder %s125, %s128
      %p134 = scmp.eq.s32.totalorder %s37, 0
      %p135 = por %p133, %p134
      %p136 = scmp.ne.s32.totalorder %s125, %s128
      %p137 = scmp.eq.s32.totalorder %s42, 2
      %p138 = por %p136, %p137
      %p139 = scmp.ne.s32.totalorder %s128, %s129
      %p140 = scmp.eq.s32.totalorder %s42, 0
      %p141 = por %p139, %p140
      %p142 = scmp.ne.s32.totalorder %s128, %s129
      %p143 = scmp.eq.s32.totalorder %s43, 2
      %p144 = por %p142, %p143
      %p146 = scmp.ne.s32.totalorder %s129, %s145
      %p147 = scmp.eq.s32.totalorder %s43, 0
      %p148 = por %p146, %p147
      %s149 = ssub.s32 %s37, %s44
      %p150 = scmp.eq.s32.totalorder %s149, 0
      %s152 = sadd.s32 %s151, 1
      %s153 = scalar_select %p150, %s151, %s152
      %p156 = pneg %p150
      %p157 = scmp.eq.s32.totalorder %s37, 2
      %p158 = por %p156, %p157
      %p159 = scmp.ne.s32.totalorder %s151, %s154
      %p160 = scmp.eq.s32.totalorder %s37, 0
      %p161 = por %p159, %p160
      %p162 = scmp.ne.s32.totalorder %s151, %s154
      %p163 = scmp.eq.s32.totalorder %s42, 2
      %p164 = por %p162, %p163
      %p165 = scmp.ne.s32.totalorder %s154, %s155
      %p166 = scmp.eq.s32.totalorder %s42, 0
      %p167 = por %p165, %p166
      %p168 = scmp.ne.s32.totalorder %s154, %s155
      %p169 = scmp.eq.s32.totalorder %s43, 2
      %p170 = por %p168, %p169
      %p172 = scmp.ne.s32.totalorder %s155, %s171
      %p173 = scmp.eq.s32.totalorder %s43, 0
      %p174 = por %p172, %p173
      %s175 = ssub.s32 %s37, %s44
      %p176 = scmp.eq.s32.totalorder %s175, 0
      %s178 = sadd.s32 %s177, 1
      %s179 = scalar_select %p176, %s177, %s178
      %p182 = pneg %p176
      %p183 = scmp.eq.s32.totalorder %s37, 2
      %p184 = por %p182, %p183
      %p185 = scmp.ne.s32.totalorder %s177, %s180
      %p186 = scmp.eq.s32.totalorder %s37, 0
      %p187 = por %p185, %p186
      %p188 = scmp.ne.s32.totalorder %s177, %s180
      %p189 = scmp.eq.s32.totalorder %s42, 2
      %p190 = por %p188, %p189
      %p191 = scmp.ne.s32.totalorder %s180, %s181
      %p192 = scmp.eq.s32.totalorder %s42, 0
      %p193 = por %p191, %p192
      %p194 = scmp.ne.s32.totalorder %s180, %s181
      %p195 = scmp.eq.s32.totalorder %s43, 2
      %p196 = por %p194, %p195
      %p198 = scmp.ne.s32.totalorder %s181, %s197
      %p199 = scmp.eq.s32.totalorder %s43, 0
      %p200 = por %p198, %p199
      %s201 = ssub.s32 %s37, %s44
      %p202 = scmp.eq.s32.totalorder %s201, 0
      %s204 = sadd.s32 %s203, 1
      %s205 = scalar_select %p202, %s203, %s204
      %p208 = pneg %p202
      %p209 = scmp.eq.s32.totalorder %s37, 2
      %p210 = por %p208, %p209
      %p211 = scmp.ne.s32.totalorder %s203, %s206
      %p212 = scmp.eq.s32.totalorder %s37, 0
      %p213 = por %p211, %p212
      %p214 = scmp.ne.s32.totalorder %s203, %s206
      %p215 = scmp.eq.s32.totalorder %s42, 2
      %p216 = por %p214, %p215
      %p217 = scmp.ne.s32.totalorder %s206, %s207
      %p218 = scmp.eq.s32.totalorder %s42, 0
      %p219 = por %p217, %p218
      %p220 = scmp.ne.s32.totalorder %s206, %s207
      %p221 = scmp.eq.s32.totalorder %s43, 2
      %p222 = por %p220, %p221
      %p224 = scmp.ne.s32.totalorder %s207, %s223
      %p225 = scmp.eq.s32.totalorder %s43, 0
      %p226 = por %p224, %p225
      %s227 = ssub.s32 %s37, %s44
      %p228 = scmp.eq.s32.totalorder %s227, 0
      %s230 = sadd.s32 %s229, 1
      %s231 = scalar_select %p228, %s229, %s230
      %p234 = pneg %p228
      %p235 = scmp.eq.s32.totalorder %s37, 2
      %p236 = por %p234, %p235
      %p237 = scmp.ne.s32.totalorder %s229, %s232
      %p238 = scmp.eq.s32.totalorder %s37, 0
      %p239 = por %p237, %p238
      %p240 = scmp.ne.s32.totalorder %s229, %s232
      %p241 = scmp.eq.s32.totalorder %s42, 2
      %p242 = por %p240, %p241
      %p243 = scmp.ne.s32.totalorder %s232, %s233
      %p244 = scmp.eq.s32.totalorder %s42, 0
      %p245 = por %p243, %p244
      %p246 = scmp.ne.s32.totalorder %s232, %s233
      %p247 = scmp.eq.s32.totalorder %s43, 2
      %p248 = por %p246, %p247
      %p250 = scmp.ne.s32.totalorder %s233, %s249
      %p251 = scmp.eq.s32.totalorder %s43, 0
      %p252 = por %p250, %p251
      %s253 = ssub.s32 %s37, %s44
      %p254 = scmp.eq.s32.totalorder %s253, 0
      %s256 = sadd.s32 %s255, 1
      %s257 = scalar_select %p254, %s255, %s256
      %p260 = pneg %p254
      %p261 = scmp.eq.s32.totalorder %s37, 2
      %p262 = por %p260, %p261
      %p263 = scmp.ne.s32.totalorder %s255, %s258
      %p264 = scmp.eq.s32.totalorder %s37, 0
      %p265 = por %p263, %p264
      %p266 = scmp.ne.s32.totalorder %s255, %s258
      %p267 = scmp.eq.s32.totalorder %s42, 2
      %p268 = por %p266, %p267
      %p269 = scmp.ne.s32.totalorder %s258, %s259
      %p270 = scmp.eq.s32.totalorder %s42, 0
      %p271 = por %p269, %p270
      %p272 = scmp.ne.s32.totalorder %s258, %s259
      %p273 = scmp.eq.s32.totalorder %s43, 2
      %p274 = por %p272, %p273
      %p276 = scmp.ne.s32.totalorder %s259, %s275
      %p277 = scmp.eq.s32.totalorder %s43, 0
      %p278 = por %p276, %p277
      %s280 = sadd.s32 %s279, 1
      %p283 = scmp.eq.s32.totalorder %s37, 2
      %p284 = scmp.ne.s32.totalorder %s279, %s281
      %p285 = scmp.eq.s32.totalorder %s37, 0
      %p286 = por %p284, %p285
      %p287 = scmp.ne.s32.totalorder %s279, %s281
      %p288 = scmp.eq.s32.totalorder %s42, 2
      %p289 = por %p287, %p288
      %p290 = scmp.ne.s32.totalorder %s281, %s282
      %p291 = scmp.eq.s32.totalorder %s42, 0
      %p292 = por %p290, %p291
      %p293 = scmp.ne.s32.totalorder %s281, %s282
      %p294 = scmp.eq.s32.totalorder %s43, 2
      %p295 = por %p293, %p294
      %p297 = scmp.ne.s32.totalorder %s282, %s296
      %p298 = scmp.eq.s32.totalorder %s43, 0
      %p299 = por %p297, %p298
      %s301 = sadd.s32 %s300, 1
      %p304 = scmp.eq.s32.totalorder %s37, 2
      %p305 = scmp.ne.s32.totalorder %s300, %s302
      %p306 = scmp.eq.s32.totalorder %s37, 0
      %p307 = por %p305, %p306
      %p308 = scmp.ne.s32.totalorder %s300, %s302
      %p309 = scmp.eq.s32.totalorder %s42, 2
      %p310 = por %p308, %p309
      %p311 = scmp.ne.s32.totalorder %s302, %s303
      %p312 = scmp.eq.s32.totalorder %s42, 0
      %p313 = por %p311, %p312
      %p314 = scmp.ne.s32.totalorder %s302, %s303
      %p315 = scmp.eq.s32.totalorder %s43, 2
      %p316 = por %p314, %p315
      %p318 = scmp.ne.s32.totalorder %s303, %s317
      %p319 = scmp.eq.s32.totalorder %s43, 0
      %p320 = por %p318, %p319
      %s322 = sadd.s32 %s321, 1
      %p325 = scmp.eq.s32.totalorder %s37, 2
      %p326 = scmp.ne.s32.totalorder %s321, %s323
      %p327 = scmp.eq.s32.totalorder %s37, 0
      %p328 = por %p326, %p327
      %p329 = scmp.ne.s32.totalorder %s321, %s323
      %p330 = scmp.eq.s32.totalorder %s42, 2
      %p331 = por %p329, %p330
      %p332 = scmp.ne.s32.totalorder %s323, %s324
      %p333 = scmp.eq.s32.totalorder %s42, 0
      %p334 = por %p332, %p333
      %p335 = scmp.ne.s32.totalorder %s323, %s324
      %p336 = scmp.eq.s32.totalorder %s43, 2
      %p337 = por %p335, %p336
      %p339 = scmp.ne.s32.totalorder %s324, %s338
      %p340 = scmp.eq.s32.totalorder %s43, 0
      %p341 = por %p339, %p340
      %s343 = sadd.s32 %s342, 1
      %p346 = scmp.eq.s32.totalorder %s37, 2
      %p347 = scmp.ne.s32.totalorder %s342, %s344
      %p348 = scmp.eq.s32.totalorder %s37, 0
      %p349 = por %p347, %p348
      %p350 = scmp.ne.s32.totalorder %s342, %s344
      %p351 = scmp.eq.s32.totalorder %s42, 2
      %p352 = por %p350, %p351
      %p353 = scmp.ne.s32.totalorder %s344, %s345
      %p354 = scmp.eq.s32.totalorder %s42, 0
      %p355 = por %p353, %p354
      %p356 = scmp.ne.s32.totalorder %s344, %s345
      %p357 = scmp.eq.s32.totalorder %s43, 2
      %p358 = por %p356, %p357
      %p360 = scmp.ne.s32.totalorder %s345, %s359
      %p361 = scmp.eq.s32.totalorder %s43, 0
      %p362 = por %p360, %p361
      %s364 = sadd.s32 %s363, 1
      %p367 = scmp.eq.s32.totalorder %s37, 2
      %p368 = scmp.ne.s32.totalorder %s363, %s365
      %p369 = scmp.eq.s32.totalorder %s37, 0
      %p370 = por %p368, %p369
      %p371 = scmp.ne.s32.totalorder %s363, %s365
      %p372 = scmp.eq.s32.totalorder %s42, 2
      %p373 = por %p371, %p372
      %p374 = scmp.ne.s32.totalorder %s365, %s366
      %p375 = scmp.eq.s32.totalorder %s42, 0
      %p376 = por %p374, %p375
      %p377 = scmp.ne.s32.totalorder %s365, %s366
      %p378 = scmp.eq.s32.totalorder %s43, 2
      %p379 = por %p377, %p378
      %p381 = scmp.ne.s32.totalorder %s366, %s380
      %p382 = scmp.eq.s32.totalorder %s43, 0
      %p383 = por %p381, %p382
      %s385 = sadd.s32 %s384, 1
      %p388 = scmp.eq.s32.totalorder %s37, 2
      %p389 = scmp.ne.s32.totalorder %s384, %s386
      %p390 = scmp.eq.s32.totalorder %s37, 0
      %p391 = por %p389, %p390
      %p392 = scmp.ne.s32.totalorder %s384, %s386
      %p393 = scmp.eq.s32.totalorder %s42, 2
      %p394 = por %p392, %p393
      %p395 = scmp.ne.s32.totalorder %s386, %s387
      %p396 = scmp.eq.s32.totalorder %s42, 0
      %p397 = por %p395, %p396
      %p398 = scmp.ne.s32.totalorder %s386, %s387
      %p399 = scmp.eq.s32.totalorder %s43, 2
      %p400 = por %p398, %p399
      %p402 = scmp.ne.s32.totalorder %s387, %s401
      %p403 = scmp.eq.s32.totalorder %s43, 0
      %p404 = por %p402, %p403
      %s406 = sadd.s32 %s405, 1
      %p409 = scmp.eq.s32.totalorder %s37, 2
      %p410 = scmp.ne.s32.totalorder %s405, %s407
      %p411 = scmp.eq.s32.totalorder %s37, 0
      %p412 = por %p410, %p411
      %p413 = scmp.ne.s32.totalorder %s405, %s407
      %p414 = scmp.eq.s32.totalorder %s42, 2
      %p415 = por %p413, %p414
      %p416 = scmp.ne.s32.totalorder %s407, %s408
      %p417 = scmp.eq.s32.totalorder %s42, 0
      %p418 = por %p416, %p417
      %p419 = scmp.ne.s32.totalorder %s407, %s408
      %p420 = scmp.eq.s32.totalorder %s43, 2
      %p421 = por %p419, %p420
      %p423 = scmp.ne.s32.totalorder %s408, %s422
      %p424 = scmp.eq.s32.totalorder %s43, 0
      %p425 = por %p423, %p424
      %s427 = sadd.s32 %s426, 1
      %p430 = scmp.eq.s32.totalorder %s37, 2
      %p431 = scmp.ne.s32.totalorder %s426, %s428
      %p432 = scmp.eq.s32.totalorder %s37, 0
      %p433 = por %p431, %p432
      %p434 = scmp.ne.s32.totalorder %s426, %s428
      %p435 = scmp.eq.s32.totalorder %s42, 2
      %p436 = por %p434, %p435
      %p437 = scmp.ne.s32.totalorder %s428, %s429
      %p438 = scmp.eq.s32.totalorder %s42, 0
      %p439 = por %p437, %p438
      %p440 = scmp.ne.s32.totalorder %s428, %s429
      %p441 = scmp.eq.s32.totalorder %s43, 2
      %p442 = por %p440, %p441
      %p444 = scmp.ne.s32.totalorder %s429, %s443
      %p445 = scmp.eq.s32.totalorder %s43, 0
      %p446 = por %p444, %p445
      %s448 = sadd.s32 %s447, 1
      %p451 = scmp.eq.s32.totalorder %s37, 2
      %p452 = scmp.ne.s32.totalorder %s447, %s449
      %p453 = scmp.eq.s32.totalorder %s37, 0
      %p454 = por %p452, %p453
      %p455 = scmp.ne.s32.totalorder %s447, %s449
      %p456 = scmp.eq.s32.totalorder %s42, 2
      %p457 = por %p455, %p456
      %p458 = scmp.ne.s32.totalorder %s449, %s450
      %p459 = scmp.eq.s32.totalorder %s42, 0
      %p460 = por %p458, %p459
      %p461 = scmp.ne.s32.totalorder %s449, %s450
      %p462 = scmp.eq.s32.totalorder %s43, 2
      %p463 = por %p461, %p462
      %p465 = scmp.ne.s32.totalorder %s450, %s464
      %p466 = scmp.eq.s32.totalorder %s43, 0
      %p467 = por %p465, %p466
      %s469 = sadd.s32 %s468, 1
      %p472 = scmp.eq.s32.totalorder %s37, 2
      %p473 = scmp.ne.s32.totalorder %s468, %s470
      %p474 = scmp.eq.s32.totalorder %s37, 0
      %p475 = por %p473, %p474
      %p476 = scmp.ne.s32.totalorder %s468, %s470
      %p477 = scmp.eq.s32.totalorder %s42, 2
      %p478 = por %p476, %p477
      %p479 = scmp.ne.s32.totalorder %s470, %s471
      %p480 = scmp.eq.s32.totalorder %s42, 0
      %p481 = por %p479, %p480
      %p482 = scmp.ne.s32.totalorder %s470, %s471
      %p483 = scmp.eq.s32.totalorder %s43, 2
      %p484 = por %p482, %p483
      %p486 = scmp.ne.s32.totalorder %s471, %s485
      %p487 = scmp.eq.s32.totalorder %s43, 0
      %p488 = por %p486, %p487
      %s490 = sadd.s32 %s489, 1
      %p493 = scmp.eq.s32.totalorder %s37, 2
      %p494 = scmp.ne.s32.totalorder %s489, %s491
      %p495 = scmp.eq.s32.totalorder %s37, 0
      %p496 = por %p494, %p495
      %p497 = scmp.ne.s32.totalorder %s489, %s491
      %p498 = scmp.eq.s32.totalorder %s42, 2
      %p499 = por %p497, %p498
      %p500 = scmp.ne.s32.totalorder %s491, %s492
      %p501 = scmp.eq.s32.totalorder %s42, 0
      %p502 = por %p500, %p501
      %p503 = scmp.ne.s32.totalorder %s491, %s492
      %p504 = scmp.eq.s32.totalorder %s43, 2
      %p505 = por %p503, %p504
      %p507 = scmp.ne.s32.totalorder %s492, %s506
      %p508 = scmp.eq.s32.totalorder %s43, 0
      %p509 = por %p507, %p508
      %s511 = sadd.s32 %s510, 1
      %p514 = scmp.eq.s32.totalorder %s37, 2
      %p515 = scmp.ne.s32.totalorder %s510, %s512
      %p516 = scmp.eq.s32.totalorder %s37, 0
      %p517 = por %p515, %p516
      %p518 = scmp.ne.s32.totalorder %s510, %s512
      %p519 = scmp.eq.s32.totalorder %s42, 2
      %p520 = por %p518, %p519
      %p521 = scmp.ne.s32.totalorder %s512, %s513
      %p522 = scmp.eq.s32.totalorder %s42, 0
      %p523 = por %p521, %p522
      %p524 = scmp.ne.s32.totalorder %s512, %s513
      %p525 = scmp.eq.s32.totalorder %s43, 2
      %p526 = por %p524, %p525
      %p528 = scmp.ne.s32.totalorder %s513, %s527
      %p529 = scmp.eq.s32.totalorder %s43, 0
      %p530 = por %p528, %p529
      %s532 = sadd.s32 %s531, 1
      %p535 = scmp.eq.s32.totalorder %s37, 2
      %p536 = scmp.ne.s32.totalorder %s531, %s533
      %p537 = scmp.eq.s32.totalorder %s37, 0
      %p538 = por %p536, %p537
      %p539 = scmp.ne.s32.totalorder %s531, %s533
      %p540 = scmp.eq.s32.totalorder %s42, 2
      %p541 = por %p539, %p540
      %p542 = scmp.ne.s32.totalorder %s533, %s534
      %p543 = scmp.eq.s32.totalorder %s42, 0
      %p544 = por %p542, %p543
      %p545 = scmp.ne.s32.totalorder %s533, %s534
      %p546 = scmp.eq.s32.totalorder %s43, 2
      %p547 = por %p545, %p546
      %p549 = scmp.ne.s32.totalorder %s534, %s548
      %p550 = scmp.eq.s32.totalorder %s43, 0
      %p551 = por %p549, %p550
      %s553 = sadd.s32 %s552, 1
      %p556 = scmp.eq.s32.totalorder %s37, 2
      %p557 = scmp.ne.s32.totalorder %s552, %s554
      %p558 = scmp.eq.s32.totalorder %s37, 0
      %p559 = por %p557, %p558
      %p560 = scmp.ne.s32.totalorder %s552, %s554
      %p561 = scmp.eq.s32.totalorder %s42, 2
      %p562 = por %p560, %p561
      %p563 = scmp.ne.s32.totalorder %s554, %s555
      %p564 = scmp.eq.s32.totalorder %s42, 0
      %p565 = por %p563, %p564
      %p566 = scmp.ne.s32.totalorder %s554, %s555
      %p567 = scmp.eq.s32.totalorder %s43, 2
      %p568 = por %p566, %p567
      %p570 = scmp.ne.s32.totalorder %s555, %s569
      %p571 = scmp.eq.s32.totalorder %s43, 0
      %p572 = por %p570, %p571
      %s573 = ssub.s32 %s37, %s44
      %p574 = scmp.eq.s32.totalorder %s573, 0
      %s576 = sadd.s32 %s575, 1
      %s577 = scalar_select %p574, %s575, %s576
      %p580 = pneg %p574
      %p581 = scmp.eq.s32.totalorder %s37, 2
      %p582 = por %p580, %p581
      %p583 = scmp.ne.s32.totalorder %s575, %s578
      %p584 = scmp.eq.s32.totalorder %s37, 0
      %p585 = por %p583, %p584
      %p586 = scmp.ne.s32.totalorder %s575, %s578
      %p587 = scmp.eq.s32.totalorder %s42, 2
      %p588 = por %p586, %p587
      %p589 = scmp.ne.s32.totalorder %s578, %s579
      %p590 = scmp.eq.s32.totalorder %s42, 0
      %p591 = por %p589, %p590
      %p592 = scmp.ne.s32.totalorder %s578, %s579
      %p593 = scmp.eq.s32.totalorder %s43, 2
      %p594 = por %p592, %p593
      %p596 = scmp.ne.s32.totalorder %s579, %s595
      %p597 = scmp.eq.s32.totalorder %s43, 0
      %p598 = por %p596, %p597
      %s599 = ssub.s32 %s37, %s44
      %p600 = scmp.eq.s32.totalorder %s599, 0
      %s602 = sadd.s32 %s601, 1
      %s603 = scalar_select %p600, %s601, %s602
      %p606 = pneg %p600
      %p607 = scmp.eq.s32.totalorder %s37, 2
      %p608 = por %p606, %p607
      %p609 = scmp.ne.s32.totalorder %s601, %s604
      %p610 = scmp.eq.s32.totalorder %s37, 0
      %p611 = por %p609, %p610
      %p612 = scmp.ne.s32.totalorder %s601, %s604
      %p613 = scmp.eq.s32.totalorder %s42, 2
      %p614 = por %p612, %p613
      %p615 = scmp.ne.s32.totalorder %s604, %s605
      %p616 = scmp.eq.s32.totalorder %s42, 0
      %p617 = por %p615, %p616
      %p618 = scmp.ne.s32.totalorder %s604, %s605
      %p619 = scmp.eq.s32.totalorder %s43, 2
      %p620 = por %p618, %p619
      %p622 = scmp.ne.s32.totalorder %s605, %s621
      %p623 = scmp.eq.s32.totalorder %s43, 0
      %p624 = por %p622, %p623
      %p625 = scmp.le.s32.totalorder 1, %s37
      %p626 = scmp.lt.s32.totalorder %s37, 4
      %p627 = pnand %p625, %p626
      %p628 = pneg %p627
      // Predicated region
      $region9: #{tpu_custom_call.1} parent=5 // pred_check
        _
      $region10: #{tpu_custom_call.1} parent=5 // pred_check_branch
        %630 = sbr.rel (%p627) target = $region12
      $region11: #{tpu_custom_call.1} parent=5 // pred_region
        %s631 = ssub.s32 %s37, 1
        // Predicated region
        $region13: #{tpu_custom_call.1} parent=11 // pred_check
          %p632 = pneg %p292
        $region14: #{tpu_custom_call.1} parent=11 // pred_check_branch
          %634 = sbr.rel (%p632) target = $region16
        $region15: #{tpu_custom_call.1} parent=11 // pred_region
          _
        $region16: #{tpu_custom_call.1} parent=11 // pred_fallthru
          _
        // Predicated region
        $region17: #{tpu_custom_call.1} parent=11 // pred_check
          %p635 = pneg %p313
        $region18: #{tpu_custom_call.1} parent=11 // pred_check_branch
          %637 = sbr.rel (%p635) target = $region20
        $region19: #{tpu_custom_call.1} parent=11 // pred_region
          _
        $region20: #{tpu_custom_call.1} parent=11 // pred_fallthru
          _
        // Predicated region
        $region21: #{tpu_custom_call.1} parent=11 // pred_check
          %p638 = pneg %p334
        $region22: #{tpu_custom_call.1} parent=11 // pred_check_branch
          %640 = sbr.rel (%p638) target = $region24
        $region23: #{tpu_custom_call.1} parent=11 // pred_region
          _
        $region24: #{tpu_custom_call.1} parent=11 // pred_fallthru
          _
        // Predicated region
        $region25: #{tpu_custom_call.1} parent=11 // pred_check
          %p641 = pneg %p355
        $region26: #{tpu_custom_call.1} parent=11 // pred_check_branch
          %643 = sbr.rel (%p641) target = $region28
        $region27: #{tpu_custom_call.1} parent=11 // pred_region
          _
        $region28: #{tpu_custom_call.1} parent=11 // pred_fallthru
          _
        // Predicated region
        $region29: #{tpu_custom_call.1} parent=11 // pred_check
          %p644 = pneg %p376
        $region30: #{tpu_custom_call.1} parent=11 // pred_check_branch
          %646 = sbr.rel (%p644) target = $region32
        $region31: #{tpu_custom_call.1} parent=11 // pred_region
          _
        $region32: #{tpu_custom_call.1} parent=11 // pred_fallthru
          _
        // Predicated region
        $region33: #{tpu_custom_call.1} parent=11 // pred_check
          %p647 = pneg %p397
        $region34: #{tpu_custom_call.1} parent=11 // pred_check_branch
          %649 = sbr.rel (%p647) target = $region36
        $region35: #{tpu_custom_call.1} parent=11 // pred_region
          _
        $region36: #{tpu_custom_call.1} parent=11 // pred_fallthru
          _
        // Predicated region
        $region37: #{tpu_custom_call.1} parent=11 // pred_check
          %p650 = pneg %p418
        $region38: #{tpu_custom_call.1} parent=11 // pred_check_branch
          %652 = sbr.rel (%p650) target = $region40
        $region39: #{tpu_custom_call.1} parent=11 // pred_region
          _
        $region40: #{tpu_custom_call.1} parent=11 // pred_fallthru
          _
        // Predicated region
        $region41: #{tpu_custom_call.1} parent=11 // pred_check
          %p653 = pneg %p439
        $region42: #{tpu_custom_call.1} parent=11 // pred_check_branch
          %655 = sbr.rel (%p653) target = $region44
        $region43: #{tpu_custom_call.1} parent=11 // pred_region
          _
        $region44: #{tpu_custom_call.1} parent=11 // pred_fallthru
          _
        // Predicated region
        $region45: #{tpu_custom_call.1} parent=11 // pred_check
          %p656 = pneg %p460
        $region46: #{tpu_custom_call.1} parent=11 // pred_check_branch
          %658 = sbr.rel (%p656) target = $region48
        $region47: #{tpu_custom_call.1} parent=11 // pred_region
          _
        $region48: #{tpu_custom_call.1} parent=11 // pred_fallthru
          _
        // Predicated region
        $region49: #{tpu_custom_call.1} parent=11 // pred_check
          %p659 = pneg %p481
        $region50: #{tpu_custom_call.1} parent=11 // pred_check_branch
          %661 = sbr.rel (%p659) target = $region52
        $region51: #{tpu_custom_call.1} parent=11 // pred_region
          _
        $region52: #{tpu_custom_call.1} parent=11 // pred_fallthru
          _
        // Predicated region
        $region53: #{tpu_custom_call.1} parent=11 // pred_check
          %p662 = pneg %p502
        $region54: #{tpu_custom_call.1} parent=11 // pred_check_branch
          %664 = sbr.rel (%p662) target = $region56
        $region55: #{tpu_custom_call.1} parent=11 // pred_region
          _
        $region56: #{tpu_custom_call.1} parent=11 // pred_fallthru
          _
        // Predicated region
        $region57: #{tpu_custom_call.1} parent=11 // pred_check
          %p665 = pneg %p523
        $region58: #{tpu_custom_call.1} parent=11 // pred_check_branch
          %667 = sbr.rel (%p665) target = $region60
        $region59: #{tpu_custom_call.1} parent=11 // pred_region
          _
        $region60: #{tpu_custom_call.1} parent=11 // pred_fallthru
          _
        // Predicated region
        $region61: #{tpu_custom_call.1} parent=11 // pred_check
          %p668 = pneg %p544
        $region62: #{tpu_custom_call.1} parent=11 // pred_check_branch
          %670 = sbr.rel (%p668) target = $region64
        $region63: #{tpu_custom_call.1} parent=11 // pred_region
          _
        $region64: #{tpu_custom_call.1} parent=11 // pred_fallthru
          _
        // Predicated region
        $region65: #{tpu_custom_call.1} parent=11 // pred_check
          %p671 = pneg %p565
        $region66: #{tpu_custom_call.1} parent=11 // pred_check_branch
          %673 = sbr.rel (%p671) target = $region68
        $region67: #{tpu_custom_call.1} parent=11 // pred_region
          _
        $region68: #{tpu_custom_call.1} parent=11 // pred_fallthru
          _
      $region12: #{tpu_custom_call.1} parent=5 // pred_fallthru
        _
      %p674 = scmp.lt.s32.totalorder %s37, 3
      // Predicated region
      $region69: #{tpu_custom_call.1} parent=5 // pred_check
        %p675 = pneg %p674
      $region70: #{tpu_custom_call.1} parent=5 // pred_check_branch
        %677 = sbr.rel (%p675) target = $region72
      $region71: #{tpu_custom_call.1} parent=5 // pred_region
        // Predicated region
        $region73: #{tpu_custom_call.1} parent=71 // pred_check
          %p678 = pneg %p57
        $region74: #{tpu_custom_call.1} parent=71 // pred_check_branch
          %680 = sbr.rel (%p678) target = $region76
        $region75: #{tpu_custom_call.1} parent=71 // pred_region
          %p681 = scmp.lt.s32.totalorder %s37, 2
          %s682 = scalar_select %p681, %s37, 2
          %s683 = smul.addr %s682, 8
          %s684 = scalar_lea.vmem %s0, %s683
        $region76: #{tpu_custom_call.1} parent=71 // pred_fallthru
          _
        // Predicated region
        $region77: #{tpu_custom_call.1} parent=71 // pred_check
          %p685 = pneg %p83
        $region78: #{tpu_custom_call.1} parent=71 // pred_check_branch
          %687 = sbr.rel (%p685) target = $region80
        $region79: #{tpu_custom_call.1} parent=71 // pred_region
          %p688 = scmp.lt.s32.totalorder %s37, 2
          %s689 = scalar_select %p688, %s37, 2
          %s690 = smul.addr %s689, 8
          %s691 = scalar_lea.vmem %s1, %s690
        $region80: #{tpu_custom_call.1} parent=71 // pred_fallthru
          _
        // Predicated region
        $region81: #{tpu_custom_call.1} parent=71 // pred_check
          %p692 = pneg %p109
        $region82: #{tpu_custom_call.1} parent=71 // pred_check_branch
          %694 = sbr.rel (%p692) target = $region84
        $region83: #{tpu_custom_call.1} parent=71 // pred_region
          %p695 = scmp.lt.s32.totalorder %s37, 2
          %s696 = scalar_select %p695, %s37, 2
          %s697 = smul.addr %s696, 8
          %s698 = scalar_lea.vmem %s2, %s697
        $region84: #{tpu_custom_call.1} parent=71 // pred_fallthru
          _
        // Predicated region
        $region85: #{tpu_custom_call.1} parent=71 // pred_check
          %p699 = pneg %p135
        $region86: #{tpu_custom_call.1} parent=71 // pred_check_branch
          %701 = sbr.rel (%p699) target = $region88
        $region87: #{tpu_custom_call.1} parent=71 // pred_region
          %p702 = scmp.lt.s32.totalorder %s37, 2
          %s703 = scalar_select %p702, %s37, 2
          %s704 = smul.addr %s703, 8
          %s705 = scalar_lea.vmem %s3, %s704
        $region88: #{tpu_custom_call.1} parent=71 // pred_fallthru
          _
        // Predicated region
        $region89: #{tpu_custom_call.1} parent=71 // pred_check
          %p706 = pneg %p161
        $region90: #{tpu_custom_call.1} parent=71 // pred_check_branch
          %708 = sbr.rel (%p706) target = $region92
        $region91: #{tpu_custom_call.1} parent=71 // pred_region
          %p709 = scmp.lt.s32.totalorder %s37, 2
          %s710 = scalar_select %p709, %s37, 2
          %s711 = smul.addr %s710, 8
          %s712 = scalar_lea.vmem %s4, %s711
        $region92: #{tpu_custom_call.1} parent=71 // pred_fallthru
          _
        // Predicated region
        $region93: #{tpu_custom_call.1} parent=71 // pred_check
          %p713 = pneg %p187
        $region94: #{tpu_custom_call.1} parent=71 // pred_check_branch
          %715 = sbr.rel (%p713) target = $region96
        $region95: #{tpu_custom_call.1} parent=71 // pred_region
          %p716 = scmp.lt.s32.totalorder %s37, 2
          %s717 = scalar_select %p716, %s37, 2
          %s718 = smul.addr %s717, 8
          %s719 = scalar_lea.vmem %s5, %s718
        $region96: #{tpu_custom_call.1} parent=71 // pred_fallthru
          _
        // Predicated region
        $region97: #{tpu_custom_call.1} parent=71 // pred_check
          %p720 = pneg %p213
        $region98: #{tpu_custom_call.1} parent=71 // pred_check_branch
          %722 = sbr.rel (%p720) target = $region100
        $region99: #{tpu_custom_call.1} parent=71 // pred_region
          %p723 = scmp.lt.s32.totalorder %s37, 2
          %s724 = scalar_select %p723, %s37, 2
          %s725 = smul.addr %s724, 8
          %s726 = scalar_lea.vmem %s6, %s725
        $region100: #{tpu_custom_call.1} parent=71 // pred_fallthru
          _
        // Predicated region
        $region101: #{tpu_custom_call.1} parent=71 // pred_check
          %p727 = pneg %p239
        $region102: #{tpu_custom_call.1} parent=71 // pred_check_branch
          %729 = sbr.rel (%p727) target = $region104
        $region103: #{tpu_custom_call.1} parent=71 // pred_region
          %p730 = scmp.lt.s32.totalorder %s37, 2
          %s731 = scalar_select %p730, %s37, 2
          %s732 = smul.addr %s731, 8
          %s733 = scalar_lea.vmem %s7, %s732
        $region104: #{tpu_custom_call.1} parent=71 // pred_fallthru
          _
        // Predicated region
        $region105: #{tpu_custom_call.1} parent=71 // pred_check
          %p734 = pneg %p265
        $region106: #{tpu_custom_call.1} parent=71 // pred_check_branch
          %736 = sbr.rel (%p734) target = $region108
        $region107: #{tpu_custom_call.1} parent=71 // pred_region
          %p737 = scmp.lt.s32.totalorder %s37, 2
          %s738 = scalar_select %p737, %s37, 2
          %s739 = smul.addr %s738, 8
          %s740 = scalar_lea.vmem %s8, %s739
        $region108: #{tpu_custom_call.1} parent=71 // pred_fallthru
          _
      $region72: #{tpu_custom_call.1} parent=5 // pred_fallthru
        _
      %p741 = scmp.le.s32.totalorder 1, %s37
      %p742 = scmp.lt.s32.totalorder %s37, 4
      %p743 = pnand %p741, %p742
      %p744 = pneg %p743
      // Predicated region
      $region109: #{tpu_custom_call.1} parent=5 // pred_check
        _
      $region110: #{tpu_custom_call.1} parent=5 // pred_check_branch
        %746 = sbr.rel (%p743) target = $region112
      $region111: #{tpu_custom_call.1} parent=5 // pred_region
        %s747 = ssub.s32 %s37, 1
        %p748 = scmp.lt.s32.totalorder %s42, 2
        %s749 = scalar_select %p748, %s42, 2
        %s750 = smul.addr %s749, 8
        %s751 = scalar_lea.vmem %s0, %s750
        %p752 = pneg %p63
        %p753 = pneg %p60
        %p754 = scmp.lt.s32.totalorder %s42, 2
        %s755 = scalar_select %p754, %s42, 2
        %s756 = smul.addr %s755, 8
        %s757 = scalar_lea.vmem %s1, %s756
        %p758 = pneg %p89
        %p759 = pneg %p86
        %p760 = scmp.lt.s32.totalorder %s42, 2
        %s761 = scalar_select %p760, %s42, 2
        %s762 = smul.addr %s761, 8
        %s763 = scalar_lea.vmem %s2, %s762
        %p764 = pneg %p115
        %p765 = pneg %p112
        %p766 = scmp.lt.s32.totalorder %s42, 2
        %s767 = scalar_select %p766, %s42, 2
        %s768 = smul.addr %s767, 8
        %s769 = scalar_lea.vmem %s3, %s768
        %p770 = pneg %p141
        %p771 = pneg %p138
        %p772 = scmp.lt.s32.totalorder %s42, 2
        %s773 = scalar_select %p772, %s42, 2
        %s774 = smul.addr %s773, 8
        %s775 = scalar_lea.vmem %s4, %s774
        %p776 = pneg %p167
        %p777 = pneg %p164
        %p778 = scmp.lt.s32.totalorder %s42, 2
        %s779 = scalar_select %p778, %s42, 2
        %s780 = smul.addr %s779, 8
        %s781 = scalar_lea.vmem %s5, %s780
        %p782 = pneg %p193
        %p783 = pneg %p190
        %p784 = scmp.lt.s32.totalorder %s42, 2
        %s785 = scalar_select %p784, %s42, 2
        %s786 = smul.addr %s785, 8
        %s787 = scalar_lea.vmem %s6, %s786
        %p788 = pneg %p219
        %p789 = pneg %p216
        %p790 = scmp.lt.s32.totalorder %s42, 2
        %s791 = scalar_select %p790, %s42, 2
        %s792 = smul.addr %s791, 8
        %s793 = scalar_lea.vmem %s7, %s792
        %p794 = pneg %p245
        %p795 = pneg %p242
        %p796 = scmp.lt.s32.totalorder %s42, 2
        %s797 = scalar_select %p796, %s42, 2
        %s798 = smul.addr %s797, 8
        %s799 = scalar_lea.vmem %s8, %s798
        %p800 = pneg %p271
        %p801 = pneg %p268
        %p802 = pneg %p292
        %p803 = pneg %p289
        %p804 = pneg %p313
        %p805 = pneg %p310
        %p806 = pneg %p334
        %p807 = pneg %p331
        %p808 = pneg %p355
        %p809 = pneg %p352
        %p810 = pneg %p376
        %p811 = pneg %p373
        %p812 = pneg %p397
        %p813 = pneg %p394
        %p814 = pneg %p418
        %p815 = pneg %p415
        %p816 = pneg %p439
        %p817 = pneg %p436
        %p818 = pneg %p460
        %p819 = pneg %p457
        %p820 = pneg %p481
        %p821 = pneg %p478
        %p822 = pneg %p502
        %p823 = pneg %p499
        %p824 = pneg %p523
        %p825 = pneg %p520
        %p826 = pneg %p544
        %p827 = pneg %p541
        %p828 = pneg %p565
        %p829 = pneg %p562
        %p830 = pneg %p591
        %p831 = pneg %p588
        %s832 = sand.u32 %s578, 1
        %s833 = scalar_lea.sflag [#allocation3], %s832
        %s834 = sand.u32 %s578, 1
        %s835 = smul.addr %s834, 24
        %s836 = scalar_lea.vmem [#allocation2], %s835
        %p837 = pneg %p617
        %p838 = pneg %p614
        %s839 = sand.u32 %s604, 1
        %s840 = scalar_lea.sflag [#allocation5], %s839
        %s841 = sand.u32 %s604, 1
        %s842 = smul.addr %s841, 8
        %s843 = scalar_lea.vmem [#allocation4], %s842
        %p844 = scmp.lt.s32.totalorder %s42, 2
        %s845 = scalar_select %p844, %s42, 2
        %s846 = smul.addr %s845, 8
        %s847 = scalar_lea.vmem %s0, %s846
        %p848 = scmp.lt.s32.totalorder %s42, 2
        %s849 = scalar_select %p848, %s42, 2
        %s850 = smul.addr %s849, 8
        %s851 = scalar_lea.vmem %s1, %s850
        %p852 = scmp.lt.s32.totalorder %s42, 2
        %s853 = scalar_select %p852, %s42, 2
        %s854 = smul.addr %s853, 8
        %s855 = scalar_lea.vmem %s2, %s854
        %p856 = scmp.lt.s32.totalorder %s42, 2
        %s857 = scalar_select %p856, %s42, 2
        %s858 = smul.addr %s857, 8
        %s859 = scalar_lea.vmem %s3, %s858
        %p860 = scmp.lt.s32.totalorder %s42, 2
        %s861 = scalar_select %p860, %s42, 2
        %s862 = smul.addr %s861, 8
        %s863 = scalar_lea.vmem %s4, %s862
        %p864 = scmp.lt.s32.totalorder %s42, 2
        %s865 = scalar_select %p864, %s42, 2
        %s866 = smul.addr %s865, 8
        %s867 = scalar_lea.vmem %s5, %s866
        %p868 = scmp.lt.s32.totalorder %s42, 2
        %s869 = scalar_select %p868, %s42, 2
        %s870 = smul.addr %s869, 8
        %s871 = scalar_lea.vmem %s6, %s870
        %p872 = scmp.lt.s32.totalorder %s42, 2
        %s873 = scalar_select %p872, %s42, 2
        %s874 = smul.addr %s873, 8
        %s875 = scalar_lea.vmem %s7, %s874
        %p876 = scmp.lt.s32.totalorder %s42, 2
        %s877 = scalar_select %p876, %s42, 2
        %s878 = smul.addr %s877, 8
        %s879 = scalar_lea.vmem %s8, %s878
        %v880 = vld [vmem:[%s847] sm:$0xff]
        %v881 = vld [vmem:[%s9] sm:$0xff]
        %v882 = vld [vmem:[%s9 + $0x8] sm:$0xff]
        %v883 = vld [vmem:[%s10] sm:$0x1]
        %v885 = vlaneseq
        %v886 = vshrl.u32 %v885, 7
        %v887 = vsub.s32 0, %v886
        %v888 = vrot.slane %v883, %v887
        %vm890 = vcmask 130048
        %v892 = vsel %vm890, %v880, 0
        %894 = vmatprep.subr.mxu0 0.0
        %895 = vmatpush1.msra.mxu0 %v881
        %896 = vmatprep.subr.mxu0 0.0
        %897 = vmatpush1.msra.mxu0 %v882
        %898 = vmatprep.subr.mxu0 0.0
        %899 = vmatpush1.msra.mxu0 0.0
        %900 = vmatprep.subr.mxu0 0.0
        %901 = vmatpush1.msra.mxu0 0.0
        %902 = vmatprep.subr.mxu0 0.0
        %903 = vmatpush1.msra.mxu0 0.0
        %904 = vmatprep.subr.mxu0 0.0
        %905 = vmatpush1.msra.mxu0 0.0
        %906 = vmatprep.subr.mxu0 0.0
        %907 = vmatpush1.msra.mxu0 0.0
        %908 = vmatprep.subr.mxu0 0.0
        %909 = vmatpush1.msra.mxu0 0.0
        %910 = vmatprep.subr.mxu0 0.0
        %911 = vmatpush1.msra.mxu0 0.0
        %912 = vmatprep.subr.mxu0 0.0
        %913 = vmatpush1.msra.mxu0 0.0
        %914 = vmatprep.subr.mxu0 0.0
        %915 = vmatpush1.msra.mxu0 0.0
        %916 = vmatprep.subr.mxu0 0.0
        %917 = vmatpush1.msra.mxu0 0.0
        %918 = vmatprep.subr.mxu0 0.0
        %919 = vmatpush1.msra.mxu0 0.0
        %920 = vmatprep.subr.mxu0 0.0
        %921 = vmatpush1.msra.mxu0 0.0
        %922 = vmatprep.subr.mxu0 0.0
        %923 = vmatpush1.msra.mxu0 0.0
        %924 = vmatprep.subr.mxu0 0.0
        %925 = vmatpush1.msra.mxu0 0.0
        %926 = vmatprep.subr.mxu0 0.0
        %927 = vmatpush1.msra.mxu0 0.0
        %928 = vmatprep.subr.mxu0 0.0
        %929 = vmatpush1.msra.mxu0 0.0
        %930 = vmatprep.subr.mxu0 0.0
        %931 = vmatpush1.msra.mxu0 0.0
        %932 = vmatprep.subr.mxu0 0.0
        %933 = vmatpush1.msra.mxu0 0.0
        %934 = vmatprep.subr.mxu0 0.0
        %935 = vmatpush1.msra.mxu0 0.0
        %936 = vmatprep.subr.mxu0 0.0
        %937 = vmatpush1.msra.mxu0 0.0
        %938 = vmatprep.subr.mxu0 0.0
        %939 = vmatpush1.msra.mxu0 0.0
        %940 = vmatprep.subr.mxu0 0.0
        %941 = vmatpush1.msra.mxu0 0.0
        %942 = vmatprep.subr.mxu0 0.0
        %943 = vmatpush1.msra.mxu0 0.0
        %944 = vmatprep.subr.mxu0 0.0
        %945 = vmatpush1.msra.mxu0 0.0
        %946 = vmatprep.subr.mxu0 0.0
        %947 = vmatpush1.msra.mxu0 0.0
        %948 = vmatprep.subr.mxu0 0.0
        %949 = vmatpush1.msra.mxu0 0.0
        %950 = vmatprep.subr.mxu0 0.0
        %951 = vmatpush1.msra.mxu0 0.0
        %952 = vmatprep.subr.mxu0 0.0
        %953 = vmatpush1.msra.mxu0 0.0
        %954 = vmatprep.subr.mxu0 0.0
        %955 = vmatpush1.msra.mxu0 0.0
        %956 = vmatprep.subr.mxu0 0.0
        %957 = vmatpush1.msra.mxu0 0.0
        %958 = vmatprep.mubr.f32.mxu0 0.0
        %959 = vmatmul.mubr.f32.gmra.mrb[0].mxu0 %v892
        %v960 = vpop.f32.mrb[0].mxu0
        %v961 = vadd.f32 %v888, %v960
        %v962 = vpop.f32.mrb[0].mxu0
        %963 = vdwg.mxu0
        %v964 = vmax.f32 %v961, 0.0
        %v965 = vld [vmem:[%s859] sm:$0xff]
        %v966 = vld [vmem:[%s11] sm:$0xff]
        %v967 = vld [vmem:[%s871] sm:$0xff]
        %v968 = vld [vmem:[%s12] sm:$0xff]
        %vm969 = vcmask 64512
        %v971 = vsel %vm969, %v967, 0
        %973 = vmatprep.subr.mxu0 0.0
        %974 = vmatpush1.msra.mxu0 %v968
        %975 = vmatprep.subr.mxu0 0.0
        %976 = vmatpush1.msra.mxu0 0.0
        %977 = vmatprep.subr.mxu0 0.0
        %978 = vmatpush1.msra.mxu0 0.0
        %979 = vmatprep.subr.mxu0 0.0
        %980 = vmatpush1.msra.mxu0 0.0
        %981 = vmatprep.subr.mxu0 0.0
        %982 = vmatpush1.msra.mxu0 0.0
        %983 = vmatprep.subr.mxu0 0.0
        %984 = vmatpush1.msra.mxu0 0.0
        %985 = vmatprep.subr.mxu0 0.0
        %986 = vmatpush1.msra.mxu0 0.0
        %987 = vmatprep.subr.mxu0 0.0
        %988 = vmatpush1.msra.mxu0 0.0
        %989 = vmatprep.subr.mxu0 0.0
        %990 = vmatpush1.msra.mxu0 0.0
        %991 = vmatprep.subr.mxu0 0.0
        %992 = vmatpush1.msra.mxu0 0.0
        %993 = vmatprep.subr.mxu0 0.0
        %994 = vmatpush1.msra.mxu0 0.0
        %995 = vmatprep.subr.mxu0 0.0
        %996 = vmatpush1.msra.mxu0 0.0
        %997 = vmatprep.subr.mxu0 0.0
        %998 = vmatpush1.msra.mxu0 0.0
        %999 = vmatprep.subr.mxu0 0.0
        %1000 = vmatpush1.msra.mxu0 0.0
        %1001 = vmatprep.subr.mxu0 0.0
        %1002 = vmatpush1.msra.mxu0 0.0
        %1003 = vmatprep.subr.mxu0 0.0
        %1004 = vmatpush1.msra.mxu0 0.0
        %1005 = vmatprep.subr.mxu0 0.0
        %1006 = vmatpush1.msra.mxu0 0.0
        %1007 = vmatprep.subr.mxu0 0.0
        %1008 = vmatpush1.msra.mxu0 0.0
        %1009 = vmatprep.subr.mxu0 0.0
        %1010 = vmatpush1.msra.mxu0 0.0
        %1011 = vmatprep.subr.mxu0 0.0
        %1012 = vmatpush1.msra.mxu0 0.0
        %1013 = vmatprep.subr.mxu0 0.0
        %1014 = vmatpush1.msra.mxu0 0.0
        %1015 = vmatprep.subr.mxu0 0.0
        %1016 = vmatpush1.msra.mxu0 0.0
        %1017 = vmatprep.subr.mxu0 0.0
        %1018 = vmatpush1.msra.mxu0 0.0
        %1019 = vmatprep.subr.mxu0 0.0
        %1020 = vmatpush1.msra.mxu0 0.0
        %1021 = vmatprep.subr.mxu0 0.0
        %1022 = vmatpush1.msra.mxu0 0.0
        %1023 = vmatprep.subr.mxu0 0.0
        %1024 = vmatpush1.msra.mxu0 0.0
        %1025 = vmatprep.subr.mxu0 0.0
        %1026 = vmatpush1.msra.mxu0 0.0
        %1027 = vmatprep.subr.mxu0 0.0
        %1028 = vmatpush1.msra.mxu0 0.0
        %1029 = vmatprep.subr.mxu0 0.0
        %1030 = vmatpush1.msra.mxu0 0.0
        %1031 = vmatprep.subr.mxu0 0.0
        %1032 = vmatpush1.msra.mxu0 0.0
        %1033 = vmatprep.subr.mxu0 0.0
        %1034 = vmatpush1.msra.mxu0 0.0
        %1035 = vmatprep.subr.mxu0 0.0
        %1036 = vmatpush1.msra.mxu0 0.0
        %1037 = vmatprep.mubr.f32.mxu0 0.0
        %1038 = vmatmul.mubr.f32.gmra.mrb[0].mxu0 %v971
        %v1039 = vpop.f32.mrb[0].mxu0
        %v1040 = vadd.f32 0.0, %v1039
        %v1041 = vpop.f32.mrb[0].mxu0
        %1042 = vdwg.mxu0
        %v1044 = vsel %vm969, %v965, 0
        %1046 = vmatprep.subr.mxu0 0.0
        %1047 = vmatpush1.msra.mxu0 %v966
        %1048 = vmatprep.subr.mxu0 0.0
        %1049 = vmatpush1.msra.mxu0 0.0
        %1050 = vmatprep.subr.mxu0 0.0
        %1051 = vmatpush1.msra.mxu0 0.0
        %1052 = vmatprep.subr.mxu0 0.0
        %1053 = vmatpush1.msra.mxu0 0.0
        %1054 = vmatprep.subr.mxu0 0.0
        %1055 = vmatpush1.msra.mxu0 0.0
        %1056 = vmatprep.subr.mxu0 0.0
        %1057 = vmatpush1.msra.mxu0 0.0
        %1058 = vmatprep.subr.mxu0 0.0
        %1059 = vmatpush1.msra.mxu0 0.0
        %1060 = vmatprep.subr.mxu0 0.0
        %1061 = vmatpush1.msra.mxu0 0.0
        %1062 = vmatprep.subr.mxu0 0.0
        %1063 = vmatpush1.msra.mxu0 0.0
        %1064 = vmatprep.subr.mxu0 0.0
        %1065 = vmatpush1.msra.mxu0 0.0
        %1066 = vmatprep.subr.mxu0 0.0
        %1067 = vmatpush1.msra.mxu0 0.0
        %1068 = vmatprep.subr.mxu0 0.0
        %1069 = vmatpush1.msra.mxu0 0.0
        %1070 = vmatprep.subr.mxu0 0.0
        %1071 = vmatpush1.msra.mxu0 0.0
        %1072 = vmatprep.subr.mxu0 0.0
        %1073 = vmatpush1.msra.mxu0 0.0
        %1074 = vmatprep.subr.mxu0 0.0
        %1075 = vmatpush1.msra.mxu0 0.0
        %1076 = vmatprep.subr.mxu0 0.0
        %1077 = vmatpush1.msra.mxu0 0.0
        %1078 = vmatprep.subr.mxu0 0.0
        %1079 = vmatpush1.msra.mxu0 0.0
        %1080 = vmatprep.subr.mxu0 0.0
        %1081 = vmatpush1.msra.mxu0 0.0
        %1082 = vmatprep.subr.mxu0 0.0
        %1083 = vmatpush1.msra.mxu0 0.0
        %1084 = vmatprep.subr.mxu0 0.0
        %1085 = vmatpush1.msra.mxu0 0.0
        %1086 = vmatprep.subr.mxu0 0.0
        %1087 = vmatpush1.msra.mxu0 0.0
        %1088 = vmatprep.subr.mxu0 0.0
        %1089 = vmatpush1.msra.mxu0 0.0
        %1090 = vmatprep.subr.mxu0 0.0
        %1091 = vmatpush1.msra.mxu0 0.0
        %1092 = vmatprep.subr.mxu0 0.0
        %1093 = vmatpush1.msra.mxu0 0.0
        %1094 = vmatprep.subr.mxu0 0.0
        %1095 = vmatpush1.msra.mxu0 0.0
        %1096 = vmatprep.subr.mxu0 0.0
        %1097 = vmatpush1.msra.mxu0 0.0
        %1098 = vmatprep.subr.mxu0 0.0
        %1099 = vmatpush1.msra.mxu0 0.0
        %1100 = vmatprep.subr.mxu0 0.0
        %1101 = vmatpush1.msra.mxu0 0.0
        %1102 = vmatprep.subr.mxu0 0.0
        %1103 = vmatpush1.msra.mxu0 0.0
        %1104 = vmatprep.subr.mxu0 0.0
        %1105 = vmatpush1.msra.mxu0 0.0
        %1106 = vmatprep.subr.mxu0 0.0
        %1107 = vmatpush1.msra.mxu0 0.0
        %1108 = vmatprep.subr.mxu0 0.0
        %1109 = vmatpush1.msra.mxu0 0.0
        %1110 = vmatprep.mubr.f32.mxu0 0.0
        %1111 = vmatmul.mubr.f32.gmra.mrb[0].mxu0 %v1044
        %v1112 = vpop.f32.mrb[0].mxu0
        %v1113 = vadd.f32 %v1040, %v1112
        %v1114 = vpop.f32.mrb[0].mxu0
        %1115 = vdwg.mxu0
        %v1116 = vld [vmem:[%s13] sm:$0x1]
        %v1118 = vlaneseq
        %v1119 = vshrl.u32 %v1118, 7
        %v1120 = vsub.s32 0, %v1119
        %v1121 = vrot.slane %v1116, %v1120
        %v1123 = vadd.f32 %v1113, %v1121
        %v1124 = vxor.u32 %v1123, 2147483648
        %v1125 = vmul.f32 %v1124, 1.442695
        %v1126 = vpow.pop %v1125
        %v1127 = vadd.f32 %v1126, 1.0
        %v1128 = vrcp.pop %v1127
        %v1129 = vmul.f32 1.0, %v1128
        %v1130 = vmul.f32 %v964, %v1129
        %v1131 = vld [vmem:[%s851] sm:$0xff]
        %v1133 = vsel %vm890, %v1131, 0
        %1135 = vmatprep.subr.mxu0 0.0
        %1136 = vmatpush1.msra.mxu0 %v881
        %1137 = vmatprep.subr.mxu0 0.0
        %1138 = vmatpush1.msra.mxu0 %v882
        %1139 = vmatprep.subr.mxu0 0.0
        %1140 = vmatpush1.msra.mxu0 0.0
        %1141 = vmatprep.subr.mxu0 0.0
        %1142 = vmatpush1.msra.mxu0 0.0
        %1143 = vmatprep.subr.mxu0 0.0
        %1144 = vmatpush1.msra.mxu0 0.0
        %1145 = vmatprep.subr.mxu0 0.0
        %1146 = vmatpush1.msra.mxu0 0.0
        %1147 = vmatprep.subr.mxu0 0.0
        %1148 = vmatpush1.msra.mxu0 0.0
        %1149 = vmatprep.subr.mxu0 0.0
        %1150 = vmatpush1.msra.mxu0 0.0
        %1151 = vmatprep.subr.mxu0 0.0
        %1152 = vmatpush1.msra.mxu0 0.0
        %1153 = vmatprep.subr.mxu0 0.0
        %1154 = vmatpush1.msra.mxu0 0.0
        %1155 = vmatprep.subr.mxu0 0.0
        %1156 = vmatpush1.msra.mxu0 0.0
        %1157 = vmatprep.subr.mxu0 0.0
        %1158 = vmatpush1.msra.mxu0 0.0
        %1159 = vmatprep.subr.mxu0 0.0
        %1160 = vmatpush1.msra.mxu0 0.0
        %1161 = vmatprep.subr.mxu0 0.0
        %1162 = vmatpush1.msra.mxu0 0.0
        %1163 = vmatprep.subr.mxu0 0.0
        %1164 = vmatpush1.msra.mxu0 0.0
        %1165 = vmatprep.subr.mxu0 0.0
        %1166 = vmatpush1.msra.mxu0 0.0
        %1167 = vmatprep.subr.mxu0 0.0
        %1168 = vmatpush1.msra.mxu0 0.0
        %1169 = vmatprep.subr.mxu0 0.0
        %1170 = vmatpush1.msra.mxu0 0.0
        %1171 = vmatprep.subr.mxu0 0.0
        %1172 = vmatpush1.msra.mxu0 0.0
        %1173 = vmatprep.subr.mxu0 0.0
        %1174 = vmatpush1.msra.mxu0 0.0
        %1175 = vmatprep.subr.mxu0 0.0
        %1176 = vmatpush1.msra.mxu0 0.0
        %1177 = vmatprep.subr.mxu0 0.0
        %1178 = vmatpush1.msra.mxu0 0.0
        %1179 = vmatprep.subr.mxu0 0.0
        %1180 = vmatpush1.msra.mxu0 0.0
        %1181 = vmatprep.subr.mxu0 0.0
        %1182 = vmatpush1.msra.mxu0 0.0
        %1183 = vmatprep.subr.mxu0 0.0
        %1184 = vmatpush1.msra.mxu0 0.0
        %1185 = vmatprep.subr.mxu0 0.0
        %1186 = vmatpush1.msra.mxu0 0.0
        %1187 = vmatprep.subr.mxu0 0.0
        %1188 = vmatpush1.msra.mxu0 0.0
        %1189 = vmatprep.subr.mxu0 0.0
        %1190 = vmatpush1.msra.mxu0 0.0
        %1191 = vmatprep.subr.mxu0 0.0
        %1192 = vmatpush1.msra.mxu0 0.0
        %1193 = vmatprep.subr.mxu0 0.0
        %1194 = vmatpush1.msra.mxu0 0.0
        %1195 = vmatprep.subr.mxu0 0.0
        %1196 = vmatpush1.msra.mxu0 0.0
        %1197 = vmatprep.subr.mxu0 0.0
        %1198 = vmatpush1.msra.mxu0 0.0
        %1199 = vmatprep.mubr.f32.mxu0 0.0
        %1200 = vmatmul.mubr.f32.gmra.mrb[0].mxu0 %v1133
        %v1201 = vpop.f32.mrb[0].mxu0
        %v1202 = vadd.f32 %v888, %v1201
        %v1203 = vpop.f32.mrb[0].mxu0
        %1204 = vdwg.mxu0
        %v1205 = vmax.f32 %v1202, 0.0
        %v1206 = vld [vmem:[%s863] sm:$0xff]
        %v1207 = vld [vmem:[%s875] sm:$0xff]
        %v1209 = vsel %vm969, %v1207, 0
        %1211 = vmatprep.subr.mxu0 0.0
        %1212 = vmatpush1.msra.mxu0 %v968
        %1213 = vmatprep.subr.mxu0 0.0
        %1214 = vmatpush1.msra.mxu0 0.0
        %1215 = vmatprep.subr.mxu0 0.0
        %1216 = vmatpush1.msra.mxu0 0.0
        %1217 = vmatprep.subr.mxu0 0.0
        %1218 = vmatpush1.msra.mxu0 0.0
        %1219 = vmatprep.subr.mxu0 0.0
        %1220 = vmatpush1.msra.mxu0 0.0
        %1221 = vmatprep.subr.mxu0 0.0
        %1222 = vmatpush1.msra.mxu0 0.0
        %1223 = vmatprep.subr.mxu0 0.0
        %1224 = vmatpush1.msra.mxu0 0.0
        %1225 = vmatprep.subr.mxu0 0.0
        %1226 = vmatpush1.msra.mxu0 0.0
        %1227 = vmatprep.subr.mxu0 0.0
        %1228 = vmatpush1.msra.mxu0 0.0
        %1229 = vmatprep.subr.mxu0 0.0
        %1230 = vmatpush1.msra.mxu0 0.0
        %1231 = vmatprep.subr.mxu0 0.0
        %1232 = vmatpush1.msra.mxu0 0.0
        %1233 = vmatprep.subr.mxu0 0.0
        %1234 = vmatpush1.msra.mxu0 0.0
        %1235 = vmatprep.subr.mxu0 0.0
        %1236 = vmatpush1.msra.mxu0 0.0
        %1237 = vmatprep.subr.mxu0 0.0
        %1238 = vmatpush1.msra.mxu0 0.0
        %1239 = vmatprep.subr.mxu0 0.0
        %1240 = vmatpush1.msra.mxu0 0.0
        %1241 = vmatprep.subr.mxu0 0.0
        %1242 = vmatpush1.msra.mxu0 0.0
        %1243 = vmatprep.subr.mxu0 0.0
        %1244 = vmatpush1.msra.mxu0 0.0
        %1245 = vmatprep.subr.mxu0 0.0
        %1246 = vmatpush1.msra.mxu0 0.0
        %1247 = vmatprep.subr.mxu0 0.0
        %1248 = vmatpush1.msra.mxu0 0.0
        %1249 = vmatprep.subr.mxu0 0.0
        %1250 = vmatpush1.msra.mxu0 0.0
        %1251 = vmatprep.subr.mxu0 0.0
        %1252 = vmatpush1.msra.mxu0 0.0
        %1253 = vmatprep.subr.mxu0 0.0
        %1254 = vmatpush1.msra.mxu0 0.0
        %1255 = vmatprep.subr.mxu0 0.0
        %1256 = vmatpush1.msra.mxu0 0.0
        %1257 = vmatprep.subr.mxu0 0.0
        %1258 = vmatpush1.msra.mxu0 0.0
        %1259 = vmatprep.subr.mxu0 0.0
        %1260 = vmatpush1.msra.mxu0 0.0
        %1261 = vmatprep.subr.mxu0 0.0
        %1262 = vmatpush1.msra.mxu0 0.0
        %1263 = vmatprep.subr.mxu0 0.0
        %1264 = vmatpush1.msra.mxu0 0.0
        %1265 = vmatprep.subr.mxu0 0.0
        %1266 = vmatpush1.msra.mxu0 0.0
        %1267 = vmatprep.subr.mxu0 0.0
        %1268 = vmatpush1.msra.mxu0 0.0
        %1269 = vmatprep.subr.mxu0 0.0
        %1270 = vmatpush1.msra.mxu0 0.0
        %1271 = vmatprep.subr.mxu0 0.0
        %1272 = vmatpush1.msra.mxu0 0.0
        %1273 = vmatprep.subr.mxu0 0.0
        %1274 = vmatpush1.msra.mxu0 0.0
        %1275 = vmatprep.mubr.f32.mxu0 0.0
        %1276 = vmatmul.mubr.f32.gmra.mrb[0].mxu0 %v1209
        %v1277 = vpop.f32.mrb[0].mxu0
        %v1278 = vadd.f32 0.0, %v1277
        %v1279 = vpop.f32.mrb[0].mxu0
        %1280 = vdwg.mxu0
        %v1282 = vsel %vm969, %v1206, 0
        %1284 = vmatprep.subr.mxu0 0.0
        %1285 = vmatpush1.msra.mxu0 %v966
        %1286 = vmatprep.subr.mxu0 0.0
        %1287 = vmatpush1.msra.mxu0 0.0
        %1288 = vmatprep.subr.mxu0 0.0
        %1289 = vmatpush1.msra.mxu0 0.0
        %1290 = vmatprep.subr.mxu0 0.0
        %1291 = vmatpush1.msra.mxu0 0.0
        %1292 = vmatprep.subr.mxu0 0.0
        %1293 = vmatpush1.msra.mxu0 0.0
        %1294 = vmatprep.subr.mxu0 0.0
        %1295 = vmatpush1.msra.mxu0 0.0
        %1296 = vmatprep.subr.mxu0 0.0
        %1297 = vmatpush1.msra.mxu0 0.0
        %1298 = vmatprep.subr.mxu0 0.0
        %1299 = vmatpush1.msra.mxu0 0.0
        %1300 = vmatprep.subr.mxu0 0.0
        %1301 = vmatpush1.msra.mxu0 0.0
        %1302 = vmatprep.subr.mxu0 0.0
        %1303 = vmatpush1.msra.mxu0 0.0
        %1304 = vmatprep.subr.mxu0 0.0
        %1305 = vmatpush1.msra.mxu0 0.0
        %1306 = vmatprep.subr.mxu0 0.0
        %1307 = vmatpush1.msra.mxu0 0.0
        %1308 = vmatprep.subr.mxu0 0.0
        %1309 = vmatpush1.msra.mxu0 0.0
        %1310 = vmatprep.subr.mxu0 0.0
        %1311 = vmatpush1.msra.mxu0 0.0
        %1312 = vmatprep.subr.mxu0 0.0
        %1313 = vmatpush1.msra.mxu0 0.0
        %1314 = vmatprep.subr.mxu0 0.0
        %1315 = vmatpush1.msra.mxu0 0.0
        %1316 = vmatprep.subr.mxu0 0.0
        %1317 = vmatpush1.msra.mxu0 0.0
        %1318 = vmatprep.subr.mxu0 0.0
        %1319 = vmatpush1.msra.mxu0 0.0
        %1320 = vmatprep.subr.mxu0 0.0
        %1321 = vmatpush1.msra.mxu0 0.0
        %1322 = vmatprep.subr.mxu0 0.0
        %1323 = vmatpush1.msra.mxu0 0.0
        %1324 = vmatprep.subr.mxu0 0.0
        %1325 = vmatpush1.msra.mxu0 0.0
        %1326 = vmatprep.subr.mxu0 0.0
        %1327 = vmatpush1.msra.mxu0 0.0
        %1328 = vmatprep.subr.mxu0 0.0
        %1329 = vmatpush1.msra.mxu0 0.0
        %1330 = vmatprep.subr.mxu0 0.0
        %1331 = vmatpush1.msra.mxu0 0.0
        %1332 = vmatprep.subr.mxu0 0.0
        %1333 = vmatpush1.msra.mxu0 0.0
        %1334 = vmatprep.subr.mxu0 0.0
        %1335 = vmatpush1.msra.mxu0 0.0
        %1336 = vmatprep.subr.mxu0 0.0
        %1337 = vmatpush1.msra.mxu0 0.0
        %1338 = vmatprep.subr.mxu0 0.0
        %1339 = vmatpush1.msra.mxu0 0.0
        %1340 = vmatprep.subr.mxu0 0.0
        %1341 = vmatpush1.msra.mxu0 0.0
        %1342 = vmatprep.subr.mxu0 0.0
        %1343 = vmatpush1.msra.mxu0 0.0
        %1344 = vmatprep.subr.mxu0 0.0
        %1345 = vmatpush1.msra.mxu0 0.0
        %1346 = vmatprep.subr.mxu0 0.0
        %1347 = vmatpush1.msra.mxu0 0.0
        %1348 = vmatprep.mubr.f32.mxu0 0.0
        %1349 = vmatmul.mubr.f32.gmra.mrb[0].mxu0 %v1282
        %v1350 = vpop.f32.mrb[0].mxu0
        %v1351 = vadd.f32 %v1278, %v1350
        %v1352 = vpop.f32.mrb[0].mxu0
        %1353 = vdwg.mxu0
        %v1354 = vadd.f32 %v1351, %v1121
        %v1355 = vxor.u32 %v1354, 2147483648
        %v1356 = vmul.f32 %v1355, 1.442695
        %v1357 = vpow.pop %v1356
        %v1358 = vadd.f32 %v1357, 1.0
        %v1359 = vrcp.pop %v1358
        %v1360 = vmul.f32 1.0, %v1359
        %v1361 = vmul.f32 %v1205, %v1360
        %v1362 = vld [vmem:[%s855] sm:$0xff]
        %v1364 = vsel %vm890, %v1362, 0
        %1366 = vmatprep.subr.mxu0 0.0
        %1367 = vmatpush1.msra.mxu0 %v881
        %1368 = vmatprep.subr.mxu0 0.0
        %1369 = vmatpush1.msra.mxu0 %v882
        %1370 = vmatprep.subr.mxu0 0.0
        %1371 = vmatpush1.msra.mxu0 0.0
        %1372 = vmatprep.subr.mxu0 0.0
        %1373 = vmatpush1.msra.mxu0 0.0
        %1374 = vmatprep.subr.mxu0 0.0
        %1375 = vmatpush1.msra.mxu0 0.0
        %1376 = vmatprep.subr.mxu0 0.0
        %1377 = vmatpush1.msra.mxu0 0.0
        %1378 = vmatprep.subr.mxu0 0.0
        %1379 = vmatpush1.msra.mxu0 0.0
        %1380 = vmatprep.subr.mxu0 0.0
        %1381 = vmatpush1.msra.mxu0 0.0
        %1382 = vmatprep.subr.mxu0 0.0
        %1383 = vmatpush1.msra.mxu0 0.0
        %1384 = vmatprep.subr.mxu0 0.0
        %1385 = vmatpush1.msra.mxu0 0.0
        %1386 = vmatprep.subr.mxu0 0.0
        %1387 = vmatpush1.msra.mxu0 0.0
        %1388 = vmatprep.subr.mxu0 0.0
        %1389 = vmatpush1.msra.mxu0 0.0
        %1390 = vmatprep.subr.mxu0 0.0
        %1391 = vmatpush1.msra.mxu0 0.0
        %1392 = vmatprep.subr.mxu0 0.0
        %1393 = vmatpush1.msra.mxu0 0.0
        %1394 = vmatprep.subr.mxu0 0.0
        %1395 = vmatpush1.msra.mxu0 0.0
        %1396 = vmatprep.subr.mxu0 0.0
        %1397 = vmatpush1.msra.mxu0 0.0
        %1398 = vmatprep.subr.mxu0 0.0
        %1399 = vmatpush1.msra.mxu0 0.0
        %1400 = vmatprep.subr.mxu0 0.0
        %1401 = vmatpush1.msra.mxu0 0.0
        %1402 = vmatprep.subr.mxu0 0.0
        %1403 = vmatpush1.msra.mxu0 0.0
        %1404 = vmatprep.subr.mxu0 0.0
        %1405 = vmatpush1.msra.mxu0 0.0
        %1406 = vmatprep.subr.mxu0 0.0
        %1407 = vmatpush1.msra.mxu0 0.0
        %1408 = vmatprep.subr.mxu0 0.0
        %1409 = vmatpush1.msra.mxu0 0.0
        %1410 = vmatprep.subr.mxu0 0.0
        %1411 = vmatpush1.msra.mxu0 0.0
        %1412 = vmatprep.subr.mxu0 0.0
        %1413 = vmatpush1.msra.mxu0 0.0
        %1414 = vmatprep.subr.mxu0 0.0
        %1415 = vmatpush1.msra.mxu0 0.0
        %1416 = vmatprep.subr.mxu0 0.0
        %1417 = vmatpush1.msra.mxu0 0.0
        %1418 = vmatprep.subr.mxu0 0.0
        %1419 = vmatpush1.msra.mxu0 0.0
        %1420 = vmatprep.subr.mxu0 0.0
        %1421 = vmatpush1.msra.mxu0 0.0
        %1422 = vmatprep.subr.mxu0 0.0
        %1423 = vmatpush1.msra.mxu0 0.0
        %1424 = vmatprep.subr.mxu0 0.0
        %1425 = vmatpush1.msra.mxu0 0.0
        %1426 = vmatprep.subr.mxu0 0.0
        %1427 = vmatpush1.msra.mxu0 0.0
        %1428 = vmatprep.subr.mxu0 0.0
        %1429 = vmatpush1.msra.mxu0 0.0
        %1430 = vmatprep.mubr.f32.mxu0 0.0
        %1431 = vmatmul.mubr.f32.gmra.mrb[0].mxu0 %v1364
        %v1432 = vpop.f32.mrb[0].mxu0
        %v1433 = vadd.f32 %v888, %v1432
        %v1434 = vpop.f32.mrb[0].mxu0
        %1435 = vdwg.mxu0
        %v1436 = vmax.f32 %v1433, 0.0
        %v1437 = vld [vmem:[%s867] sm:$0xff]
        %v1438 = vld [vmem:[%s879] sm:$0xff]
        %v1440 = vsel %vm969, %v1438, 0
        %1442 = vmatprep.subr.mxu0 0.0
        %1443 = vmatpush1.msra.mxu0 %v968
        %1444 = vmatprep.subr.mxu0 0.0
        %1445 = vmatpush1.msra.mxu0 0.0
        %1446 = vmatprep.subr.mxu0 0.0
        %1447 = vmatpush1.msra.mxu0 0.0
        %1448 = vmatprep.subr.mxu0 0.0
        %1449 = vmatpush1.msra.mxu0 0.0
        %1450 = vmatprep.subr.mxu0 0.0
        %1451 = vmatpush1.msra.mxu0 0.0
        %1452 = vmatprep.subr.mxu0 0.0
        %1453 = vmatpush1.msra.mxu0 0.0
        %1454 = vmatprep.subr.mxu0 0.0
        %1455 = vmatpush1.msra.mxu0 0.0
        %1456 = vmatprep.subr.mxu0 0.0
        %1457 = vmatpush1.msra.mxu0 0.0
        %1458 = vmatprep.subr.mxu0 0.0
        %1459 = vmatpush1.msra.mxu0 0.0
        %1460 = vmatprep.subr.mxu0 0.0
        %1461 = vmatpush1.msra.mxu0 0.0
        %1462 = vmatprep.subr.mxu0 0.0
        %1463 = vmatpush1.msra.mxu0 0.0
        %1464 = vmatprep.subr.mxu0 0.0
        %1465 = vmatpush1.msra.mxu0 0.0
        %1466 = vmatprep.subr.mxu0 0.0
        %1467 = vmatpush1.msra.mxu0 0.0
        %1468 = vmatprep.subr.mxu0 0.0
        %1469 = vmatpush1.msra.mxu0 0.0
        %1470 = vmatprep.subr.mxu0 0.0
        %1471 = vmatpush1.msra.mxu0 0.0
        %1472 = vmatprep.subr.mxu0 0.0
        %1473 = vmatpush1.msra.mxu0 0.0
        %1474 = vmatprep.subr.mxu0 0.0
        %1475 = vmatpush1.msra.mxu0 0.0
        %1476 = vmatprep.subr.mxu0 0.0
        %1477 = vmatpush1.msra.mxu0 0.0
        %1478 = vmatprep.subr.mxu0 0.0
        %1479 = vmatpush1.msra.mxu0 0.0
        %1480 = vmatprep.subr.mxu0 0.0
        %1481 = vmatpush1.msra.mxu0 0.0
        %1482 = vmatprep.subr.mxu0 0.0
        %1483 = vmatpush1.msra.mxu0 0.0
        %1484 = vmatprep.subr.mxu0 0.0
        %1485 = vmatpush1.msra.mxu0 0.0
        %1486 = vmatprep.subr.mxu0 0.0
        %1487 = vmatpush1.msra.mxu0 0.0
        %1488 = vmatprep.subr.mxu0 0.0
        %1489 = vmatpush1.msra.mxu0 0.0
        %1490 = vmatprep.subr.mxu0 0.0
        %1491 = vmatpush1.msra.mxu0 0.0
        %1492 = vmatprep.subr.mxu0 0.0
        %1493 = vmatpush1.msra.mxu0 0.0
        %1494 = vmatprep.subr.mxu0 0.0
        %1495 = vmatpush1.msra.mxu0 0.0
        %1496 = vmatprep.subr.mxu0 0.0
        %1497 = vmatpush1.msra.mxu0 0.0
        %1498 = vmatprep.subr.mxu0 0.0
        %1499 = vmatpush1.msra.mxu0 0.0
        %1500 = vmatprep.subr.mxu0 0.0
        %1501 = vmatpush1.msra.mxu0 0.0
        %1502 = vmatprep.subr.mxu0 0.0
        %1503 = vmatpush1.msra.mxu0 0.0
        %1504 = vmatprep.subr.mxu0 0.0
        %1505 = vmatpush1.msra.mxu0 0.0
        %1506 = vmatprep.mubr.f32.mxu0 0.0
        %1507 = vmatmul.mubr.f32.gmra.mrb[0].mxu0 %v1440
        %v1508 = vpop.f32.mrb[0].mxu0
        %v1509 = vadd.f32 0.0, %v1508
        %v1510 = vpop.f32.mrb[0].mxu0
        %1511 = vdwg.mxu0
        %v1513 = vsel %vm969, %v1437, 0
        %1515 = vmatprep.subr.mxu0 0.0
        %1516 = vmatpush1.msra.mxu0 %v966
        %1517 = vmatprep.subr.mxu0 0.0
        %1518 = vmatpush1.msra.mxu0 0.0
        %1519 = vmatprep.subr.mxu0 0.0
        %1520 = vmatpush1.msra.mxu0 0.0
        %1521 = vmatprep.subr.mxu0 0.0
        %1522 = vmatpush1.msra.mxu0 0.0
        %1523 = vmatprep.subr.mxu0 0.0
        %1524 = vmatpush1.msra.mxu0 0.0
        %1525 = vmatprep.subr.mxu0 0.0
        %1526 = vmatpush1.msra.mxu0 0.0
        %1527 = vmatprep.subr.mxu0 0.0
        %1528 = vmatpush1.msra.mxu0 0.0
        %1529 = vmatprep.subr.mxu0 0.0
        %1530 = vmatpush1.msra.mxu0 0.0
        %1531 = vmatprep.subr.mxu0 0.0
        %1532 = vmatpush1.msra.mxu0 0.0
        %1533 = vmatprep.subr.mxu0 0.0
        %1534 = vmatpush1.msra.mxu0 0.0
        %1535 = vmatprep.subr.mxu0 0.0
        %1536 = vmatpush1.msra.mxu0 0.0
        %1537 = vmatprep.subr.mxu0 0.0
        %1538 = vmatpush1.msra.mxu0 0.0
        %1539 = vmatprep.subr.mxu0 0.0
        %1540 = vmatpush1.msra.mxu0 0.0
        %1541 = vmatprep.subr.mxu0 0.0
        %1542 = vmatpush1.msra.mxu0 0.0
        %1543 = vmatprep.subr.mxu0 0.0
        %1544 = vmatpush1.msra.mxu0 0.0
        %1545 = vmatprep.subr.mxu0 0.0
        %1546 = vmatpush1.msra.mxu0 0.0
        %1547 = vmatprep.subr.mxu0 0.0
        %1548 = vmatpush1.msra.mxu0 0.0
        %1549 = vmatprep.subr.mxu0 0.0
        %1550 = vmatpush1.msra.mxu0 0.0
        %1551 = vmatprep.subr.mxu0 0.0
        %1552 = vmatpush1.msra.mxu0 0.0
        %1553 = vmatprep.subr.mxu0 0.0
        %1554 = vmatpush1.msra.mxu0 0.0
        %1555 = vmatprep.subr.mxu0 0.0
        %1556 = vmatpush1.msra.mxu0 0.0
        %1557 = vmatprep.subr.mxu0 0.0
        %1558 = vmatpush1.msra.mxu0 0.0
        %1559 = vmatprep.subr.mxu0 0.0
        %1560 = vmatpush1.msra.mxu0 0.0
        %1561 = vmatprep.subr.mxu0 0.0
        %1562 = vmatpush1.msra.mxu0 0.0
        %1563 = vmatprep.subr.mxu0 0.0
        %1564 = vmatpush1.msra.mxu0 0.0
        %1565 = vmatprep.subr.mxu0 0.0
        %1566 = vmatpush1.msra.mxu0 0.0
        %1567 = vmatprep.subr.mxu0 0.0
        %1568 = vmatpush1.msra.mxu0 0.0
        %1569 = vmatprep.subr.mxu0 0.0
        %1570 = vmatpush1.msra.mxu0 0.0
        %1571 = vmatprep.subr.mxu0 0.0
        %1572 = vmatpush1.msra.mxu0 0.0
        %1573 = vmatprep.subr.mxu0 0.0
        %1574 = vmatpush1.msra.mxu0 0.0
        %1575 = vmatprep.subr.mxu0 0.0
        %1576 = vmatpush1.msra.mxu0 0.0
        %1577 = vmatprep.subr.mxu0 0.0
        %1578 = vmatpush1.msra.mxu0 0.0
        %1579 = vmatprep.mubr.f32.mxu0 0.0
        %1580 = vmatmul.mubr.f32.gmra.mrb[0].mxu0 %v1513
        %v1581 = vpop.f32.mrb[0].mxu0
        %v1582 = vadd.f32 %v1509, %v1581
        %v1583 = vpop.f32.mrb[0].mxu0
        %1584 = vdwg.mxu0
        %v1585 = vadd.f32 %v1582, %v1121
        %v1586 = vxor.u32 %v1585, 2147483648
        %v1587 = vmul.f32 %v1586, 1.442695
        %v1588 = vpow.pop %v1587
        %v1589 = vadd.f32 %v1588, 1.0
        %v1590 = vrcp.pop %v1589
        %v1591 = vmul.f32 1.0, %v1590
        %v1592 = vmul.f32 %v1436, %v1591
        %v1593 = vld [vmem:[%s14] sm:$0xff]
        %v1594 = vld [vmem:[%s14 + $0x8] sm:$0xff]
        %v1595 = vld [vmem:[%s14 + $0x10] sm:$0xff]
        %v1596 = vld [vmem:[%s14 + $0x18] sm:$0xff]
        %v1597 = vld [vmem:[%s15] sm:$0x1]
        %v1599 = vlaneseq
        %v1600 = vshrl.u32 %v1599, 7
        %v1601 = vsub.s32 0, %v1600
        %v1602 = vrot.slane %v1597, %v1601
        %vm1604 = vcmask 261120
        %v1606 = vsel %vm1604, %v1130, 0
        %1608 = vmatprep.subr.mxu0 0.0
        %1609 = vmatpush1.msra.mxu0 %v1593
        %1610 = vmatprep.subr.mxu0 0.0
        %1611 = vmatpush1.msra.mxu0 %v1594
        %1612 = vmatprep.subr.mxu0 0.0
        %1613 = vmatpush1.msra.mxu0 %v1595
        %1614 = vmatprep.subr.mxu0 0.0
        %1615 = vmatpush1.msra.mxu0 %v1596
        %1616 = vmatprep.subr.mxu0 0.0
        %1617 = vmatpush1.msra.mxu0 0.0
        %1618 = vmatprep.subr.mxu0 0.0
        %1619 = vmatpush1.msra.mxu0 0.0
        %1620 = vmatprep.subr.mxu0 0.0
        %1621 = vmatpush1.msra.mxu0 0.0
        %1622 = vmatprep.subr.mxu0 0.0
        %1623 = vmatpush1.msra.mxu0 0.0
        %1624 = vmatprep.subr.mxu0 0.0
        %1625 = vmatpush1.msra.mxu0 0.0
        %1626 = vmatprep.subr.mxu0 0.0
        %1627 = vmatpush1.msra.mxu0 0.0
        %1628 = vmatprep.subr.mxu0 0.0
        %1629 = vmatpush1.msra.mxu0 0.0
        %1630 = vmatprep.subr.mxu0 0.0
        %1631 = vmatpush1.msra.mxu0 0.0
        %1632 = vmatprep.subr.mxu0 0.0
        %1633 = vmatpush1.msra.mxu0 0.0
        %1634 = vmatprep.subr.mxu0 0.0
        %1635 = vmatpush1.msra.mxu0 0.0
        %1636 = vmatprep.subr.mxu0 0.0
        %1637 = vmatpush1.msra.mxu0 0.0
        %1638 = vmatprep.subr.mxu0 0.0
        %1639 = vmatpush1.msra.mxu0 0.0
        %1640 = vmatprep.subr.mxu0 0.0
        %1641 = vmatpush1.msra.mxu0 0.0
        %1642 = vmatprep.subr.mxu0 0.0
        %1643 = vmatpush1.msra.mxu0 0.0
        %1644 = vmatprep.subr.mxu0 0.0
        %1645 = vmatpush1.msra.mxu0 0.0
        %1646 = vmatprep.subr.mxu0 0.0
        %1647 = vmatpush1.msra.mxu0 0.0
        %1648 = vmatprep.subr.mxu0 0.0
        %1649 = vmatpush1.msra.mxu0 0.0
        %1650 = vmatprep.subr.mxu0 0.0
        %1651 = vmatpush1.msra.mxu0 0.0
        %1652 = vmatprep.subr.mxu0 0.0
        %1653 = vmatpush1.msra.mxu0 0.0
        %1654 = vmatprep.subr.mxu0 0.0
        %1655 = vmatpush1.msra.mxu0 0.0
        %1656 = vmatprep.subr.mxu0 0.0
        %1657 = vmatpush1.msra.mxu0 0.0
        %1658 = vmatprep.subr.mxu0 0.0
        %1659 = vmatpush1.msra.mxu0 0.0
        %1660 = vmatprep.subr.mxu0 0.0
        %1661 = vmatpush1.msra.mxu0 0.0
        %1662 = vmatprep.subr.mxu0 0.0
        %1663 = vmatpush1.msra.mxu0 0.0
        %1664 = vmatprep.subr.mxu0 0.0
        %1665 = vmatpush1.msra.mxu0 0.0
        %1666 = vmatprep.subr.mxu0 0.0
        %1667 = vmatpush1.msra.mxu0 0.0
        %1668 = vmatprep.subr.mxu0 0.0
        %1669 = vmatpush1.msra.mxu0 0.0
        %1670 = vmatprep.subr.mxu0 0.0
        %1671 = vmatpush1.msra.mxu0 0.0
        %1672 = vmatprep.mubr.f32.mxu0 0.0
        %1673 = vmatmul.mubr.f32.gmra.mrb[0].mxu0 %v1606
        %v1674 = vpop.f32.mrb[0].mxu0
        %v1675 = vadd.f32 %v1602, %v1674
        %v1676 = vpop.f32.mrb[0].mxu0
        %1677 = vdwg.mxu0
        %v1678 = vmax.f32 %v1675, 0.0
        %v1680 = vsel %vm1604, %v1361, 0
        %1682 = vmatprep.subr.mxu0 0.0
        %1683 = vmatpush1.msra.mxu0 %v1593
        %1684 = vmatprep.subr.mxu0 0.0
        %1685 = vmatpush1.msra.mxu0 %v1594
        %1686 = vmatprep.subr.mxu0 0.0
        %1687 = vmatpush1.msra.mxu0 %v1595
        %1688 = vmatprep.subr.mxu0 0.0
        %1689 = vmatpush1.msra.mxu0 %v1596
        %1690 = vmatprep.subr.mxu0 0.0
        %1691 = vmatpush1.msra.mxu0 0.0
        %1692 = vmatprep.subr.mxu0 0.0
        %1693 = vmatpush1.msra.mxu0 0.0
        %1694 = vmatprep.subr.mxu0 0.0
        %1695 = vmatpush1.msra.mxu0 0.0
        %1696 = vmatprep.subr.mxu0 0.0
        %1697 = vmatpush1.msra.mxu0 0.0
        %1698 = vmatprep.subr.mxu0 0.0
        %1699 = vmatpush1.msra.mxu0 0.0
        %1700 = vmatprep.subr.mxu0 0.0
        %1701 = vmatpush1.msra.mxu0 0.0
        %1702 = vmatprep.subr.mxu0 0.0
        %1703 = vmatpush1.msra.mxu0 0.0
        %1704 = vmatprep.subr.mxu0 0.0
        %1705 = vmatpush1.msra.mxu0 0.0
        %1706 = vmatprep.subr.mxu0 0.0
        %1707 = vmatpush1.msra.mxu0 0.0
        %1708 = vmatprep.subr.mxu0 0.0
        %1709 = vmatpush1.msra.mxu0 0.0
        %1710 = vmatprep.subr.mxu0 0.0
        %1711 = vmatpush1.msra.mxu0 0.0
        %1712 = vmatprep.subr.mxu0 0.0
        %1713 = vmatpush1.msra.mxu0 0.0
        %1714 = vmatprep.subr.mxu0 0.0
        %1715 = vmatpush1.msra.mxu0 0.0
        %1716 = vmatprep.subr.mxu0 0.0
        %1717 = vmatpush1.msra.mxu0 0.0
        %1718 = vmatprep.subr.mxu0 0.0
        %1719 = vmatpush1.msra.mxu0 0.0
        %1720 = vmatprep.subr.mxu0 0.0
        %1721 = vmatpush1.msra.mxu0 0.0
        %1722 = vmatprep.subr.mxu0 0.0
        %1723 = vmatpush1.msra.mxu0 0.0
        %1724 = vmatprep.subr.mxu0 0.0
        %1725 = vmatpush1.msra.mxu0 0.0
        %1726 = vmatprep.subr.mxu0 0.0
        %1727 = vmatpush1.msra.mxu0 0.0
        %1728 = vmatprep.subr.mxu0 0.0
        %1729 = vmatpush1.msra.mxu0 0.0
        %1730 = vmatprep.subr.mxu0 0.0
        %1731 = vmatpush1.msra.mxu0 0.0
        %1732 = vmatprep.subr.mxu0 0.0
        %1733 = vmatpush1.msra.mxu0 0.0
        %1734 = vmatprep.subr.mxu0 0.0
        %1735 = vmatpush1.msra.mxu0 0.0
        %1736 = vmatprep.subr.mxu0 0.0
        %1737 = vmatpush1.msra.mxu0 0.0
        %1738 = vmatprep.subr.mxu0 0.0
        %1739 = vmatpush1.msra.mxu0 0.0
        %1740 = vmatprep.subr.mxu0 0.0
        %1741 = vmatpush1.msra.mxu0 0.0
        %1742 = vmatprep.subr.mxu0 0.0
        %1743 = vmatpush1.msra.mxu0 0.0
        %1744 = vmatprep.subr.mxu0 0.0
        %1745 = vmatpush1.msra.mxu0 0.0
        %1746 = vmatprep.mubr.f32.mxu0 0.0
        %1747 = vmatmul.mubr.f32.gmra.mrb[0].mxu0 %v1680
        %v1748 = vpop.f32.mrb[0].mxu0
        %v1749 = vadd.f32 %v1602, %v1748
        %v1750 = vpop.f32.mrb[0].mxu0
        %1751 = vdwg.mxu0
        %v1752 = vmax.f32 %v1749, 0.0
        %v1753 = vadd.f32 %v1678, %v1752
        %v1755 = vsel %vm1604, %v1592, 0
        %1757 = vmatprep.subr.mxu0 0.0
        %1758 = vmatpush1.msra.mxu0 %v1593
        %1759 = vmatprep.subr.mxu0 0.0
        %1760 = vmatpush1.msra.mxu0 %v1594
        %1761 = vmatprep.subr.mxu0 0.0
        %1762 = vmatpush1.msra.mxu0 %v1595
        %1763 = vmatprep.subr.mxu0 0.0
        %1764 = vmatpush1.msra.mxu0 %v1596
        %1765 = vmatprep.subr.mxu0 0.0
        %1766 = vmatpush1.msra.mxu0 0.0
        %1767 = vmatprep.subr.mxu0 0.0
        %1768 = vmatpush1.msra.mxu0 0.0
        %1769 = vmatprep.subr.mxu0 0.0
        %1770 = vmatpush1.msra.mxu0 0.0
        %1771 = vmatprep.subr.mxu0 0.0
        %1772 = vmatpush1.msra.mxu0 0.0
        %1773 = vmatprep.subr.mxu0 0.0
        %1774 = vmatpush1.msra.mxu0 0.0
        %1775 = vmatprep.subr.mxu0 0.0
        %1776 = vmatpush1.msra.mxu0 0.0
        %1777 = vmatprep.subr.mxu0 0.0
        %1778 = vmatpush1.msra.mxu0 0.0
        %1779 = vmatprep.subr.mxu0 0.0
        %1780 = vmatpush1.msra.mxu0 0.0
        %1781 = vmatprep.subr.mxu0 0.0
        %1782 = vmatpush1.msra.mxu0 0.0
        %1783 = vmatprep.subr.mxu0 0.0
        %1784 = vmatpush1.msra.mxu0 0.0
        %1785 = vmatprep.subr.mxu0 0.0
        %1786 = vmatpush1.msra.mxu0 0.0
        %1787 = vmatprep.subr.mxu0 0.0
        %1788 = vmatpush1.msra.mxu0 0.0
        %1789 = vmatprep.subr.mxu0 0.0
        %1790 = vmatpush1.msra.mxu0 0.0
        %1791 = vmatprep.subr.mxu0 0.0
        %1792 = vmatpush1.msra.mxu0 0.0
        %1793 = vmatprep.subr.mxu0 0.0
        %1794 = vmatpush1.msra.mxu0 0.0
        %1795 = vmatprep.subr.mxu0 0.0
        %1796 = vmatpush1.msra.mxu0 0.0
        %1797 = vmatprep.subr.mxu0 0.0
        %1798 = vmatpush1.msra.mxu0 0.0
        %1799 = vmatprep.subr.mxu0 0.0
        %1800 = vmatpush1.msra.mxu0 0.0
        %1801 = vmatprep.subr.mxu0 0.0
        %1802 = vmatpush1.msra.mxu0 0.0
        %1803 = vmatprep.subr.mxu0 0.0
        %1804 = vmatpush1.msra.mxu0 0.0
        %1805 = vmatprep.subr.mxu0 0.0
        %1806 = vmatpush1.msra.mxu0 0.0
        %1807 = vmatprep.subr.mxu0 0.0
        %1808 = vmatpush1.msra.mxu0 0.0
        %1809 = vmatprep.subr.mxu0 0.0
        %1810 = vmatpush1.msra.mxu0 0.0
        %1811 = vmatprep.subr.mxu0 0.0
        %1812 = vmatpush1.msra.mxu0 0.0
        %1813 = vmatprep.subr.mxu0 0.0
        %1814 = vmatpush1.msra.mxu0 0.0
        %1815 = vmatprep.subr.mxu0 0.0
        %1816 = vmatpush1.msra.mxu0 0.0
        %1817 = vmatprep.subr.mxu0 0.0
        %1818 = vmatpush1.msra.mxu0 0.0
        %1819 = vmatprep.subr.mxu0 0.0
        %1820 = vmatpush1.msra.mxu0 0.0
        %1821 = vmatprep.mubr.f32.mxu0 0.0
        %1822 = vmatmul.mubr.f32.gmra.mrb[0].mxu0 %v1755
        %v1823 = vpop.f32.mrb[0].mxu0
        %v1824 = vadd.f32 %v1602, %v1823
        %v1825 = vpop.f32.mrb[0].mxu0
        %1826 = vdwg.mxu0
        %v1827 = vmax.f32 %v1824, 0.0
        %v1828 = vadd.f32 %v1753, %v1827
        %v1829 = vld [vmem:[%s21] sm:$0xff]
        %v1830 = vld [vmem:[%s21 + $0x8] sm:$0xff]
        %v1831 = vld [vmem:[%s21 + $0x10] sm:$0xff]
        %v1832 = vld [vmem:[%s21 + $0x18] sm:$0xff]
        %v1833 = vld [vmem:[%s22] sm:$0x1]
        %v1835 = vlaneseq
        %v1836 = vshrl.u32 %v1835, 7
        %v1837 = vsub.s32 0, %v1836
        %v1838 = vrot.slane %v1833, %v1837
        %v1841 = vsel %vm1604, %v1828, 0
        %1843 = vmatprep.subr.mxu0 0.0
        %1844 = vmatpush1.msra.mxu0 %v1829
        %1845 = vmatprep.subr.mxu0 0.0
        %1846 = vmatpush1.msra.mxu0 %v1830
        %1847 = vmatprep.subr.mxu0 0.0
        %1848 = vmatpush1.msra.mxu0 %v1831
        %1849 = vmatprep.subr.mxu0 0.0
        %1850 = vmatpush1.msra.mxu0 %v1832
        %1851 = vmatprep.subr.mxu0 0.0
        %1852 = vmatpush1.msra.mxu0 0.0
        %1853 = vmatprep.subr.mxu0 0.0
        %1854 = vmatpush1.msra.mxu0 0.0
        %1855 = vmatprep.subr.mxu0 0.0
        %1856 = vmatpush1.msra.mxu0 0.0
        %1857 = vmatprep.subr.mxu0 0.0
        %1858 = vmatpush1.msra.mxu0 0.0
        %1859 = vmatprep.subr.mxu0 0.0
        %1860 = vmatpush1.msra.mxu0 0.0
        %1861 = vmatprep.subr.mxu0 0.0
        %1862 = vmatpush1.msra.mxu0 0.0
        %1863 = vmatprep.subr.mxu0 0.0
        %1864 = vmatpush1.msra.mxu0 0.0
        %1865 = vmatprep.subr.mxu0 0.0
        %1866 = vmatpush1.msra.mxu0 0.0
        %1867 = vmatprep.subr.mxu0 0.0
        %1868 = vmatpush1.msra.mxu0 0.0
        %1869 = vmatprep.subr.mxu0 0.0
        %1870 = vmatpush1.msra.mxu0 0.0
        %1871 = vmatprep.subr.mxu0 0.0
        %1872 = vmatpush1.msra.mxu0 0.0
        %1873 = vmatprep.subr.mxu0 0.0
        %1874 = vmatpush1.msra.mxu0 0.0
        %1875 = vmatprep.subr.mxu0 0.0
        %1876 = vmatpush1.msra.mxu0 0.0
        %1877 = vmatprep.subr.mxu0 0.0
        %1878 = vmatpush1.msra.mxu0 0.0
        %1879 = vmatprep.subr.mxu0 0.0
        %1880 = vmatpush1.msra.mxu0 0.0
        %1881 = vmatprep.subr.mxu0 0.0
        %1882 = vmatpush1.msra.mxu0 0.0
        %1883 = vmatprep.subr.mxu0 0.0
        %1884 = vmatpush1.msra.mxu0 0.0
        %1885 = vmatprep.subr.mxu0 0.0
        %1886 = vmatpush1.msra.mxu0 0.0
        %1887 = vmatprep.subr.mxu0 0.0
        %1888 = vmatpush1.msra.mxu0 0.0
        %1889 = vmatprep.subr.mxu0 0.0
        %1890 = vmatpush1.msra.mxu0 0.0
        %1891 = vmatprep.subr.mxu0 0.0
        %1892 = vmatpush1.msra.mxu0 0.0
        %1893 = vmatprep.subr.mxu0 0.0
        %1894 = vmatpush1.msra.mxu0 0.0
        %1895 = vmatprep.subr.mxu0 0.0
        %1896 = vmatpush1.msra.mxu0 0.0
        %1897 = vmatprep.subr.mxu0 0.0
        %1898 = vmatpush1.msra.mxu0 0.0
        %1899 = vmatprep.subr.mxu0 0.0
        %1900 = vmatpush1.msra.mxu0 0.0
        %1901 = vmatprep.subr.mxu0 0.0
        %1902 = vmatpush1.msra.mxu0 0.0
        %1903 = vmatprep.subr.mxu0 0.0
        %1904 = vmatpush1.msra.mxu0 0.0
        %1905 = vmatprep.subr.mxu0 0.0
        %1906 = vmatpush1.msra.mxu0 0.0
        %1907 = vmatprep.mubr.f32.mxu0 0.0
        %1908 = vmatmul.mubr.f32.gmra.mrb[0].mxu0 %v1841
        %v1909 = vpop.f32.mrb[0].mxu0
        %v1910 = vadd.f32 %v1838, %v1909
        %v1911 = vpop.f32.mrb[0].mxu0
        %1912 = vdwg.mxu0
        %1913 = vst [vmem:[%s843] sm:$0xff] %v1910
        %v1914 = vld [vmem:[%s16] sm:$0xff]
        %v1915 = vld [vmem:[%s16 + $0x8] sm:$0xff]
        %v1916 = vld [vmem:[%s16 + $0x10] sm:$0xff]
        %v1917 = vld [vmem:[%s16 + $0x18] sm:$0xff]
        %1918 = vmatprep.subr.mxu0 0.0
        %1919 = vmatpush1.msra.mxu0 %v1914
        %1920 = vmatprep.subr.mxu0 0.0
        %1921 = vmatpush1.msra.mxu0 %v1915
        %1922 = vmatprep.subr.mxu0 0.0
        %1923 = vmatpush1.msra.mxu0 %v1916
        %1924 = vmatprep.subr.mxu0 0.0
        %1925 = vmatpush1.msra.mxu0 %v1917
        %1926 = vmatprep.subr.mxu0 0.0
        %1927 = vmatpush1.msra.mxu0 0.0
        %1928 = vmatprep.subr.mxu0 0.0
        %1929 = vmatpush1.msra.mxu0 0.0
        %1930 = vmatprep.subr.mxu0 0.0
        %1931 = vmatpush1.msra.mxu0 0.0
        %1932 = vmatprep.subr.mxu0 0.0
        %1933 = vmatpush1.msra.mxu0 0.0
        %1934 = vmatprep.subr.mxu0 0.0
        %1935 = vmatpush1.msra.mxu0 0.0
        %1936 = vmatprep.subr.mxu0 0.0
        %1937 = vmatpush1.msra.mxu0 0.0
        %1938 = vmatprep.subr.mxu0 0.0
        %1939 = vmatpush1.msra.mxu0 0.0
        %1940 = vmatprep.subr.mxu0 0.0
        %1941 = vmatpush1.msra.mxu0 0.0
        %1942 = vmatprep.subr.mxu0 0.0
        %1943 = vmatpush1.msra.mxu0 0.0
        %1944 = vmatprep.subr.mxu0 0.0
        %1945 = vmatpush1.msra.mxu0 0.0
        %1946 = vmatprep.subr.mxu0 0.0
        %1947 = vmatpush1.msra.mxu0 0.0
        %1948 = vmatprep.subr.mxu0 0.0
        %1949 = vmatpush1.msra.mxu0 0.0
        %1950 = vmatprep.subr.mxu0 0.0
        %1951 = vmatpush1.msra.mxu0 0.0
        %1952 = vmatprep.subr.mxu0 0.0
        %1953 = vmatpush1.msra.mxu0 0.0
        %1954 = vmatprep.subr.mxu0 0.0
        %1955 = vmatpush1.msra.mxu0 0.0
        %1956 = vmatprep.subr.mxu0 0.0
        %1957 = vmatpush1.msra.mxu0 0.0
        %1958 = vmatprep.subr.mxu0 0.0
        %1959 = vmatpush1.msra.mxu0 0.0
        %1960 = vmatprep.subr.mxu0 0.0
        %1961 = vmatpush1.msra.mxu0 0.0
        %1962 = vmatprep.subr.mxu0 0.0
        %1963 = vmatpush1.msra.mxu0 0.0
        %1964 = vmatprep.subr.mxu0 0.0
        %1965 = vmatpush1.msra.mxu0 0.0
        %1966 = vmatprep.subr.mxu0 0.0
        %1967 = vmatpush1.msra.mxu0 0.0
        %1968 = vmatprep.subr.mxu0 0.0
        %1969 = vmatpush1.msra.mxu0 0.0
        %1970 = vmatprep.subr.mxu0 0.0
        %1971 = vmatpush1.msra.mxu0 0.0
        %1972 = vmatprep.subr.mxu0 0.0
        %1973 = vmatpush1.msra.mxu0 0.0
        %1974 = vmatprep.subr.mxu0 0.0
        %1975 = vmatpush1.msra.mxu0 0.0
        %1976 = vmatprep.subr.mxu0 0.0
        %1977 = vmatpush1.msra.mxu0 0.0
        %1978 = vmatprep.subr.mxu0 0.0
        %1979 = vmatpush1.msra.mxu0 0.0
        %1980 = vmatprep.subr.mxu0 0.0
        %1981 = vmatpush1.msra.mxu0 0.0
        %1982 = vmatprep.mubr.f32.mxu0 0.0
        %1983 = vmatmul.mubr.f32.gmra.mrb[0].mxu0 %v1841
        %v1984 = vpop.f32.mrb[0].mxu0
        %v1985 = vadd.f32 0.0, %v1984
        %v1986 = vpop.f32.mrb[0].mxu0
        %1987 = vdwg.mxu0
        %v1988 = vlaneseq
        %v1989 = vand.u32 %v1988, 127
        %vm1990 = vcmp.lt.s32.totalorder %v1989, 8
        %vm1991 = vcmp.ge.s32.totalorder %v1989, 8
        %vm1992 = vcmp.lt.s32.totalorder %v1989, 12
        %vm1993 = vmand %vm1991, %vm1992
        %v1994 = vld [vmem:[%s17] sm:$0xff]
        %v1995 = vld [vmem:[%s17 + $0x8] sm:$0xff]
        %v1996 = vld [vmem:[%s17 + $0x10] sm:$0xff]
        %v1997 = vld [vmem:[%s17 + $0x18] sm:$0xff]
        %1998 = vmatprep.subr.mxu0 0.0
        %1999 = vmatpush1.msra.mxu0 %v1994
        %2000 = vmatprep.subr.mxu0 0.0
        %2001 = vmatpush1.msra.mxu0 %v1995
        %2002 = vmatprep.subr.mxu0 0.0
        %2003 = vmatpush1.msra.mxu0 %v1996
        %2004 = vmatprep.subr.mxu0 0.0
        %2005 = vmatpush1.msra.mxu0 %v1997
        %2006 = vmatprep.subr.mxu0 0.0
        %2007 = vmatpush1.msra.mxu0 0.0
        %2008 = vmatprep.subr.mxu0 0.0
        %2009 = vmatpush1.msra.mxu0 0.0
        %2010 = vmatprep.subr.mxu0 0.0
        %2011 = vmatpush1.msra.mxu0 0.0
        %2012 = vmatprep.subr.mxu0 0.0
        %2013 = vmatpush1.msra.mxu0 0.0
        %2014 = vmatprep.subr.mxu0 0.0
        %2015 = vmatpush1.msra.mxu0 0.0
        %2016 = vmatprep.subr.mxu0 0.0
        %2017 = vmatpush1.msra.mxu0 0.0
        %2018 = vmatprep.subr.mxu0 0.0
        %2019 = vmatpush1.msra.mxu0 0.0
        %2020 = vmatprep.subr.mxu0 0.0
        %2021 = vmatpush1.msra.mxu0 0.0
        %2022 = vmatprep.subr.mxu0 0.0
        %2023 = vmatpush1.msra.mxu0 0.0
        %2024 = vmatprep.subr.mxu0 0.0
        %2025 = vmatpush1.msra.mxu0 0.0
        %2026 = vmatprep.subr.mxu0 0.0
        %2027 = vmatpush1.msra.mxu0 0.0
        %2028 = vmatprep.subr.mxu0 0.0
        %2029 = vmatpush1.msra.mxu0 0.0
        %2030 = vmatprep.subr.mxu0 0.0
        %2031 = vmatpush1.msra.mxu0 0.0
        %2032 = vmatprep.subr.mxu0 0.0
        %2033 = vmatpush1.msra.mxu0 0.0
        %2034 = vmatprep.subr.mxu0 0.0
        %2035 = vmatpush1.msra.mxu0 0.0
        %2036 = vmatprep.subr.mxu0 0.0
        %2037 = vmatpush1.msra.mxu0 0.0
        %2038 = vmatprep.subr.mxu0 0.0
        %2039 = vmatpush1.msra.mxu0 0.0
        %2040 = vmatprep.subr.mxu0 0.0
        %2041 = vmatpush1.msra.mxu0 0.0
        %2042 = vmatprep.subr.mxu0 0.0
        %2043 = vmatpush1.msra.mxu0 0.0
        %2044 = vmatprep.subr.mxu0 0.0
        %2045 = vmatpush1.msra.mxu0 0.0
        %2046 = vmatprep.subr.mxu0 0.0
        %2047 = vmatpush1.msra.mxu0 0.0
        %2048 = vmatprep.subr.mxu0 0.0
        %2049 = vmatpush1.msra.mxu0 0.0
        %2050 = vmatprep.subr.mxu0 0.0
        %2051 = vmatpush1.msra.mxu0 0.0
        %2052 = vmatprep.subr.mxu0 0.0
        %2053 = vmatpush1.msra.mxu0 0.0
        %2054 = vmatprep.subr.mxu0 0.0
        %2055 = vmatpush1.msra.mxu0 0.0
        %2056 = vmatprep.subr.mxu0 0.0
        %2057 = vmatpush1.msra.mxu0 0.0
        %2058 = vmatprep.subr.mxu0 0.0
        %2059 = vmatpush1.msra.mxu0 0.0
        %2060 = vmatprep.subr.mxu0 0.0
        %2061 = vmatpush1.msra.mxu0 0.0
        %2062 = vmatprep.mubr.f32.mxu0 0.0
        %2063 = vmatmul.mubr.f32.gmra.mrb[0].mxu0 %v1606
        %v2064 = vpop.f32.mrb[0].mxu0
        %v2065 = vadd.f32 %v1985, %v2064
        %v2066 = vpop.f32.mrb[0].mxu0
        %2067 = vdwg.mxu0
        %v2068 = vld [vmem:[%s18] sm:$0x1]
        %v2070 = vlaneseq
        %v2071 = vshrl.u32 %v2070, 7
        %v2072 = vsub.s32 0, %v2071
        %v2073 = vrot.slane %v2068, %v2072
        %v2075 = vadd.f32 %v2065, %v2073
        %v2076 = vmax.f32 %v2075, 0.0
        %v2077 = vld [vmem:[%s19] sm:$0xff]
        %v2078 = vld [vmem:[%s19 + $0x8] sm:$0xff]
        %v2079 = vld [vmem:[%s19 + $0x10] sm:$0xff]
        %v2080 = vld [vmem:[%s19 + $0x18] sm:$0xff]
        %v2081 = vld [vmem:[%s20] sm:$0x1]
        %v2083 = vlaneseq
        %v2084 = vshrl.u32 %v2083, 7
        %v2085 = vsub.s32 0, %v2084
        %v2086 = vrot.slane %v2081, %v2085
        %v2089 = vsel %vm1604, %v2076, 0
        %2091 = vmatprep.subr.mxu0 0.0
        %2092 = vmatpush1.msra.mxu0 %v2077
        %2093 = vmatprep.subr.mxu0 0.0
        %2094 = vmatpush1.msra.mxu0 %v2078
        %2095 = vmatprep.subr.mxu0 0.0
        %2096 = vmatpush1.msra.mxu0 %v2079
        %2097 = vmatprep.subr.mxu0 0.0
        %2098 = vmatpush1.msra.mxu0 %v2080
        %2099 = vmatprep.subr.mxu0 0.0
        %2100 = vmatpush1.msra.mxu0 0.0
        %2101 = vmatprep.subr.mxu0 0.0
        %2102 = vmatpush1.msra.mxu0 0.0
        %2103 = vmatprep.subr.mxu0 0.0
        %2104 = vmatpush1.msra.mxu0 0.0
        %2105 = vmatprep.subr.mxu0 0.0
        %2106 = vmatpush1.msra.mxu0 0.0
        %2107 = vmatprep.subr.mxu0 0.0
        %2108 = vmatpush1.msra.mxu0 0.0
        %2109 = vmatprep.subr.mxu0 0.0
        %2110 = vmatpush1.msra.mxu0 0.0
        %2111 = vmatprep.subr.mxu0 0.0
        %2112 = vmatpush1.msra.mxu0 0.0
        %2113 = vmatprep.subr.mxu0 0.0
        %2114 = vmatpush1.msra.mxu0 0.0
        %2115 = vmatprep.subr.mxu0 0.0
        %2116 = vmatpush1.msra.mxu0 0.0
        %2117 = vmatprep.subr.mxu0 0.0
        %2118 = vmatpush1.msra.mxu0 0.0
        %2119 = vmatprep.subr.mxu0 0.0
        %2120 = vmatpush1.msra.mxu0 0.0
        %2121 = vmatprep.subr.mxu0 0.0
        %2122 = vmatpush1.msra.mxu0 0.0
        %2123 = vmatprep.subr.mxu0 0.0
        %2124 = vmatpush1.msra.mxu0 0.0
        %2125 = vmatprep.subr.mxu0 0.0
        %2126 = vmatpush1.msra.mxu0 0.0
        %2127 = vmatprep.subr.mxu0 0.0
        %2128 = vmatpush1.msra.mxu0 0.0
        %2129 = vmatprep.subr.mxu0 0.0
        %2130 = vmatpush1.msra.mxu0 0.0
        %2131 = vmatprep.subr.mxu0 0.0
        %2132 = vmatpush1.msra.mxu0 0.0
        %2133 = vmatprep.subr.mxu0 0.0
        %2134 = vmatpush1.msra.mxu0 0.0
        %2135 = vmatprep.subr.mxu0 0.0
        %2136 = vmatpush1.msra.mxu0 0.0
        %2137 = vmatprep.subr.mxu0 0.0
        %2138 = vmatpush1.msra.mxu0 0.0
        %2139 = vmatprep.subr.mxu0 0.0
        %2140 = vmatpush1.msra.mxu0 0.0
        %2141 = vmatprep.subr.mxu0 0.0
        %2142 = vmatpush1.msra.mxu0 0.0
        %2143 = vmatprep.subr.mxu0 0.0
        %2144 = vmatpush1.msra.mxu0 0.0
        %2145 = vmatprep.subr.mxu0 0.0
        %2146 = vmatpush1.msra.mxu0 0.0
        %2147 = vmatprep.subr.mxu0 0.0
        %2148 = vmatpush1.msra.mxu0 0.0
        %2149 = vmatprep.subr.mxu0 0.0
        %2150 = vmatpush1.msra.mxu0 0.0
        %2151 = vmatprep.subr.mxu0 0.0
        %2152 = vmatpush1.msra.mxu0 0.0
        %2153 = vmatprep.subr.mxu0 0.0
        %2154 = vmatpush1.msra.mxu0 0.0
        %2155 = vmatprep.mubr.f32.mxu0 0.0
        %2156 = vmatmul.mubr.f32.gmra.mrb[0].mxu0 %v2089
        %v2157 = vpop.f32.mrb[0].mxu0
        %v2158 = vadd.f32 %v2086, %v2157
        %v2159 = vpop.f32.mrb[0].mxu0
        %2160 = vdwg.mxu0
        %v2161 = vsel %vm1990, %v2158, -inf
        %2162 = vmax.xlane.f32.xlu0 %v2161
        %v2163 = vpop.xlane.xlu0 %2162
        %v2164 = vsel %vm1993, %v2158, -inf
        %2165 = vmax.xlane.f32.xlu0 %v2164
        %v2166 = vpop.xlane.xlu0 %2165
        %v2167 = vsel %vm1990, %v2163, %v2166
        %v2168 = vsub.f32 %v2158, %v2167
        %v2169 = vmul.f32 %v2168, 1.442695
        %v2170 = vpow.pop %v2169
        %v2171 = vsel %vm1990, %v2170, 0.0
        %2172 = vadd.xlane.f32.xlu0 %v2171
        %v2173 = vpop.xlane.xlu0 %2172
        %v2174 = vsel %vm1993, %v2170, 0.0
        %2175 = vadd.xlane.f32.xlu0 %v2174
        %v2176 = vpop.xlane.xlu0 %2175
        %v2177 = vsel %vm1990, %v2173, %v2176
        %v2178 = vrcp.pop %v2177
        %v2179 = vmul.f32 %v2170, %v2178
        %2180 = vst [vmem:[%s836] sm:$0xff] %v2179
        %v2181 = vld [vmem:[%s17] sm:$0xff]
        %v2182 = vld [vmem:[%s17 + $0x8] sm:$0xff]
        %v2183 = vld [vmem:[%s17 + $0x10] sm:$0xff]
        %v2184 = vld [vmem:[%s17 + $0x18] sm:$0xff]
        %2185 = vmatprep.subr.mxu0 0.0
        %2186 = vmatpush1.msra.mxu0 %v2181
        %2187 = vmatprep.subr.mxu0 0.0
        %2188 = vmatpush1.msra.mxu0 %v2182
        %2189 = vmatprep.subr.mxu0 0.0
        %2190 = vmatpush1.msra.mxu0 %v2183
        %2191 = vmatprep.subr.mxu0 0.0
        %2192 = vmatpush1.msra.mxu0 %v2184
        %2193 = vmatprep.subr.mxu0 0.0
        %2194 = vmatpush1.msra.mxu0 0.0
        %2195 = vmatprep.subr.mxu0 0.0
        %2196 = vmatpush1.msra.mxu0 0.0
        %2197 = vmatprep.subr.mxu0 0.0
        %2198 = vmatpush1.msra.mxu0 0.0
        %2199 = vmatprep.subr.mxu0 0.0
        %2200 = vmatpush1.msra.mxu0 0.0
        %2201 = vmatprep.subr.mxu0 0.0
        %2202 = vmatpush1.msra.mxu0 0.0
        %2203 = vmatprep.subr.mxu0 0.0
        %2204 = vmatpush1.msra.mxu0 0.0
        %2205 = vmatprep.subr.mxu0 0.0
        %2206 = vmatpush1.msra.mxu0 0.0
        %2207 = vmatprep.subr.mxu0 0.0
        %2208 = vmatpush1.msra.mxu0 0.0
        %2209 = vmatprep.subr.mxu0 0.0
        %2210 = vmatpush1.msra.mxu0 0.0
        %2211 = vmatprep.subr.mxu0 0.0
        %2212 = vmatpush1.msra.mxu0 0.0
        %2213 = vmatprep.subr.mxu0 0.0
        %2214 = vmatpush1.msra.mxu0 0.0
        %2215 = vmatprep.subr.mxu0 0.0
        %2216 = vmatpush1.msra.mxu0 0.0
        %2217 = vmatprep.subr.mxu0 0.0
        %2218 = vmatpush1.msra.mxu0 0.0
        %2219 = vmatprep.subr.mxu0 0.0
        %2220 = vmatpush1.msra.mxu0 0.0
        %2221 = vmatprep.subr.mxu0 0.0
        %2222 = vmatpush1.msra.mxu0 0.0
        %2223 = vmatprep.subr.mxu0 0.0
        %2224 = vmatpush1.msra.mxu0 0.0
        %2225 = vmatprep.subr.mxu0 0.0
        %2226 = vmatpush1.msra.mxu0 0.0
        %2227 = vmatprep.subr.mxu0 0.0
        %2228 = vmatpush1.msra.mxu0 0.0
        %2229 = vmatprep.subr.mxu0 0.0
        %2230 = vmatpush1.msra.mxu0 0.0
        %2231 = vmatprep.subr.mxu0 0.0
        %2232 = vmatpush1.msra.mxu0 0.0
        %2233 = vmatprep.subr.mxu0 0.0
        %2234 = vmatpush1.msra.mxu0 0.0
        %2235 = vmatprep.subr.mxu0 0.0
        %2236 = vmatpush1.msra.mxu0 0.0
        %2237 = vmatprep.subr.mxu0 0.0
        %2238 = vmatpush1.msra.mxu0 0.0
        %2239 = vmatprep.subr.mxu0 0.0
        %2240 = vmatpush1.msra.mxu0 0.0
        %2241 = vmatprep.subr.mxu0 0.0
        %2242 = vmatpush1.msra.mxu0 0.0
        %2243 = vmatprep.subr.mxu0 0.0
        %2244 = vmatpush1.msra.mxu0 0.0
        %2245 = vmatprep.subr.mxu0 0.0
        %2246 = vmatpush1.msra.mxu0 0.0
        %2247 = vmatprep.subr.mxu0 0.0
        %2248 = vmatpush1.msra.mxu0 0.0
        %2249 = vmatprep.mubr.f32.mxu0 0.0
        %2250 = vmatmul.mubr.f32.gmra.mrb[0].mxu0 %v1680
        %v2251 = vpop.f32.mrb[0].mxu0
        %v2252 = vadd.f32 %v1985, %v2251
        %v2253 = vpop.f32.mrb[0].mxu0
        %2254 = vdwg.mxu0
        %v2255 = vld [vmem:[%s18] sm:$0x1]
        %v2257 = vlaneseq
        %v2258 = vshrl.u32 %v2257, 7
        %v2259 = vsub.s32 0, %v2258
        %v2260 = vrot.slane %v2255, %v2259
        %v2262 = vadd.f32 %v2252, %v2260
        %v2263 = vmax.f32 %v2262, 0.0
        %v2264 = vld [vmem:[%s19] sm:$0xff]
        %v2265 = vld [vmem:[%s19 + $0x8] sm:$0xff]
        %v2266 = vld [vmem:[%s19 + $0x10] sm:$0xff]
        %v2267 = vld [vmem:[%s19 + $0x18] sm:$0xff]
        %v2268 = vld [vmem:[%s20] sm:$0x1]
        %v2270 = vlaneseq
        %v2271 = vshrl.u32 %v2270, 7
        %v2272 = vsub.s32 0, %v2271
        %v2273 = vrot.slane %v2268, %v2272
        %v2276 = vsel %vm1604, %v2263, 0
        %2278 = vmatprep.subr.mxu0 0.0
        %2279 = vmatpush1.msra.mxu0 %v2264
        %2280 = vmatprep.subr.mxu0 0.0
        %2281 = vmatpush1.msra.mxu0 %v2265
        %2282 = vmatprep.subr.mxu0 0.0
        %2283 = vmatpush1.msra.mxu0 %v2266
        %2284 = vmatprep.subr.mxu0 0.0
        %2285 = vmatpush1.msra.mxu0 %v2267
        %2286 = vmatprep.subr.mxu0 0.0
        %2287 = vmatpush1.msra.mxu0 0.0
        %2288 = vmatprep.subr.mxu0 0.0
        %2289 = vmatpush1.msra.mxu0 0.0
        %2290 = vmatprep.subr.mxu0 0.0
        %2291 = vmatpush1.msra.mxu0 0.0
        %2292 = vmatprep.subr.mxu0 0.0
        %2293 = vmatpush1.msra.mxu0 0.0
        %2294 = vmatprep.subr.mxu0 0.0
        %2295 = vmatpush1.msra.mxu0 0.0
        %2296 = vmatprep.subr.mxu0 0.0
        %2297 = vmatpush1.msra.mxu0 0.0
        %2298 = vmatprep.subr.mxu0 0.0
        %2299 = vmatpush1.msra.mxu0 0.0
        %2300 = vmatprep.subr.mxu0 0.0
        %2301 = vmatpush1.msra.mxu0 0.0
        %2302 = vmatprep.subr.mxu0 0.0
        %2303 = vmatpush1.msra.mxu0 0.0
        %2304 = vmatprep.subr.mxu0 0.0
        %2305 = vmatpush1.msra.mxu0 0.0
        %2306 = vmatprep.subr.mxu0 0.0
        %2307 = vmatpush1.msra.mxu0 0.0
        %2308 = vmatprep.subr.mxu0 0.0
        %2309 = vmatpush1.msra.mxu0 0.0
        %2310 = vmatprep.subr.mxu0 0.0
        %2311 = vmatpush1.msra.mxu0 0.0
        %2312 = vmatprep.subr.mxu0 0.0
        %2313 = vmatpush1.msra.mxu0 0.0
        %2314 = vmatprep.subr.mxu0 0.0
        %2315 = vmatpush1.msra.mxu0 0.0
        %2316 = vmatprep.subr.mxu0 0.0
        %2317 = vmatpush1.msra.mxu0 0.0
        %2318 = vmatprep.subr.mxu0 0.0
        %2319 = vmatpush1.msra.mxu0 0.0
        %2320 = vmatprep.subr.mxu0 0.0
        %2321 = vmatpush1.msra.mxu0 0.0
        %2322 = vmatprep.subr.mxu0 0.0
        %2323 = vmatpush1.msra.mxu0 0.0
        %2324 = vmatprep.subr.mxu0 0.0
        %2325 = vmatpush1.msra.mxu0 0.0
        %2326 = vmatprep.subr.mxu0 0.0
        %2327 = vmatpush1.msra.mxu0 0.0
        %2328 = vmatprep.subr.mxu0 0.0
        %2329 = vmatpush1.msra.mxu0 0.0
        %2330 = vmatprep.subr.mxu0 0.0
        %2331 = vmatpush1.msra.mxu0 0.0
        %2332 = vmatprep.subr.mxu0 0.0
        %2333 = vmatpush1.msra.mxu0 0.0
        %2334 = vmatprep.subr.mxu0 0.0
        %2335 = vmatpush1.msra.mxu0 0.0
        %2336 = vmatprep.subr.mxu0 0.0
        %2337 = vmatpush1.msra.mxu0 0.0
        %2338 = vmatprep.subr.mxu0 0.0
        %2339 = vmatpush1.msra.mxu0 0.0
        %2340 = vmatprep.subr.mxu0 0.0
        %2341 = vmatpush1.msra.mxu0 0.0
        %2342 = vmatprep.mubr.f32.mxu0 0.0
        %2343 = vmatmul.mubr.f32.gmra.mrb[0].mxu0 %v2276
        %v2344 = vpop.f32.mrb[0].mxu0
        %v2345 = vadd.f32 %v2273, %v2344
        %v2346 = vpop.f32.mrb[0].mxu0
        %2347 = vdwg.mxu0
        %v2348 = vsel %vm1990, %v2345, -inf
        %2349 = vmax.xlane.f32.xlu0 %v2348
        %v2350 = vpop.xlane.xlu0 %2349
        %v2351 = vsel %vm1993, %v2345, -inf
        %2352 = vmax.xlane.f32.xlu0 %v2351
        %v2353 = vpop.xlane.xlu0 %2352
        %v2354 = vsel %vm1990, %v2350, %v2353
        %v2355 = vsub.f32 %v2345, %v2354
        %v2356 = vmul.f32 %v2355, 1.442695
        %v2357 = vpow.pop %v2356
        %v2358 = vsel %vm1990, %v2357, 0.0
        %2359 = vadd.xlane.f32.xlu0 %v2358
        %v2360 = vpop.xlane.xlu0 %2359
        %v2361 = vsel %vm1993, %v2357, 0.0
        %2362 = vadd.xlane.f32.xlu0 %v2361
        %v2363 = vpop.xlane.xlu0 %2362
        %v2364 = vsel %vm1990, %v2360, %v2363
        %v2365 = vrcp.pop %v2364
        %v2366 = vmul.f32 %v2357, %v2365
        %s2367 = scalar_lea.vmem %s836, 8 [#allocation2]
        %2368 = vst [vmem:[%s2367] sm:$0xff] %v2366
        %v2369 = vld [vmem:[%s17] sm:$0xff]
        %v2370 = vld [vmem:[%s17 + $0x8] sm:$0xff]
        %v2371 = vld [vmem:[%s17 + $0x10] sm:$0xff]
        %v2372 = vld [vmem:[%s17 + $0x18] sm:$0xff]
        %2373 = vmatprep.subr.mxu0 0.0
        %2374 = vmatpush1.msra.mxu0 %v2369
        %2375 = vmatprep.subr.mxu0 0.0
        %2376 = vmatpush1.msra.mxu0 %v2370
        %2377 = vmatprep.subr.mxu0 0.0
        %2378 = vmatpush1.msra.mxu0 %v2371
        %2379 = vmatprep.subr.mxu0 0.0
        %2380 = vmatpush1.msra.mxu0 %v2372
        %2381 = vmatprep.subr.mxu0 0.0
        %2382 = vmatpush1.msra.mxu0 0.0
        %2383 = vmatprep.subr.mxu0 0.0
        %2384 = vmatpush1.msra.mxu0 0.0
        %2385 = vmatprep.subr.mxu0 0.0
        %2386 = vmatpush1.msra.mxu0 0.0
        %2387 = vmatprep.subr.mxu0 0.0
        %2388 = vmatpush1.msra.mxu0 0.0
        %2389 = vmatprep.subr.mxu0 0.0
        %2390 = vmatpush1.msra.mxu0 0.0
        %2391 = vmatprep.subr.mxu0 0.0
        %2392 = vmatpush1.msra.mxu0 0.0
        %2393 = vmatprep.subr.mxu0 0.0
        %2394 = vmatpush1.msra.mxu0 0.0
        %2395 = vmatprep.subr.mxu0 0.0
        %2396 = vmatpush1.msra.mxu0 0.0
        %2397 = vmatprep.subr.mxu0 0.0
        %2398 = vmatpush1.msra.mxu0 0.0
        %2399 = vmatprep.subr.mxu0 0.0
        %2400 = vmatpush1.msra.mxu0 0.0
        %2401 = vmatprep.subr.mxu0 0.0
        %2402 = vmatpush1.msra.mxu0 0.0
        %2403 = vmatprep.subr.mxu0 0.0
        %2404 = vmatpush1.msra.mxu0 0.0
        %2405 = vmatprep.subr.mxu0 0.0
        %2406 = vmatpush1.msra.mxu0 0.0
        %2407 = vmatprep.subr.mxu0 0.0
        %2408 = vmatpush1.msra.mxu0 0.0
        %2409 = vmatprep.subr.mxu0 0.0
        %2410 = vmatpush1.msra.mxu0 0.0
        %2411 = vmatprep.subr.mxu0 0.0
        %2412 = vmatpush1.msra.mxu0 0.0
        %2413 = vmatprep.subr.mxu0 0.0
        %2414 = vmatpush1.msra.mxu0 0.0
        %2415 = vmatprep.subr.mxu0 0.0
        %2416 = vmatpush1.msra.mxu0 0.0
        %2417 = vmatprep.subr.mxu0 0.0
        %2418 = vmatpush1.msra.mxu0 0.0
        %2419 = vmatprep.subr.mxu0 0.0
        %2420 = vmatpush1.msra.mxu0 0.0
        %2421 = vmatprep.subr.mxu0 0.0
        %2422 = vmatpush1.msra.mxu0 0.0
        %2423 = vmatprep.subr.mxu0 0.0
        %2424 = vmatpush1.msra.mxu0 0.0
        %2425 = vmatprep.subr.mxu0 0.0
        %2426 = vmatpush1.msra.mxu0 0.0
        %2427 = vmatprep.subr.mxu0 0.0
        %2428 = vmatpush1.msra.mxu0 0.0
        %2429 = vmatprep.subr.mxu0 0.0
        %2430 = vmatpush1.msra.mxu0 0.0
        %2431 = vmatprep.subr.mxu0 0.0
        %2432 = vmatpush1.msra.mxu0 0.0
        %2433 = vmatprep.subr.mxu0 0.0
        %2434 = vmatpush1.msra.mxu0 0.0
        %2435 = vmatprep.subr.mxu0 0.0
        %2436 = vmatpush1.msra.mxu0 0.0
        %2437 = vmatprep.mubr.f32.mxu0 0.0
        %2438 = vmatmul.mubr.f32.gmra.mrb[0].mxu0 %v1755
        %v2439 = vpop.f32.mrb[0].mxu0
        %v2440 = vadd.f32 %v1985, %v2439
        %v2441 = vpop.f32.mrb[0].mxu0
        %2442 = vdwg.mxu0
        %v2443 = vld [vmem:[%s18] sm:$0x1]
        %v2445 = vlaneseq
        %v2446 = vshrl.u32 %v2445, 7
        %v2447 = vsub.s32 0, %v2446
        %v2448 = vrot.slane %v2443, %v2447
        %v2450 = vadd.f32 %v2440, %v2448
        %v2451 = vmax.f32 %v2450, 0.0
        %v2452 = vld [vmem:[%s19] sm:$0xff]
        %v2453 = vld [vmem:[%s19 + $0x8] sm:$0xff]
        %v2454 = vld [vmem:[%s19 + $0x10] sm:$0xff]
        %v2455 = vld [vmem:[%s19 + $0x18] sm:$0xff]
        %v2456 = vld [vmem:[%s20] sm:$0x1]
        %v2458 = vlaneseq
        %v2459 = vshrl.u32 %v2458, 7
        %v2460 = vsub.s32 0, %v2459
        %v2461 = vrot.slane %v2456, %v2460
        %v2464 = vsel %vm1604, %v2451, 0
        %2466 = vmatprep.subr.mxu0 0.0
        %2467 = vmatpush1.msra.mxu0 %v2452
        %2468 = vmatprep.subr.mxu0 0.0
        %2469 = vmatpush1.msra.mxu0 %v2453
        %2470 = vmatprep.subr.mxu0 0.0
        %2471 = vmatpush1.msra.mxu0 %v2454
        %2472 = vmatprep.subr.mxu0 0.0
        %2473 = vmatpush1.msra.mxu0 %v2455
        %2474 = vmatprep.subr.mxu0 0.0
        %2475 = vmatpush1.msra.mxu0 0.0
        %2476 = vmatprep.subr.mxu0 0.0
        %2477 = vmatpush1.msra.mxu0 0.0
        %2478 = vmatprep.subr.mxu0 0.0
        %2479 = vmatpush1.msra.mxu0 0.0
        %2480 = vmatprep.subr.mxu0 0.0
        %2481 = vmatpush1.msra.mxu0 0.0
        %2482 = vmatprep.subr.mxu0 0.0
        %2483 = vmatpush1.msra.mxu0 0.0
        %2484 = vmatprep.subr.mxu0 0.0
        %2485 = vmatpush1.msra.mxu0 0.0
        %2486 = vmatprep.subr.mxu0 0.0
        %2487 = vmatpush1.msra.mxu0 0.0
        %2488 = vmatprep.subr.mxu0 0.0
        %2489 = vmatpush1.msra.mxu0 0.0
        %2490 = vmatprep.subr.mxu0 0.0
        %2491 = vmatpush1.msra.mxu0 0.0
        %2492 = vmatprep.subr.mxu0 0.0
        %2493 = vmatpush1.msra.mxu0 0.0
        %2494 = vmatprep.subr.mxu0 0.0
        %2495 = vmatpush1.msra.mxu0 0.0
        %2496 = vmatprep.subr.mxu0 0.0
        %2497 = vmatpush1.msra.mxu0 0.0
        %2498 = vmatprep.subr.mxu0 0.0
        %2499 = vmatpush1.msra.mxu0 0.0
        %2500 = vmatprep.subr.mxu0 0.0
        %2501 = vmatpush1.msra.mxu0 0.0
        %2502 = vmatprep.subr.mxu0 0.0
        %2503 = vmatpush1.msra.mxu0 0.0
        %2504 = vmatprep.subr.mxu0 0.0
        %2505 = vmatpush1.msra.mxu0 0.0
        %2506 = vmatprep.subr.mxu0 0.0
        %2507 = vmatpush1.msra.mxu0 0.0
        %2508 = vmatprep.subr.mxu0 0.0
        %2509 = vmatpush1.msra.mxu0 0.0
        %2510 = vmatprep.subr.mxu0 0.0
        %2511 = vmatpush1.msra.mxu0 0.0
        %2512 = vmatprep.subr.mxu0 0.0
        %2513 = vmatpush1.msra.mxu0 0.0
        %2514 = vmatprep.subr.mxu0 0.0
        %2515 = vmatpush1.msra.mxu0 0.0
        %2516 = vmatprep.subr.mxu0 0.0
        %2517 = vmatpush1.msra.mxu0 0.0
        %2518 = vmatprep.subr.mxu0 0.0
        %2519 = vmatpush1.msra.mxu0 0.0
        %2520 = vmatprep.subr.mxu0 0.0
        %2521 = vmatpush1.msra.mxu0 0.0
        %2522 = vmatprep.subr.mxu0 0.0
        %2523 = vmatpush1.msra.mxu0 0.0
        %2524 = vmatprep.subr.mxu0 0.0
        %2525 = vmatpush1.msra.mxu0 0.0
        %2526 = vmatprep.subr.mxu0 0.0
        %2527 = vmatpush1.msra.mxu0 0.0
        %2528 = vmatprep.subr.mxu0 0.0
        %2529 = vmatpush1.msra.mxu0 0.0
        %2530 = vmatprep.mubr.f32.mxu0 0.0
        %2531 = vmatmul.mubr.f32.gmra.mrb[0].mxu0 %v2464
        %v2532 = vpop.f32.mrb[0].mxu0
        %v2533 = vadd.f32 %v2461, %v2532
        %v2534 = vpop.f32.mrb[0].mxu0
        %2535 = vdwg.mxu0
        %v2536 = vsel %vm1990, %v2533, -inf
        %2537 = vmax.xlane.f32.xlu0 %v2536
        %v2538 = vpop.xlane.xlu0 %2537
        %v2539 = vsel %vm1993, %v2533, -inf
        %2540 = vmax.xlane.f32.xlu0 %v2539
        %v2541 = vpop.xlane.xlu0 %2540
        %v2542 = vsel %vm1990, %v2538, %v2541
        %v2543 = vsub.f32 %v2533, %v2542
        %v2544 = vmul.f32 %v2543, 1.442695
        %v2545 = vpow.pop %v2544
        %v2546 = vsel %vm1990, %v2545, 0.0
        %2547 = vadd.xlane.f32.xlu0 %v2546
        %v2548 = vpop.xlane.xlu0 %2547
        %v2549 = vsel %vm1993, %v2545, 0.0
        %2550 = vadd.xlane.f32.xlu0 %v2549
        %v2551 = vpop.xlane.xlu0 %2550
        %v2552 = vsel %vm1990, %v2548, %v2551
        %v2553 = vrcp.pop %v2552
        %v2554 = vmul.f32 %v2545, %v2553
        %s2555 = scalar_lea.vmem %s836, 16 [#allocation2]
        %2556 = vst [vmem:[%s2555] sm:$0xff] %v2554
        %s2557 = sand.u32 %s578, 1
        %s2558 = scalar_lea.sflag [#allocation3], %s2557
        %s2559 = sand.u32 %s578, 1
        %s2560 = smul.addr %s2559, 24
        %s2561 = scalar_lea.vmem [#allocation2], %s2560
        %s2562 = sand.u32 %s604, 1
        %s2563 = scalar_lea.sflag [#allocation5], %s2562
        %s2564 = sand.u32 %s604, 1
        %s2565 = smul.addr %s2564, 8
        %s2566 = scalar_lea.vmem [#allocation4], %s2565
        // Predicated region
        $region113: #{tpu_custom_call.1} parent=111 // pred_check
          %p2567 = pneg %p588
        $region114: #{tpu_custom_call.1} parent=111 // pred_check_branch
          %2569 = sbr.rel (%p2567) target = $region116
        $region115: #{tpu_custom_call.1} parent=111 // pred_region
          %s2571 = ssub.s32 384, 384
          %2572 = vsyncadd %s2558, %s2571
          %s2573 = smul.addr %s42, 128
          %s2574 = scalar_lea.hbm %s23, %s2573
          %s2575 = sshll.u32 %s2561, 4
          %s2576 = int_to_ptr.vmem [resolvable:$true] %s2575
          %2581 = dma.vmem_to_hbm [thread:$0]  %s2576, 384, %s2574, %s2558, 128, 384, 8
        $region116: #{tpu_custom_call.1} parent=111 // pred_fallthru
          _
        // Predicated region
        $region117: #{tpu_custom_call.1} parent=111 // pred_check
          %p2582 = pneg %p614
        $region118: #{tpu_custom_call.1} parent=111 // pred_check_branch
          %2584 = sbr.rel (%p2582) target = $region120
        $region119: #{tpu_custom_call.1} parent=111 // pred_region
          %s2586 = ssub.s32 128, 128
          %2587 = vsyncadd %s2563, %s2586
          %s2588 = smul.addr %s42, 128
          %s2589 = scalar_lea.hbm %s24, %s2588
          %s2591 = sshll.u32 %s2566, 4
          %s2592 = int_to_ptr.vmem [resolvable:$true] %s2591
          %2594 = dma.vmem_to_hbm [thread:$0]  %s2592, 128, %s2589, %s2563
        $region120: #{tpu_custom_call.1} parent=111 // pred_fallthru
          _
      $region112: #{tpu_custom_call.1} parent=5 // pred_fallthru
        _
      %p2595 = scmp.le.s32.totalorder 2, %s37
      // Predicated region
      $region121: #{tpu_custom_call.1} parent=5 // pred_check
        %p2596 = pneg %p2595
      $region122: #{tpu_custom_call.1} parent=5 // pred_check_branch
        %2598 = sbr.rel (%p2596) target = $region124
      $region123: #{tpu_custom_call.1} parent=5 // pred_region
        %s2599 = ssub.s32 %s37, 2
        // Predicated region
        $region125: #{tpu_custom_call.1} parent=123 // pred_check
          %p2600 = pneg %p594
        $region126: #{tpu_custom_call.1} parent=123 // pred_check_branch
          %2602 = sbr.rel (%p2600) target = $region128
        $region127: #{tpu_custom_call.1} parent=123 // pred_region
          %s2603 = sand.u32 %s579, 1
          %s2604 = scalar_lea.sflag [#allocation3], %s2603
          %s2605 = sand.u32 %s579, 1
          %s2606 = smul.addr %s2605, 24
          %s2607 = scalar_lea.vmem [#allocation2], %s2606
          %2608 = dma.done %s2604, 384
        $region128: #{tpu_custom_call.1} parent=123 // pred_fallthru
          _
        // Predicated region
        $region129: #{tpu_custom_call.1} parent=123 // pred_check
          %p2609 = pneg %p620
        $region130: #{tpu_custom_call.1} parent=123 // pred_check_branch
          %2611 = sbr.rel (%p2609) target = $region132
        $region131: #{tpu_custom_call.1} parent=123 // pred_region
          %s2612 = sand.u32 %s605, 1
          %s2613 = scalar_lea.sflag [#allocation5], %s2612
          %s2614 = sand.u32 %s605, 1
          %s2615 = smul.addr %s2614, 8
          %s2616 = scalar_lea.vmem [#allocation4], %s2615
          %2617 = dma.done %s2613, 128
        $region132: #{tpu_custom_call.1} parent=123 // pred_fallthru
          _
      $region124: #{tpu_custom_call.1} parent=5 // pred_fallthru
        _
    $region6: #{tpu_custom_call.1} parent=1 // loop_footer
      %s41 = sadd.s32 1, %s37
    $region7: #{tpu_custom_call.1} parent=1 // loop_footer_branch
      %36 = sbr.rel target = $region3
    $region8: #{tpu_custom_call.1} parent=1 // loop_exit
      _
    %2618 = vsyncpa [#allocation3], 1
    %s2619 = scalar_lea.sflag [#allocation3], 1
    %2620 = vsyncpa %s2619, 1
    %2621 = vsyncpa [#allocation5], 1
    %s2622 = scalar_lea.sflag [#allocation5], 1
    %2623 = vsyncpa %s2622, 1

</llo_original>
